<compile_context>
chip_gen: v7x
topology: tpu7x:2x2x1
jax: 0.10.0
libtpu: 0.0.40
codegen_flags: <defaults>
</compile_context>

<pallas_src>
import functools

import jax
import jax.numpy as jnp
from jax.experimental import pallas as pl
from jax.experimental.pallas import tpu as pltpu

P_DROP = 0.1
EPS = 1e-12  # matches LayerNorm((768,), eps=1e-12) in the PyTorch module


def _mix32(x):
    """lowbias32-style integer hash: uint32 -> well-mixed uint32 (pure VPU ops)."""
    x = (x ^ (x >> 16)) * jnp.uint32(0x7FEB352D)
    x = (x ^ (x >> 15)) * jnp.uint32(0x846CA68B)
    x = x ^ (x >> 16)
    return x


def _dropout_add_ln_kernel(seed_ref, x_ref, res_ref, gamma_ref, beta_ref, o_ref,
                           *, p, eps, training):
    """Fused dropout(x) + residual add + LayerNorm(H) for one row-tile."""
    x = x_ref[...].astype(jnp.float32)           # (tile, H)
    r = res_ref[...].astype(jnp.float32)         # (tile, H)

    if training and p > 0.0:
        tile, h = x_ref.shape
        # Global element index -> per-element uint32 counter, hashed with seed.
        row0 = pl.program_id(0) * tile
        rows = jax.lax.broadcasted_iota(jnp.int32, (tile, h), 0) + row0
        cols = jax.lax.broadcasted_iota(jnp.int32, (tile, h), 1)
        idx = (rows * h + cols).astype(jnp.uint32)
        seed_u = seed_ref[0].astype(jnp.uint32)
        bits = _mix32(idx ^ (seed_u * jnp.uint32(0x9E3779B9)))
        # Integer-threshold Bernoulli: keep with prob (1 - p).
        threshold = jnp.uint32(min(int(round(p * 2.0 ** 32)), 2 ** 32 - 1))
        keep = bits >= threshold
        # Single fused mask + scale (select + mul, no convert / extra mul).
        x = jnp.where(keep, x * jnp.float32(1.0 / (1.0 - p)), jnp.float32(0.0))
        # TODO(synk): mask stream is an in-kernel hash PRNG, not torch's RNG;
        # it is Bernoulli(1-p) but never bit-identical to PyTorch dropout.

    y = x + r

    mean = jnp.mean(y, axis=-1, keepdims=True)
    c = y - mean
    var = jnp.mean(c * c, axis=-1, keepdims=True)
    inv = jax.lax.rsqrt(var + eps)               # EUP slot

    gamma = gamma_ref[...].astype(jnp.float32)   # (1, H)
    beta = beta_ref[...].astype(jnp.float32)     # (1, H)
    out = (c * inv) * gamma + beta
    o_ref[...] = out.astype(o_ref.dtype)


def _pick_tile_rows(n_rows, preferred):
    """Largest multiple-of-8 divisor of n_rows that is <= preferred."""
    t = min(preferred, n_rows)
    while t > 8:
        if n_rows % t == 0 and t % 8 == 0:
            return t
        t -= 8
    return n_rows  # fall back to a single tile


def dropout_add_layernorm(x355, x322, gamma, beta, seed, *,
                          p=P_DROP, eps=EPS, training=True, tile_rows=192):
    """x358 = LayerNorm(Dropout(x355) + x322), LayerNorm over last dim."""
    B, S, H = x355.shape
    n_rows = B * S
    assert H % 128 == 0, "hidden dim must be lane-dense (multiple of 128)"
    tile_rows = _pick_tile_rows(n_rows, tile_rows)
    assert n_rows % tile_rows == 0

    x2 = x355.reshape(n_rows, H)
    r2 = x322.reshape(n_rows, H)
    g2 = gamma.reshape(1, H)
    b2 = beta.reshape(1, H)
    seed_arr = jnp.asarray([seed], dtype=jnp.int32)

    kernel = functools.partial(_dropout_add_ln_kernel, p=p, eps=eps,
                               training=training)

    grid_spec = pltpu.PrefetchScalarGridSpec(
        num_scalar_prefetch=1,
        grid=(n_rows // tile_rows,),
        in_specs=[
            pl.BlockSpec((tile_rows, H), lambda i, seed: (i, 0)),  # dropout input
            pl.BlockSpec((tile_rows, H), lambda i, seed: (i, 0)),  # residual
            pl.BlockSpec((1, H), lambda i, seed: (0, 0)),          # gamma
            pl.BlockSpec((1, H), lambda i, seed: (0, 0)),          # beta
        ],
        out_specs=pl.BlockSpec((tile_rows, H), lambda i, seed: (i, 0)),
    )

    out2 = pl.pallas_call(
        kernel,
        out_shape=jax.ShapeDtypeStruct((n_rows, H), x355.dtype),
        grid_spec=grid_spec,
        compiler_params=pltpu.CompilerParams(
            dimension_semantics=("parallel",)),  # independent row tiles
    )(seed_arr, x2, r2, g2, b2)

    return out2.reshape(B, S, H)


if __name__ == "__main__":
    B, S, H = 1, 384, 768

    key = jax.random.PRNGKey(0)
    k1, k2 = jax.random.split(key)
    x355 = jax.random.normal(k1, (B, S, H), dtype=jnp.float32)
    x322 = jax.random.normal(k2, (B, S, H), dtype=jnp.float32)

    # LayerNorm(768, elementwise_affine=True) default init: gamma=1, beta=0.
    gamma = jnp.ones((H,), dtype=jnp.float32)
    beta = jnp.zeros((H,), dtype=jnp.float32)

    # Training-mode forward (matches nn.Module default .training=True).
    out = dropout_add_layernorm(x355, x322, gamma, beta, seed=0, training=True)
    jax.block_until_ready(out)
    assert out.shape == (B, S, H)
    assert bool(jnp.all(jnp.isfinite(out)))
    # LayerNorm output is zero-mean / unit-var per row (gamma=1, beta=0).
    row_mean = jnp.mean(out.reshape(-1, H), axis=-1)
    row_var = jnp.var(out.reshape(-1, H), axis=-1)
    assert float(jnp.max(jnp.abs(row_mean))) < 1e-3
    assert float(jnp.max(jnp.abs(row_var - 1.0))) < 1e-2

    # Exact check against pure-JAX reference with dropout disabled (eval mode).
    out_eval = dropout_add_layernorm(x355, x322, gamma, beta, seed=0,
                                     training=False)
    jax.block_until_ready(out_eval)
    y = x355 + x322
    mu = y.mean(-1, keepdims=True)
    var = ((y - mu) ** 2).mean(-1, keepdims=True)
    ref = (y - mu) / jnp.sqrt(var + EPS) * gamma + beta
    assert float(jnp.max(jnp.abs(out_eval - ref))) < 1e-4

    print("KERNEL_OK")
</pallas_src>

<mosaic_0001>
module attributes {stable_mosaic.version = 11 : i64} {
  func.func @_dropout_add_ln_kernel(%arg0: i32, %arg1: memref<1xi32, #tpu.memory_space<smem>>, %arg2: memref<192x768xf32, #tpu.memory_space<vmem>>, %arg3: memref<192x768xf32, #tpu.memory_space<vmem>>, %arg4: memref<1x768xf32, #tpu.memory_space<vmem>>, %arg5: memref<1x768xf32, #tpu.memory_space<vmem>>, %arg6: memref<192x768xf32, #tpu.memory_space<vmem>>) attributes {dimension_semantics = [#tpu.dimension_semantics<parallel>], iteration_bounds = array<i64: 2>, scalar_prefetch = 1 : i64, scratch_operands = 0 : i64, tpu.core_type = #tpu.core_type<tc>, window_params = [{transform_indices = @transform_0, window_bounds = array<i64: 192, 768>}, {transform_indices = @transform_1, window_bounds = array<i64: 192, 768>}, {pipeline_mode = #tpu.pipeline_mode<synchronous>, transform_indices = @transform_2, window_bounds = array<i64: 1, 768>}, {pipeline_mode = #tpu.pipeline_mode<synchronous>, transform_indices = @transform_3, window_bounds = array<i64: 1, 768>}, {transform_indices = @transform_4, window_bounds = array<i64: 192, 768>}]} {
    %c0 = arith.constant 0 : index
    %c0_0 = arith.constant 0 : index
    %0 = vector.load %arg2[%c0, %c0_0] : memref<192x768xf32, #tpu.memory_space<vmem>>, vector<192x768xf32>
    %c0_1 = arith.constant 0 : index
    %c0_2 = arith.constant 0 : index
    %1 = vector.load %arg3[%c0_1, %c0_2] : memref<192x768xf32, #tpu.memory_space<vmem>>, vector<192x768xf32>
    %c192_i32 = arith.constant 192 : i32
    %2 = arith.muli %arg0, %c192_i32 : i32
    %3 = tpu.iota {dimensions = array<i32: 0>} : vector<192x768xi32>
    %4 = vector.broadcast %2 : i32 to vector<192x768xi32>
    %5 = arith.addi %3, %4 : vector<192x768xi32>
    %6 = tpu.iota {dimensions = array<i32: 1>} : vector<192x768xi32>
    %c768_i32 = arith.constant 768 : i32
    %7 = vector.broadcast %c768_i32 : i32 to vector<192x768xi32>
    %8 = arith.muli %5, %7 : vector<192x768xi32>
    %9 = arith.addi %8, %6 : vector<192x768xi32>
    %c0_3 = arith.constant 0 : index
    %10 = memref.load %arg1[%c0_3] : memref<1xi32, #tpu.memory_space<smem>>
    %c-1640531527_i32 = arith.constant -1640531527 : i32
    %11 = arith.muli %10, %c-1640531527_i32 : i32
    %12 = vector.broadcast %11 : i32 to vector<192x768xi32>
    %13 = arith.xori %9, %12 : vector<192x768xi32>
    %c16_i32 = arith.constant 16 : i32
    %14 = vector.broadcast %c16_i32 : i32 to vector<192x768xi32>
    %15 = arith.shrui %13, %14 : vector<192x768xi32>
    %16 = arith.xori %13, %15 : vector<192x768xi32>
    %c2146121005_i32 = arith.constant 2146121005 : i32
    %17 = vector.broadcast %c2146121005_i32 : i32 to vector<192x768xi32>
    %18 = arith.muli %16, %17 : vector<192x768xi32>
    %c15_i32 = arith.constant 15 : i32
    %19 = vector.broadcast %c15_i32 : i32 to vector<192x768xi32>
    %20 = arith.shrui %18, %19 : vector<192x768xi32>
    %21 = arith.xori %18, %20 : vector<192x768xi32>
    %c-2073254261_i32 = arith.constant -2073254261 : i32
    %22 = vector.broadcast %c-2073254261_i32 : i32 to vector<192x768xi32>
    %23 = arith.muli %21, %22 : vector<192x768xi32>
    %c16_i32_4 = arith.constant 16 : i32
    %24 = vector.broadcast %c16_i32_4 : i32 to vector<192x768xi32>
    %25 = arith.shrui %23, %24 : vector<192x768xi32>
    %26 = arith.xori %23, %25 : vector<192x768xi32>
    %c429496730_i32 = arith.constant 429496730 : i32
    %27 = vector.broadcast %c429496730_i32 : i32 to vector<192x768xi32>
    %28 = arith.cmpi uge, %26, %27 : vector<192x768xi32>
    %cst = arith.constant 1.11111116 : f32
    %29 = vector.broadcast %cst : f32 to vector<192x768xf32>
    %30 = arith.mulf %0, %29 : vector<192x768xf32>
    %cst_5 = arith.constant 0.000000e+00 : f32
    %31 = vector.broadcast %cst_5 : f32 to vector<192x768xf32>
    %32 = arith.select %28, %30, %31 : vector<192x768xi1>, vector<192x768xf32>
    %33 = arith.addf %32, %1 : vector<192x768xf32>
    %cst_6 = arith.constant dense<0.000000e+00> : vector<192xf32>
    %34 = vector.multi_reduction <add>, %33, %cst_6 [1] : vector<192x768xf32> to vector<192xf32>
    %35 = vector.shape_cast %34 : vector<192xf32> to vector<192x1xf32>
    %cst_7 = arith.constant 7.680000e+02 : f32
    %36 = vector.broadcast %cst_7 : f32 to vector<192x1xf32>
    %37 = arith.divf %35, %36 : vector<192x1xf32>
    %38 = vector.broadcast %37 : vector<192x1xf32> to vector<192x768xf32>
    %39 = arith.subf %33, %38 : vector<192x768xf32>
    %40 = arith.mulf %39, %39 : vector<192x768xf32>
    %cst_8 = arith.constant dense<0.000000e+00> : vector<192xf32>
    %41 = vector.multi_reduction <add>, %40, %cst_8 [1] : vector<192x768xf32> to vector<192xf32>
    %42 = vector.shape_cast %41 : vector<192xf32> to vector<192x1xf32>
    %cst_9 = arith.constant 7.680000e+02 : f32
    %43 = vector.broadcast %cst_9 : f32 to vector<192x1xf32>
    %44 = arith.divf %42, %43 : vector<192x1xf32>
    %cst_10 = arith.constant 9.99999996E-13 : f32
    %45 = vector.broadcast %cst_10 : f32 to vector<192x1xf32>
    %46 = arith.addf %44, %45 : vector<192x1xf32>
    %47 = math.rsqrt %46 : vector<192x1xf32>
    %c0_11 = arith.constant 0 : index
    %c0_12 = arith.constant 0 : index
    %48 = vector.load %arg4[%c0_11, %c0_12] : memref<1x768xf32, #tpu.memory_space<vmem>>, vector<1x768xf32>
    %c0_13 = arith.constant 0 : index
    %c0_14 = arith.constant 0 : index
    %49 = vector.load %arg5[%c0_13, %c0_14] : memref<1x768xf32, #tpu.memory_space<vmem>>, vector<1x768xf32>
    %50 = vector.broadcast %47 : vector<192x1xf32> to vector<192x768xf32>
    %51 = arith.mulf %39, %50 : vector<192x768xf32>
    %52 = vector.broadcast %48 : vector<1x768xf32> to vector<192x768xf32>
    %53 = arith.mulf %51, %52 : vector<192x768xf32>
    %54 = vector.broadcast %49 : vector<1x768xf32> to vector<192x768xf32>
    %55 = arith.addf %53, %54 : vector<192x768xf32>
    %c0_15 = arith.constant 0 : index
    %c0_16 = arith.constant 0 : index
    %56 = vector.load %arg6[%c0_15, %c0_16] : memref<192x768xf32, #tpu.memory_space<vmem>>, vector<192x768xf32>
    tpu.vector_store %arg6[%c0_15, %c0_16], %55 {strides = array<i32>} : memref<192x768xf32, #tpu.memory_space<vmem>>, vector<192x768xf32>,
    return
  }
  func.func @transform_0(%arg0: i32, %arg1: memref<1xi32, #tpu.memory_space<smem>>) -> (i32, i32) {
    %c0_i32 = arith.constant 0 : i32
    %c0_i32_0 = arith.constant 0 : i32
    return %arg0, %c0_i32 : i32, i32
  }
  func.func @transform_1(%arg0: i32, %arg1: memref<1xi32, #tpu.memory_space<smem>>) -> (i32, i32) {
    %c0_i32 = arith.constant 0 : i32
    %c0_i32_0 = arith.constant 0 : i32
    return %arg0, %c0_i32 : i32, i32
  }
  func.func @transform_2(%arg0: i32, %arg1: memref<1xi32, #tpu.memory_space<smem>>) -> (i32, i32) {
    %c0_i32 = arith.constant 0 : i32
    %c0_i32_0 = arith.constant 0 : i32
    %c0_i32_1 = arith.constant 0 : i32
    return %c0_i32, %c0_i32_0 : i32, i32
  }
  func.func @transform_3(%arg0: i32, %arg1: memref<1xi32, #tpu.memory_space<smem>>) -> (i32, i32) {
    %c0_i32 = arith.constant 0 : i32
    %c0_i32_0 = arith.constant 0 : i32
    %c0_i32_1 = arith.constant 0 : i32
    return %c0_i32, %c0_i32_0 : i32, i32
  }
  func.func @transform_4(%arg0: i32, %arg1: memref<1xi32, #tpu.memory_space<smem>>) -> (i32, i32) {
    %c0_i32 = arith.constant 0 : i32
    %c0_i32_0 = arith.constant 0 : i32
    return %arg0, %c0_i32 : i32, i32
  }
}

</mosaic_0001>

<llo_original>
// kernel: tpu_custom_call.1
$region0: #{tpu_custom_call.1}
  #allocation0 [shape = 'u32[]', space=smem, size = 0x4, offset = 0x4, fixed_abs, tag = 'smem constant byte address 0x4 - core index']
  #allocation1 [shape = 'u32[144,128]{1,0:T(1,128)}', space=vmem, size = 0x12000, scoped, tag = 'internal scratch']
  #allocation2 [shape = 's32[1]{0}', space=sflag, size = 0x4, scoped, tag = 'scoped memory for tpu_custom_call.1']
  #allocation3 [shape = 's32[1]{0:T(128)S(6)}', space=smem, size = 0x200, scoped, tag = 'prefetched SMEM operand 0']
  %s0 = inlined_call_operand.<no memory space> [shape: s32[1], index: 0, kind: input, shape index: {}]
  %s1 = inlined_call_operand.hbm [shape: f32[384,768], index: 1, kind: input, shape index: {}]
  %s2 = inlined_call_operand.hbm [shape: f32[384,768], index: 2, kind: input, shape index: {}]
  %s3 = inlined_call_operand.hbm [shape: f32[1,768], index: 3, kind: input, shape index: {}]
  %s4 = inlined_call_operand.hbm [shape: f32[1,768], index: 4, kind: input, shape index: {}]
  %s5 = inlined_call_operand.hbm [shape: f32[384,768], index: 5, kind: output, shape index: {}]
  %s6 = sld [smem:[#allocation0]]
  $region65: #{tpu_custom_call.1} parent=0
    _
  %s8 = ssub.s32 1, %s6
  %s9 = scalar_select 0, %s8, %s6
  %10 = sst [smem:[#allocation3]] %s0
  $region1: #{tpu_custom_call.1} parent=0
    #allocation4 [shape = 'u8[1179648]{0}', space=vmem, size = 0x120000, scoped, tag = 'input window, operand 1']
    #allocation5 [shape = 's32[2]{0}', space=sflag, size = 0x8, scoped, tag = 'scoped memory for tpu_custom_call.1']
    #allocation6 [shape = 's32[2]{0}', space=sflag, size = 0x8, scoped, tag = 'scoped memory for tpu_custom_call.1']
    #allocation7 [shape = 'u8[1179648]{0}', space=vmem, size = 0x120000, scoped, tag = 'input window, operand 2']
    #allocation8 [shape = 's32[2]{0}', space=sflag, size = 0x8, scoped, tag = 'scoped memory for tpu_custom_call.1']
    #allocation9 [shape = 'u8[3072]{0}', space=vmem, size = 0xc00, scoped, tag = 'input window, operand 3, single buffered']
    #allocation10 [shape = 'u8[3072]{0}', space=vmem, size = 0xc00, scoped, tag = 'input window, operand 4, single buffered']
    #allocation11 [shape = 's32[1]{0}', space=sflag, size = 0x4, scoped, tag = 'scoped memory for tpu_custom_call.1']
    #allocation12 [shape = 'u8[1179648]{0}', space=vmem, size = 0x120000, scoped, tag = 'output window, operand 0']
    %11 = vsyncpa [#allocation5], 0
    %s12 = scalar_lea.sflag [#allocation5], 1
    %13 = vsyncpa %s12, 0
    %14 = vsyncpa [#allocation8], 0
    %s15 = scalar_lea.sflag [#allocation8], 1
    %16 = vsyncpa %s15, 0
    %17 = vsyncpa [#allocation11], 0
    %18 = vsyncpa [#allocation6], 0
    %s19 = scalar_lea.sflag [#allocation6], 1
    %20 = vsyncpa %s19, 0
    loop: start=0, step=1, limit=4
    $region2: #{tpu_custom_call.1} parent=1 // loop_pre_header
      _
    $region3: #{tpu_custom_call.1} parent=1 // loop_header
      %s22 = sphi 0, %s26
      %p23 = scmp.ge.s32.totalorder %s22, 4
      %s32 = sphi 0, %s34
      %s35 = sphi 0, %s32
      %s36 = sphi 0, %s35
      %s52 = sphi 0, %s36
      %s58 = sphi 0, %s60
      %s61 = sphi 0, %s58
      %s62 = sphi 0, %s61
      %s78 = sphi 0, %s62
      %s82 = sphi 0, %s82
      %s84 = sphi 0, %s82
      %s85 = sphi 0, %s84
      %s99 = sphi 0, %s85
      %s103 = sphi 0, %s103
      %s105 = sphi 0, %s103
      %s106 = sphi 0, %s105
      %s120 = sphi 0, %s106
      %s126 = sphi 0, %s128
      %s129 = sphi 0, %s126
      %s130 = sphi 0, %s129
      %s146 = sphi 0, %s130
    $region4: #{tpu_custom_call.1} parent=1 // loop_header_branch
      %25 = sbr.rel (%p23) target = $region8
    $region5: #{tpu_custom_call.1} parent=1 // loop_body
      %s27 = ssub.s32 %s22, 1
      %s28 = ssub.s32 %s22, 2
      %s29 = sadd.s32 %s22, 1
      %s30 = ssub.s32 %s22, %s29
      %p31 = scmp.eq.s32.totalorder %s30, 0
      %s33 = sadd.s32 %s32, 1
      %s34 = scalar_select %p31, %s32, %s33
      %p37 = pneg %p31
      %p38 = scmp.eq.s32.totalorder %s22, 1
      %p39 = por %p37, %p38
      %p40 = scmp.ne.s32.totalorder %s32, %s35
      %p41 = scmp.eq.s32.totalorder %s22, 0
      %p42 = por %p40, %p41
      %p43 = scmp.ne.s32.totalorder %s32, %s35
      %p44 = scmp.eq.s32.totalorder %s27, 1
      %p45 = por %p43, %p44
      %p46 = scmp.ne.s32.totalorder %s35, %s36
      %p47 = scmp.eq.s32.totalorder %s27, 0
      %p48 = por %p46, %p47
      %p49 = scmp.ne.s32.totalorder %s35, %s36
      %p50 = scmp.eq.s32.totalorder %s28, 1
      %p51 = por %p49, %p50
      %p53 = scmp.ne.s32.totalorder %s36, %s52
      %p54 = scmp.eq.s32.totalorder %s28, 0
      %p55 = por %p53, %p54
      %s56 = ssub.s32 %s22, %s29
      %p57 = scmp.eq.s32.totalorder %s56, 0
      %s59 = sadd.s32 %s58, 1
      %s60 = scalar_select %p57, %s58, %s59
      %p63 = pneg %p57
      %p64 = scmp.eq.s32.totalorder %s22, 1
      %p65 = por %p63, %p64
      %p66 = scmp.ne.s32.totalorder %s58, %s61
      %p67 = scmp.eq.s32.totalorder %s22, 0
      %p68 = por %p66, %p67
      %p69 = scmp.ne.s32.totalorder %s58, %s61
      %p70 = scmp.eq.s32.totalorder %s27, 1
      %p71 = por %p69, %p70
      %p72 = scmp.ne.s32.totalorder %s61, %s62
      %p73 = scmp.eq.s32.totalorder %s27, 0
      %p74 = por %p72, %p73
      %p75 = scmp.ne.s32.totalorder %s61, %s62
      %p76 = scmp.eq.s32.totalorder %s28, 1
      %p77 = por %p75, %p76
      %p79 = scmp.ne.s32.totalorder %s62, %s78
      %p80 = scmp.eq.s32.totalorder %s28, 0
      %p81 = por %p79, %p80
      %s83 = sadd.s32 %s82, 1
      %p86 = scmp.eq.s32.totalorder %s22, 1
      %p87 = scmp.ne.s32.totalorder %s82, %s84
      %p88 = scmp.eq.s32.totalorder %s22, 0
      %p89 = por %p87, %p88
      %p90 = scmp.ne.s32.totalorder %s82, %s84
      %p91 = scmp.eq.s32.totalorder %s27, 1
      %p92 = por %p90, %p91
      %p93 = scmp.ne.s32.totalorder %s84, %s85
      %p94 = scmp.eq.s32.totalorder %s27, 0
      %p95 = por %p93, %p94
      %p96 = scmp.ne.s32.totalorder %s84, %s85
      %p97 = scmp.eq.s32.totalorder %s28, 1
      %p98 = por %p96, %p97
      %p100 = scmp.ne.s32.totalorder %s85, %s99
      %p101 = scmp.eq.s32.totalorder %s28, 0
      %p102 = por %p100, %p101
      %s104 = sadd.s32 %s103, 1
      %p107 = scmp.eq.s32.totalorder %s22, 1
      %p108 = scmp.ne.s32.totalorder %s103, %s105
      %p109 = scmp.eq.s32.totalorder %s22, 0
      %p110 = por %p108, %p109
      %p111 = scmp.ne.s32.totalorder %s103, %s105
      %p112 = scmp.eq.s32.totalorder %s27, 1
      %p113 = por %p111, %p112
      %p114 = scmp.ne.s32.totalorder %s105, %s106
      %p115 = scmp.eq.s32.totalorder %s27, 0
      %p116 = por %p114, %p115
      %p117 = scmp.ne.s32.totalorder %s105, %s106
      %p118 = scmp.eq.s32.totalorder %s28, 1
      %p119 = por %p117, %p118
      %p121 = scmp.ne.s32.totalorder %s106, %s120
      %p122 = scmp.eq.s32.totalorder %s28, 0
      %p123 = por %p121, %p122
      %s124 = ssub.s32 %s22, %s29
      %p125 = scmp.eq.s32.totalorder %s124, 0
      %s127 = sadd.s32 %s126, 1
      %s128 = scalar_select %p125, %s126, %s127
      %p131 = pneg %p125
      %p132 = scmp.eq.s32.totalorder %s22, 1
      %p133 = por %p131, %p132
      %p134 = scmp.ne.s32.totalorder %s126, %s129
      %p135 = scmp.eq.s32.totalorder %s22, 0
      %p136 = por %p134, %p135
      %p137 = scmp.ne.s32.totalorder %s126, %s129
      %p138 = scmp.eq.s32.totalorder %s27, 1
      %p139 = por %p137, %p138
      %p140 = scmp.ne.s32.totalorder %s129, %s130
      %p141 = scmp.eq.s32.totalorder %s27, 0
      %p142 = por %p140, %p141
      %p143 = scmp.ne.s32.totalorder %s129, %s130
      %p144 = scmp.eq.s32.totalorder %s28, 1
      %p145 = por %p143, %p144
      %p147 = scmp.ne.s32.totalorder %s130, %s146
      %p148 = scmp.eq.s32.totalorder %s28, 0
      %p149 = por %p147, %p148
      %p150 = scmp.le.s32.totalorder 1, %s22
      %p151 = scmp.lt.s32.totalorder %s22, 3
      %p152 = pnand %p150, %p151
      %p153 = pneg %p152
      // Predicated region
      $region9: #{tpu_custom_call.1} parent=5 // pred_check
        _
      $region10: #{tpu_custom_call.1} parent=5 // pred_check_branch
        %155 = sbr.rel (%p152) target = $region12
      $region11: #{tpu_custom_call.1} parent=5 // pred_region
        %s156 = ssub.s32 %s22, 1
        // Predicated region
        $region13: #{tpu_custom_call.1} parent=11 // pred_check
          %p157 = pneg %p95
        $region14: #{tpu_custom_call.1} parent=11 // pred_check_branch
          %159 = sbr.rel (%p157) target = $region16
        $region15: #{tpu_custom_call.1} parent=11 // pred_region
          %s161 = ssub.s32 96, 96
          %162 = vsyncadd [#allocation8], %s161
          %s164 = sshll.u32 [#allocation9], 4
          %s165 = int_to_ptr.vmem [resolvable:$true] %s164
          %167 = dma.hbm_to_vmem [thread:$0]  %s3, 96, %s165, [#allocation8]
        $region16: #{tpu_custom_call.1} parent=11 // pred_fallthru
          _
        // Predicated region
        $region17: #{tpu_custom_call.1} parent=11 // pred_check
          %p168 = pneg %p116
        $region18: #{tpu_custom_call.1} parent=11 // pred_check_branch
          %170 = sbr.rel (%p168) target = $region20
        $region19: #{tpu_custom_call.1} parent=11 // pred_region
          %s172 = ssub.s32 96, 96
          %173 = vsyncadd [#allocation11], %s172
          %s175 = sshll.u32 [#allocation10], 4
          %s176 = int_to_ptr.vmem [resolvable:$true] %s175
          %178 = dma.hbm_to_vmem [thread:$0]  %s4, 96, %s176, [#allocation11]
        $region20: #{tpu_custom_call.1} parent=11 // pred_fallthru
          _
      $region12: #{tpu_custom_call.1} parent=5 // pred_fallthru
        _
      %p179 = scmp.lt.s32.totalorder %s22, 2
      // Predicated region
      $region21: #{tpu_custom_call.1} parent=5 // pred_check
        %p180 = pneg %p179
      $region22: #{tpu_custom_call.1} parent=5 // pred_check_branch
        %182 = sbr.rel (%p180) target = $region24
      $region23: #{tpu_custom_call.1} parent=5 // pred_region
        // Predicated region
        $region25: #{tpu_custom_call.1} parent=23 // pred_check
          %p183 = pneg %p42
        $region26: #{tpu_custom_call.1} parent=23 // pred_check_branch
          %185 = sbr.rel (%p183) target = $region28
        $region27: #{tpu_custom_call.1} parent=23 // pred_region
          %s186 = sand.u32 %s32, 1
          %s187 = scalar_lea.sflag [#allocation5], %s186
          %s188 = sand.u32 %s32, 1
          %s189 = smul.addr %s188, 1152
          %s190 = scalar_lea.vmem [#allocation4], %s189
          %s191 = smul.u32 24, %s22
          %s193 = ssub.s32 18432, 18432
          %194 = vsyncadd %s187, %s193
          %s195 = smul.addr %s191, 6
          %s196 = smul.addr %s195, 128
          %s197 = scalar_lea.hbm %s1, %s196
          %s198 = sshll.u32 %s190, 4
          %s199 = int_to_ptr.vmem [resolvable:$true] %s198
          %204 = dma.hbm_to_vmem [thread:$0]  %s197, 18432, %s199, %s187, 768, 768, 48
        $region28: #{tpu_custom_call.1} parent=23 // pred_fallthru
          _
        // Predicated region
        $region29: #{tpu_custom_call.1} parent=23 // pred_check
          %p205 = pneg %p68
        $region30: #{tpu_custom_call.1} parent=23 // pred_check_branch
          %207 = sbr.rel (%p205) target = $region32
        $region31: #{tpu_custom_call.1} parent=23 // pred_region
          %s208 = sand.u32 %s22, 1
          %s209 = scalar_lea.sflag [#allocation8], %s208
          %s210 = sand.u32 %s58, 1
          %s211 = smul.addr %s210, 1152
          %s212 = scalar_lea.vmem [#allocation7], %s211
          %s213 = smul.u32 24, %s22
          %s215 = ssub.s32 18432, 18432
          %216 = vsyncadd %s209, %s215
          %s217 = smul.addr %s213, 6
          %s218 = smul.addr %s217, 128
          %s219 = scalar_lea.hbm %s2, %s218
          %s220 = sshll.u32 %s212, 4
          %s221 = int_to_ptr.vmem [resolvable:$true] %s220
          %226 = dma.hbm_to_vmem [thread:$0]  %s219, 18432, %s221, %s209, 768, 768, 48
        $region32: #{tpu_custom_call.1} parent=23 // pred_fallthru
          _
      $region24: #{tpu_custom_call.1} parent=5 // pred_fallthru
        _
      %p227 = scmp.le.s32.totalorder 1, %s22
      %p228 = scmp.lt.s32.totalorder %s22, 3
      %p229 = pnand %p227, %p228
      %p230 = pneg %p229
      // Predicated region
      $region33: #{tpu_custom_call.1} parent=5 // pred_check
        _
      $region34: #{tpu_custom_call.1} parent=5 // pred_check_branch
        %232 = sbr.rel (%p229) target = $region36
      $region35: #{tpu_custom_call.1} parent=5 // pred_region
        %s233 = ssub.s32 %s22, 1
        %s234 = sand.u32 %s35, 1
        %s235 = scalar_lea.sflag [#allocation5], %s234
        %s236 = sand.u32 %s35, 1
        %s237 = smul.addr %s236, 1152
        %s238 = scalar_lea.vmem [#allocation4], %s237
        // Predicated region
        $region37: #{tpu_custom_call.1} parent=35 // pred_check
          %p239 = pneg %p48
        $region38: #{tpu_custom_call.1} parent=35 // pred_check_branch
          %241 = sbr.rel (%p239) target = $region40
        $region39: #{tpu_custom_call.1} parent=35 // pred_region
          %242 = dma.done %s235, 18432
        $region40: #{tpu_custom_call.1} parent=35 // pred_fallthru
          _
        %s243 = sand.u32 %s27, 1
        %s244 = scalar_lea.sflag [#allocation8], %s243
        %s245 = sand.u32 %s61, 1
        %s246 = smul.addr %s245, 1152
        %s247 = scalar_lea.vmem [#allocation7], %s246
        // Predicated region
        $region41: #{tpu_custom_call.1} parent=35 // pred_check
          %p248 = pneg %p74
        $region42: #{tpu_custom_call.1} parent=35 // pred_check_branch
          %250 = sbr.rel (%p248) target = $region44
        $region43: #{tpu_custom_call.1} parent=35 // pred_region
          %251 = dma.done %s244, 18432
        $region44: #{tpu_custom_call.1} parent=35 // pred_fallthru
          _
        // Predicated region
        $region45: #{tpu_custom_call.1} parent=35 // pred_check
          %p252 = pneg %p95
        $region46: #{tpu_custom_call.1} parent=35 // pred_check_branch
          %254 = sbr.rel (%p252) target = $region48
        $region47: #{tpu_custom_call.1} parent=35 // pred_region
          %255 = dma.done [#allocation8], 96
        $region48: #{tpu_custom_call.1} parent=35 // pred_fallthru
          _
        // Predicated region
        $region49: #{tpu_custom_call.1} parent=35 // pred_check
          %p256 = pneg %p116
        $region50: #{tpu_custom_call.1} parent=35 // pred_check_branch
          %258 = sbr.rel (%p256) target = $region52
        $region51: #{tpu_custom_call.1} parent=35 // pred_region
          %259 = dma.done [#allocation11], 96
        $region52: #{tpu_custom_call.1} parent=35 // pred_fallthru
          _
        %s260 = sand.u32 %s35, 1
        %s261 = scalar_lea.sflag [#allocation5], %s260
        %s262 = sand.u32 %s35, 1
        %s263 = smul.addr %s262, 1152
        %s264 = scalar_lea.vmem [#allocation4], %s263
        %p265 = pneg %p48
        %p266 = pneg %p45
        %s267 = sand.u32 %s27, 1
        %s268 = scalar_lea.sflag [#allocation8], %s267
        %s269 = sand.u32 %s61, 1
        %s270 = smul.addr %s269, 1152
        %s271 = scalar_lea.vmem [#allocation7], %s270
        %p272 = pneg %p74
        %p273 = pneg %p71
        %p274 = pneg %p95
        %p275 = pneg %p92
        %p276 = pneg %p116
        %p277 = pneg %p113
        %p278 = pneg %p142
        %p279 = pneg %p139
        %s280 = sand.u32 %s129, 1
        %s281 = scalar_lea.sflag [#allocation6], %s280
        %s282 = sand.u32 %s129, 1
        %s283 = smul.addr %s282, 1152
        %s284 = scalar_lea.vmem [#allocation12], %s283
        %s285 = smul.u32 24, %s27
        %s286 = smul.u32 24, %s27
        %s287 = smul.u32 24, %s27
        %v288 = vld [vmem:[%s238] sm:$0xff]
        %v289 = vld [vmem:[%s238 + $0x8] sm:$0xff]
        %v290 = vld [vmem:[%s238 + $0x10] sm:$0xff]
        %v291 = vld [vmem:[%s238 + $0x18] sm:$0xff]
        %v292 = vld [vmem:[%s238 + $0x20] sm:$0xff]
        %v293 = vld [vmem:[%s238 + $0x28] sm:$0xff]
        %v294 = vld [vmem:[%s238 + $0x30] sm:$0xff]
        %v295 = vld [vmem:[%s238 + $0x38] sm:$0xff]
        %v296 = vld [vmem:[%s238 + $0x40] sm:$0xff]
        %v297 = vld [vmem:[%s238 + $0x48] sm:$0xff]
        %v298 = vld [vmem:[%s238 + $0x50] sm:$0xff]
        %v299 = vld [vmem:[%s238 + $0x58] sm:$0xff]
        %v300 = vld [vmem:[%s238 + $0x60] sm:$0xff]
        %v301 = vld [vmem:[%s238 + $0x68] sm:$0xff]
        %v302 = vld [vmem:[%s238 + $0x70] sm:$0xff]
        %v303 = vld [vmem:[%s238 + $0x78] sm:$0xff]
        %v304 = vld [vmem:[%s238 + $0x80] sm:$0xff]
        %v305 = vld [vmem:[%s238 + $0x88] sm:$0xff]
        %v306 = vld [vmem:[%s238 + $0x90] sm:$0xff]
        %v307 = vld [vmem:[%s238 + $0x98] sm:$0xff]
        %v308 = vld [vmem:[%s238 + $0xa0] sm:$0xff]
        %v309 = vld [vmem:[%s238 + $0xa8] sm:$0xff]
        %v310 = vld [vmem:[%s238 + $0xb0] sm:$0xff]
        %v311 = vld [vmem:[%s238 + $0xb8] sm:$0xff]
        %v312 = vld [vmem:[%s238 + $0xc0] sm:$0xff]
        %v313 = vld [vmem:[%s238 + $0xc8] sm:$0xff]
        %v314 = vld [vmem:[%s238 + $0xd0] sm:$0xff]
        %v315 = vld [vmem:[%s238 + $0xd8] sm:$0xff]
        %v316 = vld [vmem:[%s238 + $0xe0] sm:$0xff]
        %v317 = vld [vmem:[%s238 + $0xe8] sm:$0xff]
        %v318 = vld [vmem:[%s238 + $0xf0] sm:$0xff]
        %v319 = vld [vmem:[%s238 + $0xf8] sm:$0xff]
        %v320 = vld [vmem:[%s238 + $0x100] sm:$0xff]
        %v321 = vld [vmem:[%s238 + $0x108] sm:$0xff]
        %v322 = vld [vmem:[%s238 + $0x110] sm:$0xff]
        %v323 = vld [vmem:[%s238 + $0x118] sm:$0xff]
        %v324 = vld [vmem:[%s238 + $0x120] sm:$0xff]
        %v325 = vld [vmem:[%s238 + $0x128] sm:$0xff]
        %v326 = vld [vmem:[%s238 + $0x130] sm:$0xff]
        %v327 = vld [vmem:[%s238 + $0x138] sm:$0xff]
        %v328 = vld [vmem:[%s238 + $0x140] sm:$0xff]
        %v329 = vld [vmem:[%s238 + $0x148] sm:$0xff]
        %v330 = vld [vmem:[%s238 + $0x150] sm:$0xff]
        %v331 = vld [vmem:[%s238 + $0x158] sm:$0xff]
        %v332 = vld [vmem:[%s238 + $0x160] sm:$0xff]
        %v333 = vld [vmem:[%s238 + $0x168] sm:$0xff]
        %v334 = vld [vmem:[%s238 + $0x170] sm:$0xff]
        %v335 = vld [vmem:[%s238 + $0x178] sm:$0xff]
        %v336 = vld [vmem:[%s238 + $0x180] sm:$0xff]
        %v337 = vld [vmem:[%s238 + $0x188] sm:$0xff]
        %v338 = vld [vmem:[%s238 + $0x190] sm:$0xff]
        %v339 = vld [vmem:[%s238 + $0x198] sm:$0xff]
        %v340 = vld [vmem:[%s238 + $0x1a0] sm:$0xff]
        %v341 = vld [vmem:[%s238 + $0x1a8] sm:$0xff]
        %v342 = vld [vmem:[%s238 + $0x1b0] sm:$0xff]
        %v343 = vld [vmem:[%s238 + $0x1b8] sm:$0xff]
        %v344 = vld [vmem:[%s238 + $0x1c0] sm:$0xff]
        %v345 = vld [vmem:[%s238 + $0x1c8] sm:$0xff]
        %v346 = vld [vmem:[%s238 + $0x1d0] sm:$0xff]
        %v347 = vld [vmem:[%s238 + $0x1d8] sm:$0xff]
        %v348 = vld [vmem:[%s238 + $0x1e0] sm:$0xff]
        %v349 = vld [vmem:[%s238 + $0x1e8] sm:$0xff]
        %v350 = vld [vmem:[%s238 + $0x1f0] sm:$0xff]
        %v351 = vld [vmem:[%s238 + $0x1f8] sm:$0xff]
        %v352 = vld [vmem:[%s238 + $0x200] sm:$0xff]
        %v353 = vld [vmem:[%s238 + $0x208] sm:$0xff]
        %v354 = vld [vmem:[%s238 + $0x210] sm:$0xff]
        %v355 = vld [vmem:[%s238 + $0x218] sm:$0xff]
        %v356 = vld [vmem:[%s238 + $0x220] sm:$0xff]
        %v357 = vld [vmem:[%s238 + $0x228] sm:$0xff]
        %v358 = vld [vmem:[%s238 + $0x230] sm:$0xff]
        %v359 = vld [vmem:[%s238 + $0x238] sm:$0xff]
        %v360 = vld [vmem:[%s238 + $0x240] sm:$0xff]
        %v361 = vld [vmem:[%s238 + $0x248] sm:$0xff]
        %v362 = vld [vmem:[%s238 + $0x250] sm:$0xff]
        %v363 = vld [vmem:[%s238 + $0x258] sm:$0xff]
        %v364 = vld [vmem:[%s238 + $0x260] sm:$0xff]
        %v365 = vld [vmem:[%s238 + $0x268] sm:$0xff]
        %v366 = vld [vmem:[%s238 + $0x270] sm:$0xff]
        %v367 = vld [vmem:[%s238 + $0x278] sm:$0xff]
        %v368 = vld [vmem:[%s238 + $0x280] sm:$0xff]
        %v369 = vld [vmem:[%s238 + $0x288] sm:$0xff]
        %v370 = vld [vmem:[%s238 + $0x290] sm:$0xff]
        %v371 = vld [vmem:[%s238 + $0x298] sm:$0xff]
        %v372 = vld [vmem:[%s238 + $0x2a0] sm:$0xff]
        %v373 = vld [vmem:[%s238 + $0x2a8] sm:$0xff]
        %v374 = vld [vmem:[%s238 + $0x2b0] sm:$0xff]
        %v375 = vld [vmem:[%s238 + $0x2b8] sm:$0xff]
        %v376 = vld [vmem:[%s238 + $0x2c0] sm:$0xff]
        %v377 = vld [vmem:[%s238 + $0x2c8] sm:$0xff]
        %v378 = vld [vmem:[%s238 + $0x2d0] sm:$0xff]
        %v379 = vld [vmem:[%s238 + $0x2d8] sm:$0xff]
        %v380 = vld [vmem:[%s238 + $0x2e0] sm:$0xff]
        %v381 = vld [vmem:[%s238 + $0x2e8] sm:$0xff]
        %v382 = vld [vmem:[%s238 + $0x2f0] sm:$0xff]
        %v383 = vld [vmem:[%s238 + $0x2f8] sm:$0xff]
        %v384 = vld [vmem:[%s238 + $0x300] sm:$0xff]
        %v385 = vld [vmem:[%s238 + $0x308] sm:$0xff]
        %v386 = vld [vmem:[%s238 + $0x310] sm:$0xff]
        %v387 = vld [vmem:[%s238 + $0x318] sm:$0xff]
        %v388 = vld [vmem:[%s238 + $0x320] sm:$0xff]
        %v389 = vld [vmem:[%s238 + $0x328] sm:$0xff]
        %v390 = vld [vmem:[%s238 + $0x330] sm:$0xff]
        %v391 = vld [vmem:[%s238 + $0x338] sm:$0xff]
        %v392 = vld [vmem:[%s238 + $0x340] sm:$0xff]
        %v393 = vld [vmem:[%s238 + $0x348] sm:$0xff]
        %v394 = vld [vmem:[%s238 + $0x350] sm:$0xff]
        %v395 = vld [vmem:[%s238 + $0x358] sm:$0xff]
        %v396 = vld [vmem:[%s238 + $0x360] sm:$0xff]
        %v397 = vld [vmem:[%s238 + $0x368] sm:$0xff]
        %v398 = vld [vmem:[%s238 + $0x370] sm:$0xff]
        %v399 = vld [vmem:[%s238 + $0x378] sm:$0xff]
        %v400 = vld [vmem:[%s238 + $0x380] sm:$0xff]
        %v401 = vld [vmem:[%s238 + $0x388] sm:$0xff]
        %v402 = vld [vmem:[%s238 + $0x390] sm:$0xff]
        %v403 = vld [vmem:[%s238 + $0x398] sm:$0xff]
        %v404 = vld [vmem:[%s238 + $0x3a0] sm:$0xff]
        %v405 = vld [vmem:[%s238 + $0x3a8] sm:$0xff]
        %v406 = vld [vmem:[%s238 + $0x3b0] sm:$0xff]
        %v407 = vld [vmem:[%s238 + $0x3b8] sm:$0xff]
        %v408 = vld [vmem:[%s238 + $0x3c0] sm:$0xff]
        %v409 = vld [vmem:[%s238 + $0x3c8] sm:$0xff]
        %v410 = vld [vmem:[%s238 + $0x3d0] sm:$0xff]
        %v411 = vld [vmem:[%s238 + $0x3d8] sm:$0xff]
        %v412 = vld [vmem:[%s238 + $0x3e0] sm:$0xff]
        %v413 = vld [vmem:[%s238 + $0x3e8] sm:$0xff]
        %v414 = vld [vmem:[%s238 + $0x3f0] sm:$0xff]
        %v415 = vld [vmem:[%s238 + $0x3f8] sm:$0xff]
        %v416 = vld [vmem:[%s238 + $0x400] sm:$0xff]
        %v417 = vld [vmem:[%s238 + $0x408] sm:$0xff]
        %v418 = vld [vmem:[%s238 + $0x410] sm:$0xff]
        %v419 = vld [vmem:[%s238 + $0x418] sm:$0xff]
        %v420 = vld [vmem:[%s238 + $0x420] sm:$0xff]
        %v421 = vld [vmem:[%s238 + $0x428] sm:$0xff]
        %v422 = vld [vmem:[%s238 + $0x430] sm:$0xff]
        %v423 = vld [vmem:[%s238 + $0x438] sm:$0xff]
        %v424 = vld [vmem:[%s238 + $0x440] sm:$0xff]
        %v425 = vld [vmem:[%s238 + $0x448] sm:$0xff]
        %v426 = vld [vmem:[%s238 + $0x450] sm:$0xff]
        %v427 = vld [vmem:[%s238 + $0x458] sm:$0xff]
        %v428 = vld [vmem:[%s238 + $0x460] sm:$0xff]
        %v429 = vld [vmem:[%s238 + $0x468] sm:$0xff]
        %v430 = vld [vmem:[%s238 + $0x470] sm:$0xff]
        %v431 = vld [vmem:[%s238 + $0x478] sm:$0xff]
        %v432 = vld [vmem:[%s247] sm:$0xff]
        %v433 = vld [vmem:[%s247 + $0x8] sm:$0xff]
        %v434 = vld [vmem:[%s247 + $0x10] sm:$0xff]
        %v435 = vld [vmem:[%s247 + $0x18] sm:$0xff]
        %v436 = vld [vmem:[%s247 + $0x20] sm:$0xff]
        %v437 = vld [vmem:[%s247 + $0x28] sm:$0xff]
        %v438 = vld [vmem:[%s247 + $0x30] sm:$0xff]
        %v439 = vld [vmem:[%s247 + $0x38] sm:$0xff]
        %v440 = vld [vmem:[%s247 + $0x40] sm:$0xff]
        %v441 = vld [vmem:[%s247 + $0x48] sm:$0xff]
        %v442 = vld [vmem:[%s247 + $0x50] sm:$0xff]
        %v443 = vld [vmem:[%s247 + $0x58] sm:$0xff]
        %v444 = vld [vmem:[%s247 + $0x60] sm:$0xff]
        %v445 = vld [vmem:[%s247 + $0x68] sm:$0xff]
        %v446 = vld [vmem:[%s247 + $0x70] sm:$0xff]
        %v447 = vld [vmem:[%s247 + $0x78] sm:$0xff]
        %v448 = vld [vmem:[%s247 + $0x80] sm:$0xff]
        %v449 = vld [vmem:[%s247 + $0x88] sm:$0xff]
        %v450 = vld [vmem:[%s247 + $0x90] sm:$0xff]
        %v451 = vld [vmem:[%s247 + $0x98] sm:$0xff]
        %v452 = vld [vmem:[%s247 + $0xa0] sm:$0xff]
        %v453 = vld [vmem:[%s247 + $0xa8] sm:$0xff]
        %v454 = vld [vmem:[%s247 + $0xb0] sm:$0xff]
        %v455 = vld [vmem:[%s247 + $0xb8] sm:$0xff]
        %v456 = vld [vmem:[%s247 + $0xc0] sm:$0xff]
        %v457 = vld [vmem:[%s247 + $0xc8] sm:$0xff]
        %v458 = vld [vmem:[%s247 + $0xd0] sm:$0xff]
        %v459 = vld [vmem:[%s247 + $0xd8] sm:$0xff]
        %v460 = vld [vmem:[%s247 + $0xe0] sm:$0xff]
        %v461 = vld [vmem:[%s247 + $0xe8] sm:$0xff]
        %v462 = vld [vmem:[%s247 + $0xf0] sm:$0xff]
        %v463 = vld [vmem:[%s247 + $0xf8] sm:$0xff]
        %v464 = vld [vmem:[%s247 + $0x100] sm:$0xff]
        %v465 = vld [vmem:[%s247 + $0x108] sm:$0xff]
        %v466 = vld [vmem:[%s247 + $0x110] sm:$0xff]
        %v467 = vld [vmem:[%s247 + $0x118] sm:$0xff]
        %v468 = vld [vmem:[%s247 + $0x120] sm:$0xff]
        %v469 = vld [vmem:[%s247 + $0x128] sm:$0xff]
        %v470 = vld [vmem:[%s247 + $0x130] sm:$0xff]
        %v471 = vld [vmem:[%s247 + $0x138] sm:$0xff]
        %v472 = vld [vmem:[%s247 + $0x140] sm:$0xff]
        %v473 = vld [vmem:[%s247 + $0x148] sm:$0xff]
        %v474 = vld [vmem:[%s247 + $0x150] sm:$0xff]
        %v475 = vld [vmem:[%s247 + $0x158] sm:$0xff]
        %v476 = vld [vmem:[%s247 + $0x160] sm:$0xff]
        %v477 = vld [vmem:[%s247 + $0x168] sm:$0xff]
        %v478 = vld [vmem:[%s247 + $0x170] sm:$0xff]
        %v479 = vld [vmem:[%s247 + $0x178] sm:$0xff]
        %v480 = vld [vmem:[%s247 + $0x180] sm:$0xff]
        %v481 = vld [vmem:[%s247 + $0x188] sm:$0xff]
        %v482 = vld [vmem:[%s247 + $0x190] sm:$0xff]
        %v483 = vld [vmem:[%s247 + $0x198] sm:$0xff]
        %v484 = vld [vmem:[%s247 + $0x1a0] sm:$0xff]
        %v485 = vld [vmem:[%s247 + $0x1a8] sm:$0xff]
        %v486 = vld [vmem:[%s247 + $0x1b0] sm:$0xff]
        %v487 = vld [vmem:[%s247 + $0x1b8] sm:$0xff]
        %v488 = vld [vmem:[%s247 + $0x1c0] sm:$0xff]
        %v489 = vld [vmem:[%s247 + $0x1c8] sm:$0xff]
        %v490 = vld [vmem:[%s247 + $0x1d0] sm:$0xff]
        %v491 = vld [vmem:[%s247 + $0x1d8] sm:$0xff]
        %v492 = vld [vmem:[%s247 + $0x1e0] sm:$0xff]
        %v493 = vld [vmem:[%s247 + $0x1e8] sm:$0xff]
        %v494 = vld [vmem:[%s247 + $0x1f0] sm:$0xff]
        %v495 = vld [vmem:[%s247 + $0x1f8] sm:$0xff]
        %v496 = vld [vmem:[%s247 + $0x200] sm:$0xff]
        %v497 = vld [vmem:[%s247 + $0x208] sm:$0xff]
        %v498 = vld [vmem:[%s247 + $0x210] sm:$0xff]
        %v499 = vld [vmem:[%s247 + $0x218] sm:$0xff]
        %v500 = vld [vmem:[%s247 + $0x220] sm:$0xff]
        %v501 = vld [vmem:[%s247 + $0x228] sm:$0xff]
        %v502 = vld [vmem:[%s247 + $0x230] sm:$0xff]
        %v503 = vld [vmem:[%s247 + $0x238] sm:$0xff]
        %v504 = vld [vmem:[%s247 + $0x240] sm:$0xff]
        %v505 = vld [vmem:[%s247 + $0x248] sm:$0xff]
        %v506 = vld [vmem:[%s247 + $0x250] sm:$0xff]
        %v507 = vld [vmem:[%s247 + $0x258] sm:$0xff]
        %v508 = vld [vmem:[%s247 + $0x260] sm:$0xff]
        %v509 = vld [vmem:[%s247 + $0x268] sm:$0xff]
        %v510 = vld [vmem:[%s247 + $0x270] sm:$0xff]
        %v511 = vld [vmem:[%s247 + $0x278] sm:$0xff]
        %v512 = vld [vmem:[%s247 + $0x280] sm:$0xff]
        %v513 = vld [vmem:[%s247 + $0x288] sm:$0xff]
        %v514 = vld [vmem:[%s247 + $0x290] sm:$0xff]
        %v515 = vld [vmem:[%s247 + $0x298] sm:$0xff]
        %v516 = vld [vmem:[%s247 + $0x2a0] sm:$0xff]
        %v517 = vld [vmem:[%s247 + $0x2a8] sm:$0xff]
        %v518 = vld [vmem:[%s247 + $0x2b0] sm:$0xff]
        %v519 = vld [vmem:[%s247 + $0x2b8] sm:$0xff]
        %v520 = vld [vmem:[%s247 + $0x2c0] sm:$0xff]
        %v521 = vld [vmem:[%s247 + $0x2c8] sm:$0xff]
        %v522 = vld [vmem:[%s247 + $0x2d0] sm:$0xff]
        %v523 = vld [vmem:[%s247 + $0x2d8] sm:$0xff]
        %v524 = vld [vmem:[%s247 + $0x2e0] sm:$0xff]
        %v525 = vld [vmem:[%s247 + $0x2e8] sm:$0xff]
        %v526 = vld [vmem:[%s247 + $0x2f0] sm:$0xff]
        %v527 = vld [vmem:[%s247 + $0x2f8] sm:$0xff]
        %v528 = vld [vmem:[%s247 + $0x300] sm:$0xff]
        %v529 = vld [vmem:[%s247 + $0x308] sm:$0xff]
        %v530 = vld [vmem:[%s247 + $0x310] sm:$0xff]
        %v531 = vld [vmem:[%s247 + $0x318] sm:$0xff]
        %v532 = vld [vmem:[%s247 + $0x320] sm:$0xff]
        %v533 = vld [vmem:[%s247 + $0x328] sm:$0xff]
        %v534 = vld [vmem:[%s247 + $0x330] sm:$0xff]
        %v535 = vld [vmem:[%s247 + $0x338] sm:$0xff]
        %v536 = vld [vmem:[%s247 + $0x340] sm:$0xff]
        %v537 = vld [vmem:[%s247 + $0x348] sm:$0xff]
        %v538 = vld [vmem:[%s247 + $0x350] sm:$0xff]
        %v539 = vld [vmem:[%s247 + $0x358] sm:$0xff]
        %v540 = vld [vmem:[%s247 + $0x360] sm:$0xff]
        %v541 = vld [vmem:[%s247 + $0x368] sm:$0xff]
        %v542 = vld [vmem:[%s247 + $0x370] sm:$0xff]
        %v543 = vld [vmem:[%s247 + $0x378] sm:$0xff]
        %v544 = vld [vmem:[%s247 + $0x380] sm:$0xff]
        %v545 = vld [vmem:[%s247 + $0x388] sm:$0xff]
        %v546 = vld [vmem:[%s247 + $0x390] sm:$0xff]
        %v547 = vld [vmem:[%s247 + $0x398] sm:$0xff]
        %v548 = vld [vmem:[%s247 + $0x3a0] sm:$0xff]
        %v549 = vld [vmem:[%s247 + $0x3a8] sm:$0xff]
        %v550 = vld [vmem:[%s247 + $0x3b0] sm:$0xff]
        %v551 = vld [vmem:[%s247 + $0x3b8] sm:$0xff]
        %v552 = vld [vmem:[%s247 + $0x3c0] sm:$0xff]
        %v553 = vld [vmem:[%s247 + $0x3c8] sm:$0xff]
        %v554 = vld [vmem:[%s247 + $0x3d0] sm:$0xff]
        %v555 = vld [vmem:[%s247 + $0x3d8] sm:$0xff]
        %v556 = vld [vmem:[%s247 + $0x3e0] sm:$0xff]
        %v557 = vld [vmem:[%s247 + $0x3e8] sm:$0xff]
        %v558 = vld [vmem:[%s247 + $0x3f0] sm:$0xff]
        %v559 = vld [vmem:[%s247 + $0x3f8] sm:$0xff]
        %v560 = vld [vmem:[%s247 + $0x400] sm:$0xff]
        %v561 = vld [vmem:[%s247 + $0x408] sm:$0xff]
        %v562 = vld [vmem:[%s247 + $0x410] sm:$0xff]
        %v563 = vld [vmem:[%s247 + $0x418] sm:$0xff]
        %v564 = vld [vmem:[%s247 + $0x420] sm:$0xff]
        %v565 = vld [vmem:[%s247 + $0x428] sm:$0xff]
        %v566 = vld [vmem:[%s247 + $0x430] sm:$0xff]
        %v567 = vld [vmem:[%s247 + $0x438] sm:$0xff]
        %v568 = vld [vmem:[%s247 + $0x440] sm:$0xff]
        %v569 = vld [vmem:[%s247 + $0x448] sm:$0xff]
        %v570 = vld [vmem:[%s247 + $0x450] sm:$0xff]
        %v571 = vld [vmem:[%s247 + $0x458] sm:$0xff]
        %v572 = vld [vmem:[%s247 + $0x460] sm:$0xff]
        %v573 = vld [vmem:[%s247 + $0x468] sm:$0xff]
        %v574 = vld [vmem:[%s247 + $0x470] sm:$0xff]
        %v575 = vld [vmem:[%s247 + $0x478] sm:$0xff]
        %s576 = smul.u32 %s27, 192
        %v577 = vlaneseq
        %v578 = vshrl.u32 %v577, 7
        %v579 = vadd.s32 %v578, 8
        %v580 = vadd.s32 %v578, 16
        %v581 = vadd.s32 %v578, 24
        %v582 = vadd.s32 %v578, 32
        %v583 = vadd.s32 %v578, 40
        %v584 = vadd.s32 %v578, 48
        %v585 = vadd.s32 %v578, 56
        %v586 = vadd.s32 %v578, 64
        %v587 = vadd.s32 %v578, 72
        %v588 = vadd.s32 %v578, 80
        %v589 = vadd.s32 %v578, 88
        %v590 = vadd.s32 %v578, 96
        %v591 = vadd.s32 %v578, 104
        %v592 = vadd.s32 %v578, 112
        %v593 = vadd.s32 %v578, 120
        %v594 = vadd.s32 %v578, 128
        %v595 = vadd.s32 %v578, 136
        %v596 = vadd.s32 %v578, 144
        %v597 = vadd.s32 %v578, 152
        %v598 = vadd.s32 %v578, 160
        %v599 = vadd.s32 %v578, 168
        %v600 = vadd.s32 %v578, 176
        %v601 = vadd.s32 %v578, 184
        %v602 = vstv %s576
        %v603 = vadd.s32 %v578, %v602
        %v604 = vadd.s32 %v579, %v602
        %v605 = vadd.s32 %v580, %v602
        %v606 = vadd.s32 %v581, %v602
        %v607 = vadd.s32 %v582, %v602
        %v608 = vadd.s32 %v583, %v602
        %v609 = vadd.s32 %v584, %v602
        %v610 = vadd.s32 %v585, %v602
        %v611 = vadd.s32 %v586, %v602
        %v612 = vadd.s32 %v587, %v602
        %v613 = vadd.s32 %v588, %v602
        %v614 = vadd.s32 %v589, %v602
        %v615 = vadd.s32 %v590, %v602
        %v616 = vadd.s32 %v591, %v602
        %v617 = vadd.s32 %v592, %v602
        %v618 = vadd.s32 %v593, %v602
        %v619 = vadd.s32 %v594, %v602
        %v620 = vadd.s32 %v595, %v602
        %v621 = vadd.s32 %v596, %v602
        %v622 = vadd.s32 %v597, %v602
        %v623 = vadd.s32 %v598, %v602
        %v624 = vadd.s32 %v599, %v602
        %v625 = vadd.s32 %v600, %v602
        %v626 = vadd.s32 %v601, %v602
        %v627 = vlaneseq
        %v628 = vand.u32 %v627, 127
        %v629 = vadd.s32 %v628, 128
        %v630 = vadd.s32 %v628, 256
        %v631 = vadd.s32 %v628, 384
        %v632 = vadd.s32 %v628, 512
        %v633 = vadd.s32 %v628, 640
        %v634 = vmul.u32 %v603, 768
        %v635 = vmul.u32 %v604, 768
        %v636 = vmul.u32 %v605, 768
        %v637 = vmul.u32 %v606, 768
        %v638 = vmul.u32 %v607, 768
        %v639 = vmul.u32 %v608, 768
        %v640 = vmul.u32 %v609, 768
        %v641 = vmul.u32 %v610, 768
        %v642 = vmul.u32 %v611, 768
        %v643 = vmul.u32 %v612, 768
        %v644 = vmul.u32 %v613, 768
        %v645 = vmul.u32 %v614, 768
        %v646 = vmul.u32 %v615, 768
        %v647 = vmul.u32 %v616, 768
        %v648 = vmul.u32 %v617, 768
        %v649 = vmul.u32 %v618, 768
        %v650 = vmul.u32 %v619, 768
        %v651 = vmul.u32 %v620, 768
        %v652 = vmul.u32 %v621, 768
        %v653 = vmul.u32 %v622, 768
        %v654 = vmul.u32 %v623, 768
        %v655 = vmul.u32 %v624, 768
        %v656 = vmul.u32 %v625, 768
        %v657 = vmul.u32 %v626, 768
        %v658 = vadd.s32 %v634, %v628
        %v659 = vadd.s32 %v634, %v629
        %v660 = vadd.s32 %v634, %v630
        %v661 = vadd.s32 %v634, %v631
        %v662 = vadd.s32 %v634, %v632
        %v663 = vadd.s32 %v634, %v633
        %v664 = vadd.s32 %v635, %v628
        %v665 = vadd.s32 %v635, %v629
        %v666 = vadd.s32 %v635, %v630
        %v667 = vadd.s32 %v635, %v631
        %v668 = vadd.s32 %v635, %v632
        %v669 = vadd.s32 %v635, %v633
        %v670 = vadd.s32 %v636, %v628
        %v671 = vadd.s32 %v636, %v629
        %v672 = vadd.s32 %v636, %v630
        %v673 = vadd.s32 %v636, %v631
        %v674 = vadd.s32 %v636, %v632
        %v675 = vadd.s32 %v636, %v633
        %v676 = vadd.s32 %v637, %v628
        %v677 = vadd.s32 %v637, %v629
        %v678 = vadd.s32 %v637, %v630
        %v679 = vadd.s32 %v637, %v631
        %v680 = vadd.s32 %v637, %v632
        %v681 = vadd.s32 %v637, %v633
        %v682 = vadd.s32 %v638, %v628
        %v683 = vadd.s32 %v638, %v629
        %v684 = vadd.s32 %v638, %v630
        %v685 = vadd.s32 %v638, %v631
        %v686 = vadd.s32 %v638, %v632
        %v687 = vadd.s32 %v638, %v633
        %v688 = vadd.s32 %v639, %v628
        %v689 = vadd.s32 %v639, %v629
        %v690 = vadd.s32 %v639, %v630
        %v691 = vadd.s32 %v639, %v631
        %v692 = vadd.s32 %v639, %v632
        %v693 = vadd.s32 %v639, %v633
        %v694 = vadd.s32 %v640, %v628
        %v695 = vadd.s32 %v640, %v629
        %v696 = vadd.s32 %v640, %v630
        %v697 = vadd.s32 %v640, %v631
        %v698 = vadd.s32 %v640, %v632
        %v699 = vadd.s32 %v640, %v633
        %v700 = vadd.s32 %v641, %v628
        %v701 = vadd.s32 %v641, %v629
        %v702 = vadd.s32 %v641, %v630
        %v703 = vadd.s32 %v641, %v631
        %v704 = vadd.s32 %v641, %v632
        %v705 = vadd.s32 %v641, %v633
        %v706 = vadd.s32 %v642, %v628
        %v707 = vadd.s32 %v642, %v629
        %v708 = vadd.s32 %v642, %v630
        %v709 = vadd.s32 %v642, %v631
        %v710 = vadd.s32 %v642, %v632
        %v711 = vadd.s32 %v642, %v633
        %v712 = vadd.s32 %v643, %v628
        %v713 = vadd.s32 %v643, %v629
        %v714 = vadd.s32 %v643, %v630
        %v715 = vadd.s32 %v643, %v631
        %v716 = vadd.s32 %v643, %v632
        %v717 = vadd.s32 %v643, %v633
        %v718 = vadd.s32 %v644, %v628
        %v719 = vadd.s32 %v644, %v629
        %v720 = vadd.s32 %v644, %v630
        %v721 = vadd.s32 %v644, %v631
        %v722 = vadd.s32 %v644, %v632
        %v723 = vadd.s32 %v644, %v633
        %v724 = vadd.s32 %v645, %v628
        %v725 = vadd.s32 %v645, %v629
        %v726 = vadd.s32 %v645, %v630
        %v727 = vadd.s32 %v645, %v631
        %v728 = vadd.s32 %v645, %v632
        %v729 = vadd.s32 %v645, %v633
        %v730 = vadd.s32 %v646, %v628
        %v731 = vadd.s32 %v646, %v629
        %v732 = vadd.s32 %v646, %v630
        %v733 = vadd.s32 %v646, %v631
        %v734 = vadd.s32 %v646, %v632
        %v735 = vadd.s32 %v646, %v633
        %v736 = vadd.s32 %v647, %v628
        %v737 = vadd.s32 %v647, %v629
        %v738 = vadd.s32 %v647, %v630
        %v739 = vadd.s32 %v647, %v631
        %v740 = vadd.s32 %v647, %v632
        %v741 = vadd.s32 %v647, %v633
        %v742 = vadd.s32 %v648, %v628
        %v743 = vadd.s32 %v648, %v629
        %v744 = vadd.s32 %v648, %v630
        %v745 = vadd.s32 %v648, %v631
        %v746 = vadd.s32 %v648, %v632
        %v747 = vadd.s32 %v648, %v633
        %v748 = vadd.s32 %v649, %v628
        %v749 = vadd.s32 %v649, %v629
        %v750 = vadd.s32 %v649, %v630
        %v751 = vadd.s32 %v649, %v631
        %v752 = vadd.s32 %v649, %v632
        %v753 = vadd.s32 %v649, %v633
        %v754 = vadd.s32 %v650, %v628
        %v755 = vadd.s32 %v650, %v629
        %v756 = vadd.s32 %v650, %v630
        %v757 = vadd.s32 %v650, %v631
        %v758 = vadd.s32 %v650, %v632
        %v759 = vadd.s32 %v650, %v633
        %v760 = vadd.s32 %v651, %v628
        %v761 = vadd.s32 %v651, %v629
        %v762 = vadd.s32 %v651, %v630
        %v763 = vadd.s32 %v651, %v631
        %v764 = vadd.s32 %v651, %v632
        %v765 = vadd.s32 %v651, %v633
        %v766 = vadd.s32 %v652, %v628
        %v767 = vadd.s32 %v652, %v629
        %v768 = vadd.s32 %v652, %v630
        %v769 = vadd.s32 %v652, %v631
        %v770 = vadd.s32 %v652, %v632
        %v771 = vadd.s32 %v652, %v633
        %v772 = vadd.s32 %v653, %v628
        %v773 = vadd.s32 %v653, %v629
        %v774 = vadd.s32 %v653, %v630
        %v775 = vadd.s32 %v653, %v631
        %v776 = vadd.s32 %v653, %v632
        %v777 = vadd.s32 %v653, %v633
        %v778 = vadd.s32 %v654, %v628
        %v779 = vadd.s32 %v654, %v629
        %v780 = vadd.s32 %v654, %v630
        %v781 = vadd.s32 %v654, %v631
        %v782 = vadd.s32 %v654, %v632
        %v783 = vadd.s32 %v654, %v633
        %v784 = vadd.s32 %v655, %v628
        %v785 = vadd.s32 %v655, %v629
        %v786 = vadd.s32 %v655, %v630
        %v787 = vadd.s32 %v655, %v631
        %v788 = vadd.s32 %v655, %v632
        %v789 = vadd.s32 %v655, %v633
        %v790 = vadd.s32 %v656, %v628
        %v791 = vadd.s32 %v656, %v629
        %v792 = vadd.s32 %v656, %v630
        %v793 = vadd.s32 %v656, %v631
        %v794 = vadd.s32 %v656, %v632
        %v795 = vadd.s32 %v656, %v633
        %v796 = vadd.s32 %v657, %v628
        %v797 = vadd.s32 %v657, %v629
        %v798 = vadd.s32 %v657, %v630
        %v799 = vadd.s32 %v657, %v631
        %v800 = vadd.s32 %v657, %v632
        %v801 = vadd.s32 %v657, %v633
        %s802 = sld [smem:[#allocation3]]
        %s803 = smul.u32 %s802, 2654435769
        %v804 = vstv %s803
        %v805 = vxor.u32 %v658, %v804
        %v806 = vxor.u32 %v659, %v804
        %v807 = vxor.u32 %v660, %v804
        %v808 = vxor.u32 %v661, %v804
        %v809 = vxor.u32 %v662, %v804
        %v810 = vxor.u32 %v663, %v804
        %v811 = vxor.u32 %v664, %v804
        %v812 = vxor.u32 %v665, %v804
        %v813 = vxor.u32 %v666, %v804
        %v814 = vxor.u32 %v667, %v804
        %v815 = vxor.u32 %v668, %v804
        %v816 = vxor.u32 %v669, %v804
        %v817 = vxor.u32 %v670, %v804
        %v818 = vxor.u32 %v671, %v804
        %v819 = vxor.u32 %v672, %v804
        %v820 = vxor.u32 %v673, %v804
        %v821 = vxor.u32 %v674, %v804
        %v822 = vxor.u32 %v675, %v804
        %v823 = vxor.u32 %v676, %v804
        %v824 = vxor.u32 %v677, %v804
        %v825 = vxor.u32 %v678, %v804
        %v826 = vxor.u32 %v679, %v804
        %v827 = vxor.u32 %v680, %v804
        %v828 = vxor.u32 %v681, %v804
        %v829 = vxor.u32 %v682, %v804
        %v830 = vxor.u32 %v683, %v804
        %v831 = vxor.u32 %v684, %v804
        %v832 = vxor.u32 %v685, %v804
        %v833 = vxor.u32 %v686, %v804
        %v834 = vxor.u32 %v687, %v804
        %v835 = vxor.u32 %v688, %v804
        %v836 = vxor.u32 %v689, %v804
        %v837 = vxor.u32 %v690, %v804
        %v838 = vxor.u32 %v691, %v804
        %v839 = vxor.u32 %v692, %v804
        %v840 = vxor.u32 %v693, %v804
        %v841 = vxor.u32 %v694, %v804
        %v842 = vxor.u32 %v695, %v804
        %v843 = vxor.u32 %v696, %v804
        %v844 = vxor.u32 %v697, %v804
        %v845 = vxor.u32 %v698, %v804
        %v846 = vxor.u32 %v699, %v804
        %v847 = vxor.u32 %v700, %v804
        %v848 = vxor.u32 %v701, %v804
        %v849 = vxor.u32 %v702, %v804
        %v850 = vxor.u32 %v703, %v804
        %v851 = vxor.u32 %v704, %v804
        %v852 = vxor.u32 %v705, %v804
        %v853 = vxor.u32 %v706, %v804
        %v854 = vxor.u32 %v707, %v804
        %v855 = vxor.u32 %v708, %v804
        %v856 = vxor.u32 %v709, %v804
        %v857 = vxor.u32 %v710, %v804
        %v858 = vxor.u32 %v711, %v804
        %v859 = vxor.u32 %v712, %v804
        %v860 = vxor.u32 %v713, %v804
        %v861 = vxor.u32 %v714, %v804
        %v862 = vxor.u32 %v715, %v804
        %v863 = vxor.u32 %v716, %v804
        %v864 = vxor.u32 %v717, %v804
        %v865 = vxor.u32 %v718, %v804
        %v866 = vxor.u32 %v719, %v804
        %v867 = vxor.u32 %v720, %v804
        %v868 = vxor.u32 %v721, %v804
        %v869 = vxor.u32 %v722, %v804
        %v870 = vxor.u32 %v723, %v804
        %v871 = vxor.u32 %v724, %v804
        %v872 = vxor.u32 %v725, %v804
        %v873 = vxor.u32 %v726, %v804
        %v874 = vxor.u32 %v727, %v804
        %v875 = vxor.u32 %v728, %v804
        %v876 = vxor.u32 %v729, %v804
        %v877 = vxor.u32 %v730, %v804
        %v878 = vxor.u32 %v731, %v804
        %v879 = vxor.u32 %v732, %v804
        %v880 = vxor.u32 %v733, %v804
        %v881 = vxor.u32 %v734, %v804
        %v882 = vxor.u32 %v735, %v804
        %v883 = vxor.u32 %v736, %v804
        %v884 = vxor.u32 %v737, %v804
        %v885 = vxor.u32 %v738, %v804
        %v886 = vxor.u32 %v739, %v804
        %v887 = vxor.u32 %v740, %v804
        %v888 = vxor.u32 %v741, %v804
        %v889 = vxor.u32 %v742, %v804
        %v890 = vxor.u32 %v743, %v804
        %v891 = vxor.u32 %v744, %v804
        %v892 = vxor.u32 %v745, %v804
        %v893 = vxor.u32 %v746, %v804
        %v894 = vxor.u32 %v747, %v804
        %v895 = vxor.u32 %v748, %v804
        %v896 = vxor.u32 %v749, %v804
        %v897 = vxor.u32 %v750, %v804
        %v898 = vxor.u32 %v751, %v804
        %v899 = vxor.u32 %v752, %v804
        %v900 = vxor.u32 %v753, %v804
        %v901 = vxor.u32 %v754, %v804
        %v902 = vxor.u32 %v755, %v804
        %v903 = vxor.u32 %v756, %v804
        %v904 = vxor.u32 %v757, %v804
        %v905 = vxor.u32 %v758, %v804
        %v906 = vxor.u32 %v759, %v804
        %v907 = vxor.u32 %v760, %v804
        %v908 = vxor.u32 %v761, %v804
        %v909 = vxor.u32 %v762, %v804
        %v910 = vxor.u32 %v763, %v804
        %v911 = vxor.u32 %v764, %v804
        %v912 = vxor.u32 %v765, %v804
        %v913 = vxor.u32 %v766, %v804
        %v914 = vxor.u32 %v767, %v804
        %v915 = vxor.u32 %v768, %v804
        %v916 = vxor.u32 %v769, %v804
        %v917 = vxor.u32 %v770, %v804
        %v918 = vxor.u32 %v771, %v804
        %v919 = vxor.u32 %v772, %v804
        %v920 = vxor.u32 %v773, %v804
        %v921 = vxor.u32 %v774, %v804
        %v922 = vxor.u32 %v775, %v804
        %v923 = vxor.u32 %v776, %v804
        %v924 = vxor.u32 %v777, %v804
        %v925 = vxor.u32 %v778, %v804
        %v926 = vxor.u32 %v779, %v804
        %v927 = vxor.u32 %v780, %v804
        %v928 = vxor.u32 %v781, %v804
        %v929 = vxor.u32 %v782, %v804
        %v930 = vxor.u32 %v783, %v804
        %v931 = vxor.u32 %v784, %v804
        %v932 = vxor.u32 %v785, %v804
        %v933 = vxor.u32 %v786, %v804
        %v934 = vxor.u32 %v787, %v804
        %v935 = vxor.u32 %v788, %v804
        %v936 = vxor.u32 %v789, %v804
        %v937 = vxor.u32 %v790, %v804
        %v938 = vxor.u32 %v791, %v804
        %v939 = vxor.u32 %v792, %v804
        %v940 = vxor.u32 %v793, %v804
        %v941 = vxor.u32 %v794, %v804
        %v942 = vxor.u32 %v795, %v804
        %v943 = vxor.u32 %v796, %v804
        %v944 = vxor.u32 %v797, %v804
        %v945 = vxor.u32 %v798, %v804
        %v946 = vxor.u32 %v799, %v804
        %v947 = vxor.u32 %v800, %v804
        %v948 = vxor.u32 %v801, %v804
        %v949 = vshrl.u32 %v805, 16
        %v950 = vshrl.u32 %v806, 16
        %v951 = vshrl.u32 %v807, 16
        %v952 = vshrl.u32 %v808, 16
        %v953 = vshrl.u32 %v809, 16
        %v954 = vshrl.u32 %v810, 16
        %v955 = vshrl.u32 %v811, 16
        %v956 = vshrl.u32 %v812, 16
        %v957 = vshrl.u32 %v813, 16
        %v958 = vshrl.u32 %v814, 16
        %v959 = vshrl.u32 %v815, 16
        %v960 = vshrl.u32 %v816, 16
        %v961 = vshrl.u32 %v817, 16
        %v962 = vshrl.u32 %v818, 16
        %v963 = vshrl.u32 %v819, 16
        %v964 = vshrl.u32 %v820, 16
        %v965 = vshrl.u32 %v821, 16
        %v966 = vshrl.u32 %v822, 16
        %v967 = vshrl.u32 %v823, 16
        %v968 = vshrl.u32 %v824, 16
        %v969 = vshrl.u32 %v825, 16
        %v970 = vshrl.u32 %v826, 16
        %v971 = vshrl.u32 %v827, 16
        %v972 = vshrl.u32 %v828, 16
        %v973 = vshrl.u32 %v829, 16
        %v974 = vshrl.u32 %v830, 16
        %v975 = vshrl.u32 %v831, 16
        %v976 = vshrl.u32 %v832, 16
        %v977 = vshrl.u32 %v833, 16
        %v978 = vshrl.u32 %v834, 16
        %v979 = vshrl.u32 %v835, 16
        %v980 = vshrl.u32 %v836, 16
        %v981 = vshrl.u32 %v837, 16
        %v982 = vshrl.u32 %v838, 16
        %v983 = vshrl.u32 %v839, 16
        %v984 = vshrl.u32 %v840, 16
        %v985 = vshrl.u32 %v841, 16
        %v986 = vshrl.u32 %v842, 16
        %v987 = vshrl.u32 %v843, 16
        %v988 = vshrl.u32 %v844, 16
        %v989 = vshrl.u32 %v845, 16
        %v990 = vshrl.u32 %v846, 16
        %v991 = vshrl.u32 %v847, 16
        %v992 = vshrl.u32 %v848, 16
        %v993 = vshrl.u32 %v849, 16
        %v994 = vshrl.u32 %v850, 16
        %v995 = vshrl.u32 %v851, 16
        %v996 = vshrl.u32 %v852, 16
        %v997 = vshrl.u32 %v853, 16
        %v998 = vshrl.u32 %v854, 16
        %v999 = vshrl.u32 %v855, 16
        %v1000 = vshrl.u32 %v856, 16
        %v1001 = vshrl.u32 %v857, 16
        %v1002 = vshrl.u32 %v858, 16
        %v1003 = vshrl.u32 %v859, 16
        %v1004 = vshrl.u32 %v860, 16
        %v1005 = vshrl.u32 %v861, 16
        %v1006 = vshrl.u32 %v862, 16
        %v1007 = vshrl.u32 %v863, 16
        %v1008 = vshrl.u32 %v864, 16
        %v1009 = vshrl.u32 %v865, 16
        %v1010 = vshrl.u32 %v866, 16
        %v1011 = vshrl.u32 %v867, 16
        %v1012 = vshrl.u32 %v868, 16
        %v1013 = vshrl.u32 %v869, 16
        %v1014 = vshrl.u32 %v870, 16
        %v1015 = vshrl.u32 %v871, 16
        %v1016 = vshrl.u32 %v872, 16
        %v1017 = vshrl.u32 %v873, 16
        %v1018 = vshrl.u32 %v874, 16
        %v1019 = vshrl.u32 %v875, 16
        %v1020 = vshrl.u32 %v876, 16
        %v1021 = vshrl.u32 %v877, 16
        %v1022 = vshrl.u32 %v878, 16
        %v1023 = vshrl.u32 %v879, 16
        %v1024 = vshrl.u32 %v880, 16
        %v1025 = vshrl.u32 %v881, 16
        %v1026 = vshrl.u32 %v882, 16
        %v1027 = vshrl.u32 %v883, 16
        %v1028 = vshrl.u32 %v884, 16
        %v1029 = vshrl.u32 %v885, 16
        %v1030 = vshrl.u32 %v886, 16
        %v1031 = vshrl.u32 %v887, 16
        %v1032 = vshrl.u32 %v888, 16
        %v1033 = vshrl.u32 %v889, 16
        %v1034 = vshrl.u32 %v890, 16
        %v1035 = vshrl.u32 %v891, 16
        %v1036 = vshrl.u32 %v892, 16
        %v1037 = vshrl.u32 %v893, 16
        %v1038 = vshrl.u32 %v894, 16
        %v1039 = vshrl.u32 %v895, 16
        %v1040 = vshrl.u32 %v896, 16
        %v1041 = vshrl.u32 %v897, 16
        %v1042 = vshrl.u32 %v898, 16
        %v1043 = vshrl.u32 %v899, 16
        %v1044 = vshrl.u32 %v900, 16
        %v1045 = vshrl.u32 %v901, 16
        %v1046 = vshrl.u32 %v902, 16
        %v1047 = vshrl.u32 %v903, 16
        %v1048 = vshrl.u32 %v904, 16
        %v1049 = vshrl.u32 %v905, 16
        %v1050 = vshrl.u32 %v906, 16
        %v1051 = vshrl.u32 %v907, 16
        %v1052 = vshrl.u32 %v908, 16
        %v1053 = vshrl.u32 %v909, 16
        %v1054 = vshrl.u32 %v910, 16
        %v1055 = vshrl.u32 %v911, 16
        %v1056 = vshrl.u32 %v912, 16
        %v1057 = vshrl.u32 %v913, 16
        %v1058 = vshrl.u32 %v914, 16
        %v1059 = vshrl.u32 %v915, 16
        %v1060 = vshrl.u32 %v916, 16
        %v1061 = vshrl.u32 %v917, 16
        %v1062 = vshrl.u32 %v918, 16
        %v1063 = vshrl.u32 %v919, 16
        %v1064 = vshrl.u32 %v920, 16
        %v1065 = vshrl.u32 %v921, 16
        %v1066 = vshrl.u32 %v922, 16
        %v1067 = vshrl.u32 %v923, 16
        %v1068 = vshrl.u32 %v924, 16
        %v1069 = vshrl.u32 %v925, 16
        %v1070 = vshrl.u32 %v926, 16
        %v1071 = vshrl.u32 %v927, 16
        %v1072 = vshrl.u32 %v928, 16
        %v1073 = vshrl.u32 %v929, 16
        %v1074 = vshrl.u32 %v930, 16
        %v1075 = vshrl.u32 %v931, 16
        %v1076 = vshrl.u32 %v932, 16
        %v1077 = vshrl.u32 %v933, 16
        %v1078 = vshrl.u32 %v934, 16
        %v1079 = vshrl.u32 %v935, 16
        %v1080 = vshrl.u32 %v936, 16
        %v1081 = vshrl.u32 %v937, 16
        %v1082 = vshrl.u32 %v938, 16
        %v1083 = vshrl.u32 %v939, 16
        %v1084 = vshrl.u32 %v940, 16
        %v1085 = vshrl.u32 %v941, 16
        %v1086 = vshrl.u32 %v942, 16
        %v1087 = vshrl.u32 %v943, 16
        %v1088 = vshrl.u32 %v944, 16
        %v1089 = vshrl.u32 %v945, 16
        %v1090 = vshrl.u32 %v946, 16
        %v1091 = vshrl.u32 %v947, 16
        %v1092 = vshrl.u32 %v948, 16
        %v1093 = vxor.u32 %v805, %v949
        %v1094 = vxor.u32 %v806, %v950
        %v1095 = vxor.u32 %v807, %v951
        %v1096 = vxor.u32 %v808, %v952
        %v1097 = vxor.u32 %v809, %v953
        %v1098 = vxor.u32 %v810, %v954
        %v1099 = vxor.u32 %v811, %v955
        %v1100 = vxor.u32 %v812, %v956
        %v1101 = vxor.u32 %v813, %v957
        %v1102 = vxor.u32 %v814, %v958
        %v1103 = vxor.u32 %v815, %v959
        %v1104 = vxor.u32 %v816, %v960
        %v1105 = vxor.u32 %v817, %v961
        %v1106 = vxor.u32 %v818, %v962
        %v1107 = vxor.u32 %v819, %v963
        %v1108 = vxor.u32 %v820, %v964
        %v1109 = vxor.u32 %v821, %v965
        %v1110 = vxor.u32 %v822, %v966
        %v1111 = vxor.u32 %v823, %v967
        %v1112 = vxor.u32 %v824, %v968
        %v1113 = vxor.u32 %v825, %v969
        %v1114 = vxor.u32 %v826, %v970
        %v1115 = vxor.u32 %v827, %v971
        %v1116 = vxor.u32 %v828, %v972
        %v1117 = vxor.u32 %v829, %v973
        %v1118 = vxor.u32 %v830, %v974
        %v1119 = vxor.u32 %v831, %v975
        %v1120 = vxor.u32 %v832, %v976
        %v1121 = vxor.u32 %v833, %v977
        %v1122 = vxor.u32 %v834, %v978
        %v1123 = vxor.u32 %v835, %v979
        %v1124 = vxor.u32 %v836, %v980
        %v1125 = vxor.u32 %v837, %v981
        %v1126 = vxor.u32 %v838, %v982
        %v1127 = vxor.u32 %v839, %v983
        %v1128 = vxor.u32 %v840, %v984
        %v1129 = vxor.u32 %v841, %v985
        %v1130 = vxor.u32 %v842, %v986
        %v1131 = vxor.u32 %v843, %v987
        %v1132 = vxor.u32 %v844, %v988
        %v1133 = vxor.u32 %v845, %v989
        %v1134 = vxor.u32 %v846, %v990
        %v1135 = vxor.u32 %v847, %v991
        %v1136 = vxor.u32 %v848, %v992
        %v1137 = vxor.u32 %v849, %v993
        %v1138 = vxor.u32 %v850, %v994
        %v1139 = vxor.u32 %v851, %v995
        %v1140 = vxor.u32 %v852, %v996
        %v1141 = vxor.u32 %v853, %v997
        %v1142 = vxor.u32 %v854, %v998
        %v1143 = vxor.u32 %v855, %v999
        %v1144 = vxor.u32 %v856, %v1000
        %v1145 = vxor.u32 %v857, %v1001
        %v1146 = vxor.u32 %v858, %v1002
        %v1147 = vxor.u32 %v859, %v1003
        %v1148 = vxor.u32 %v860, %v1004
        %v1149 = vxor.u32 %v861, %v1005
        %v1150 = vxor.u32 %v862, %v1006
        %v1151 = vxor.u32 %v863, %v1007
        %v1152 = vxor.u32 %v864, %v1008
        %v1153 = vxor.u32 %v865, %v1009
        %v1154 = vxor.u32 %v866, %v1010
        %v1155 = vxor.u32 %v867, %v1011
        %v1156 = vxor.u32 %v868, %v1012
        %v1157 = vxor.u32 %v869, %v1013
        %v1158 = vxor.u32 %v870, %v1014
        %v1159 = vxor.u32 %v871, %v1015
        %v1160 = vxor.u32 %v872, %v1016
        %v1161 = vxor.u32 %v873, %v1017
        %v1162 = vxor.u32 %v874, %v1018
        %v1163 = vxor.u32 %v875, %v1019
        %v1164 = vxor.u32 %v876, %v1020
        %v1165 = vxor.u32 %v877, %v1021
        %v1166 = vxor.u32 %v878, %v1022
        %v1167 = vxor.u32 %v879, %v1023
        %v1168 = vxor.u32 %v880, %v1024
        %v1169 = vxor.u32 %v881, %v1025
        %v1170 = vxor.u32 %v882, %v1026
        %v1171 = vxor.u32 %v883, %v1027
        %v1172 = vxor.u32 %v884, %v1028
        %v1173 = vxor.u32 %v885, %v1029
        %v1174 = vxor.u32 %v886, %v1030
        %v1175 = vxor.u32 %v887, %v1031
        %v1176 = vxor.u32 %v888, %v1032
        %v1177 = vxor.u32 %v889, %v1033
        %v1178 = vxor.u32 %v890, %v1034
        %v1179 = vxor.u32 %v891, %v1035
        %v1180 = vxor.u32 %v892, %v1036
        %v1181 = vxor.u32 %v893, %v1037
        %v1182 = vxor.u32 %v894, %v1038
        %v1183 = vxor.u32 %v895, %v1039
        %v1184 = vxor.u32 %v896, %v1040
        %v1185 = vxor.u32 %v897, %v1041
        %v1186 = vxor.u32 %v898, %v1042
        %v1187 = vxor.u32 %v899, %v1043
        %v1188 = vxor.u32 %v900, %v1044
        %v1189 = vxor.u32 %v901, %v1045
        %v1190 = vxor.u32 %v902, %v1046
        %v1191 = vxor.u32 %v903, %v1047
        %v1192 = vxor.u32 %v904, %v1048
        %v1193 = vxor.u32 %v905, %v1049
        %v1194 = vxor.u32 %v906, %v1050
        %v1195 = vxor.u32 %v907, %v1051
        %v1196 = vxor.u32 %v908, %v1052
        %v1197 = vxor.u32 %v909, %v1053
        %v1198 = vxor.u32 %v910, %v1054
        %v1199 = vxor.u32 %v911, %v1055
        %v1200 = vxor.u32 %v912, %v1056
        %v1201 = vxor.u32 %v913, %v1057
        %v1202 = vxor.u32 %v914, %v1058
        %v1203 = vxor.u32 %v915, %v1059
        %v1204 = vxor.u32 %v916, %v1060
        %v1205 = vxor.u32 %v917, %v1061
        %v1206 = vxor.u32 %v918, %v1062
        %v1207 = vxor.u32 %v919, %v1063
        %v1208 = vxor.u32 %v920, %v1064
        %v1209 = vxor.u32 %v921, %v1065
        %v1210 = vxor.u32 %v922, %v1066
        %v1211 = vxor.u32 %v923, %v1067
        %v1212 = vxor.u32 %v924, %v1068
        %v1213 = vxor.u32 %v925, %v1069
        %v1214 = vxor.u32 %v926, %v1070
        %v1215 = vxor.u32 %v927, %v1071
        %v1216 = vxor.u32 %v928, %v1072
        %v1217 = vxor.u32 %v929, %v1073
        %v1218 = vxor.u32 %v930, %v1074
        %v1219 = vxor.u32 %v931, %v1075
        %v1220 = vxor.u32 %v932, %v1076
        %v1221 = vxor.u32 %v933, %v1077
        %v1222 = vxor.u32 %v934, %v1078
        %v1223 = vxor.u32 %v935, %v1079
        %v1224 = vxor.u32 %v936, %v1080
        %v1225 = vxor.u32 %v937, %v1081
        %v1226 = vxor.u32 %v938, %v1082
        %v1227 = vxor.u32 %v939, %v1083
        %v1228 = vxor.u32 %v940, %v1084
        %v1229 = vxor.u32 %v941, %v1085
        %v1230 = vxor.u32 %v942, %v1086
        %v1231 = vxor.u32 %v943, %v1087
        %v1232 = vxor.u32 %v944, %v1088
        %v1233 = vxor.u32 %v945, %v1089
        %v1234 = vxor.u32 %v946, %v1090
        %v1235 = vxor.u32 %v947, %v1091
        %v1236 = vxor.u32 %v948, %v1092
        %v1237 = vmul.u32 %v1093, 2146121005
        %v1238 = vmul.u32 %v1094, 2146121005
        %v1239 = vmul.u32 %v1095, 2146121005
        %v1240 = vmul.u32 %v1096, 2146121005
        %v1241 = vmul.u32 %v1097, 2146121005
        %v1242 = vmul.u32 %v1098, 2146121005
        %v1243 = vmul.u32 %v1099, 2146121005
        %v1244 = vmul.u32 %v1100, 2146121005
        %v1245 = vmul.u32 %v1101, 2146121005
        %v1246 = vmul.u32 %v1102, 2146121005
        %v1247 = vmul.u32 %v1103, 2146121005
        %v1248 = vmul.u32 %v1104, 2146121005
        %v1249 = vmul.u32 %v1105, 2146121005
        %v1250 = vmul.u32 %v1106, 2146121005
        %v1251 = vmul.u32 %v1107, 2146121005
        %v1252 = vmul.u32 %v1108, 2146121005
        %v1253 = vmul.u32 %v1109, 2146121005
        %v1254 = vmul.u32 %v1110, 2146121005
        %v1255 = vmul.u32 %v1111, 2146121005
        %v1256 = vmul.u32 %v1112, 2146121005
        %v1257 = vmul.u32 %v1113, 2146121005
        %v1258 = vmul.u32 %v1114, 2146121005
        %v1259 = vmul.u32 %v1115, 2146121005
        %v1260 = vmul.u32 %v1116, 2146121005
        %v1261 = vmul.u32 %v1117, 2146121005
        %v1262 = vmul.u32 %v1118, 2146121005
        %v1263 = vmul.u32 %v1119, 2146121005
        %v1264 = vmul.u32 %v1120, 2146121005
        %v1265 = vmul.u32 %v1121, 2146121005
        %v1266 = vmul.u32 %v1122, 2146121005
        %v1267 = vmul.u32 %v1123, 2146121005
        %v1268 = vmul.u32 %v1124, 2146121005
        %v1269 = vmul.u32 %v1125, 2146121005
        %v1270 = vmul.u32 %v1126, 2146121005
        %v1271 = vmul.u32 %v1127, 2146121005
        %v1272 = vmul.u32 %v1128, 2146121005
        %v1273 = vmul.u32 %v1129, 2146121005
        %v1274 = vmul.u32 %v1130, 2146121005
        %v1275 = vmul.u32 %v1131, 2146121005
        %v1276 = vmul.u32 %v1132, 2146121005
        %v1277 = vmul.u32 %v1133, 2146121005
        %v1278 = vmul.u32 %v1134, 2146121005
        %v1279 = vmul.u32 %v1135, 2146121005
        %v1280 = vmul.u32 %v1136, 2146121005
        %v1281 = vmul.u32 %v1137, 2146121005
        %v1282 = vmul.u32 %v1138, 2146121005
        %v1283 = vmul.u32 %v1139, 2146121005
        %v1284 = vmul.u32 %v1140, 2146121005
        %v1285 = vmul.u32 %v1141, 2146121005
        %v1286 = vmul.u32 %v1142, 2146121005
        %v1287 = vmul.u32 %v1143, 2146121005
        %v1288 = vmul.u32 %v1144, 2146121005
        %v1289 = vmul.u32 %v1145, 2146121005
        %v1290 = vmul.u32 %v1146, 2146121005
        %v1291 = vmul.u32 %v1147, 2146121005
        %v1292 = vmul.u32 %v1148, 2146121005
        %v1293 = vmul.u32 %v1149, 2146121005
        %v1294 = vmul.u32 %v1150, 2146121005
        %v1295 = vmul.u32 %v1151, 2146121005
        %v1296 = vmul.u32 %v1152, 2146121005
        %v1297 = vmul.u32 %v1153, 2146121005
        %v1298 = vmul.u32 %v1154, 2146121005
        %v1299 = vmul.u32 %v1155, 2146121005
        %v1300 = vmul.u32 %v1156, 2146121005
        %v1301 = vmul.u32 %v1157, 2146121005
        %v1302 = vmul.u32 %v1158, 2146121005
        %v1303 = vmul.u32 %v1159, 2146121005
        %v1304 = vmul.u32 %v1160, 2146121005
        %v1305 = vmul.u32 %v1161, 2146121005
        %v1306 = vmul.u32 %v1162, 2146121005
        %v1307 = vmul.u32 %v1163, 2146121005
        %v1308 = vmul.u32 %v1164, 2146121005
        %v1309 = vmul.u32 %v1165, 2146121005
        %v1310 = vmul.u32 %v1166, 2146121005
        %v1311 = vmul.u32 %v1167, 2146121005
        %v1312 = vmul.u32 %v1168, 2146121005
        %v1313 = vmul.u32 %v1169, 2146121005
        %v1314 = vmul.u32 %v1170, 2146121005
        %v1315 = vmul.u32 %v1171, 2146121005
        %v1316 = vmul.u32 %v1172, 2146121005
        %v1317 = vmul.u32 %v1173, 2146121005
        %v1318 = vmul.u32 %v1174, 2146121005
        %v1319 = vmul.u32 %v1175, 2146121005
        %v1320 = vmul.u32 %v1176, 2146121005
        %v1321 = vmul.u32 %v1177, 2146121005
        %v1322 = vmul.u32 %v1178, 2146121005
        %v1323 = vmul.u32 %v1179, 2146121005
        %v1324 = vmul.u32 %v1180, 2146121005
        %v1325 = vmul.u32 %v1181, 2146121005
        %v1326 = vmul.u32 %v1182, 2146121005
        %v1327 = vmul.u32 %v1183, 2146121005
        %v1328 = vmul.u32 %v1184, 2146121005
        %v1329 = vmul.u32 %v1185, 2146121005
        %v1330 = vmul.u32 %v1186, 2146121005
        %v1331 = vmul.u32 %v1187, 2146121005
        %v1332 = vmul.u32 %v1188, 2146121005
        %v1333 = vmul.u32 %v1189, 2146121005
        %v1334 = vmul.u32 %v1190, 2146121005
        %v1335 = vmul.u32 %v1191, 2146121005
        %v1336 = vmul.u32 %v1192, 2146121005
        %v1337 = vmul.u32 %v1193, 2146121005
        %v1338 = vmul.u32 %v1194, 2146121005
        %v1339 = vmul.u32 %v1195, 2146121005
        %v1340 = vmul.u32 %v1196, 2146121005
        %v1341 = vmul.u32 %v1197, 2146121005
        %v1342 = vmul.u32 %v1198, 2146121005
        %v1343 = vmul.u32 %v1199, 2146121005
        %v1344 = vmul.u32 %v1200, 2146121005
        %v1345 = vmul.u32 %v1201, 2146121005
        %v1346 = vmul.u32 %v1202, 2146121005
        %v1347 = vmul.u32 %v1203, 2146121005
        %v1348 = vmul.u32 %v1204, 2146121005
        %v1349 = vmul.u32 %v1205, 2146121005
        %v1350 = vmul.u32 %v1206, 2146121005
        %v1351 = vmul.u32 %v1207, 2146121005
        %v1352 = vmul.u32 %v1208, 2146121005
        %v1353 = vmul.u32 %v1209, 2146121005
        %v1354 = vmul.u32 %v1210, 2146121005
        %v1355 = vmul.u32 %v1211, 2146121005
        %v1356 = vmul.u32 %v1212, 2146121005
        %v1357 = vmul.u32 %v1213, 2146121005
        %v1358 = vmul.u32 %v1214, 2146121005
        %v1359 = vmul.u32 %v1215, 2146121005
        %v1360 = vmul.u32 %v1216, 2146121005
        %v1361 = vmul.u32 %v1217, 2146121005
        %v1362 = vmul.u32 %v1218, 2146121005
        %v1363 = vmul.u32 %v1219, 2146121005
        %v1364 = vmul.u32 %v1220, 2146121005
        %v1365 = vmul.u32 %v1221, 2146121005
        %v1366 = vmul.u32 %v1222, 2146121005
        %v1367 = vmul.u32 %v1223, 2146121005
        %v1368 = vmul.u32 %v1224, 2146121005
        %v1369 = vmul.u32 %v1225, 2146121005
        %v1370 = vmul.u32 %v1226, 2146121005
        %v1371 = vmul.u32 %v1227, 2146121005
        %v1372 = vmul.u32 %v1228, 2146121005
        %v1373 = vmul.u32 %v1229, 2146121005
        %v1374 = vmul.u32 %v1230, 2146121005
        %v1375 = vmul.u32 %v1231, 2146121005
        %v1376 = vmul.u32 %v1232, 2146121005
        %v1377 = vmul.u32 %v1233, 2146121005
        %v1378 = vmul.u32 %v1234, 2146121005
        %v1379 = vmul.u32 %v1235, 2146121005
        %v1380 = vmul.u32 %v1236, 2146121005
        %v1381 = vshrl.u32 %v1237, 15
        %v1382 = vshrl.u32 %v1238, 15
        %v1383 = vshrl.u32 %v1239, 15
        %v1384 = vshrl.u32 %v1240, 15
        %v1385 = vshrl.u32 %v1241, 15
        %v1386 = vshrl.u32 %v1242, 15
        %v1387 = vshrl.u32 %v1243, 15
        %v1388 = vshrl.u32 %v1244, 15
        %v1389 = vshrl.u32 %v1245, 15
        %v1390 = vshrl.u32 %v1246, 15
        %v1391 = vshrl.u32 %v1247, 15
        %v1392 = vshrl.u32 %v1248, 15
        %v1393 = vshrl.u32 %v1249, 15
        %v1394 = vshrl.u32 %v1250, 15
        %v1395 = vshrl.u32 %v1251, 15
        %v1396 = vshrl.u32 %v1252, 15
        %v1397 = vshrl.u32 %v1253, 15
        %v1398 = vshrl.u32 %v1254, 15
        %v1399 = vshrl.u32 %v1255, 15
        %v1400 = vshrl.u32 %v1256, 15
        %v1401 = vshrl.u32 %v1257, 15
        %v1402 = vshrl.u32 %v1258, 15
        %v1403 = vshrl.u32 %v1259, 15
        %v1404 = vshrl.u32 %v1260, 15
        %v1405 = vshrl.u32 %v1261, 15
        %v1406 = vshrl.u32 %v1262, 15
        %v1407 = vshrl.u32 %v1263, 15
        %v1408 = vshrl.u32 %v1264, 15
        %v1409 = vshrl.u32 %v1265, 15
        %v1410 = vshrl.u32 %v1266, 15
        %v1411 = vshrl.u32 %v1267, 15
        %v1412 = vshrl.u32 %v1268, 15
        %v1413 = vshrl.u32 %v1269, 15
        %v1414 = vshrl.u32 %v1270, 15
        %v1415 = vshrl.u32 %v1271, 15
        %v1416 = vshrl.u32 %v1272, 15
        %v1417 = vshrl.u32 %v1273, 15
        %v1418 = vshrl.u32 %v1274, 15
        %v1419 = vshrl.u32 %v1275, 15
        %v1420 = vshrl.u32 %v1276, 15
        %v1421 = vshrl.u32 %v1277, 15
        %v1422 = vshrl.u32 %v1278, 15
        %v1423 = vshrl.u32 %v1279, 15
        %v1424 = vshrl.u32 %v1280, 15
        %v1425 = vshrl.u32 %v1281, 15
        %v1426 = vshrl.u32 %v1282, 15
        %v1427 = vshrl.u32 %v1283, 15
        %v1428 = vshrl.u32 %v1284, 15
        %v1429 = vshrl.u32 %v1285, 15
        %v1430 = vshrl.u32 %v1286, 15
        %v1431 = vshrl.u32 %v1287, 15
        %v1432 = vshrl.u32 %v1288, 15
        %v1433 = vshrl.u32 %v1289, 15
        %v1434 = vshrl.u32 %v1290, 15
        %v1435 = vshrl.u32 %v1291, 15
        %v1436 = vshrl.u32 %v1292, 15
        %v1437 = vshrl.u32 %v1293, 15
        %v1438 = vshrl.u32 %v1294, 15
        %v1439 = vshrl.u32 %v1295, 15
        %v1440 = vshrl.u32 %v1296, 15
        %v1441 = vshrl.u32 %v1297, 15
        %v1442 = vshrl.u32 %v1298, 15
        %v1443 = vshrl.u32 %v1299, 15
        %v1444 = vshrl.u32 %v1300, 15
        %v1445 = vshrl.u32 %v1301, 15
        %v1446 = vshrl.u32 %v1302, 15
        %v1447 = vshrl.u32 %v1303, 15
        %v1448 = vshrl.u32 %v1304, 15
        %v1449 = vshrl.u32 %v1305, 15
        %v1450 = vshrl.u32 %v1306, 15
        %v1451 = vshrl.u32 %v1307, 15
        %v1452 = vshrl.u32 %v1308, 15
        %v1453 = vshrl.u32 %v1309, 15
        %v1454 = vshrl.u32 %v1310, 15
        %v1455 = vshrl.u32 %v1311, 15
        %v1456 = vshrl.u32 %v1312, 15
        %v1457 = vshrl.u32 %v1313, 15
        %v1458 = vshrl.u32 %v1314, 15
        %v1459 = vshrl.u32 %v1315, 15
        %v1460 = vshrl.u32 %v1316, 15
        %v1461 = vshrl.u32 %v1317, 15
        %v1462 = vshrl.u32 %v1318, 15
        %v1463 = vshrl.u32 %v1319, 15
        %v1464 = vshrl.u32 %v1320, 15
        %v1465 = vshrl.u32 %v1321, 15
        %v1466 = vshrl.u32 %v1322, 15
        %v1467 = vshrl.u32 %v1323, 15
        %v1468 = vshrl.u32 %v1324, 15
        %v1469 = vshrl.u32 %v1325, 15
        %v1470 = vshrl.u32 %v1326, 15
        %v1471 = vshrl.u32 %v1327, 15
        %v1472 = vshrl.u32 %v1328, 15
        %v1473 = vshrl.u32 %v1329, 15
        %v1474 = vshrl.u32 %v1330, 15
        %v1475 = vshrl.u32 %v1331, 15
        %v1476 = vshrl.u32 %v1332, 15
        %v1477 = vshrl.u32 %v1333, 15
        %v1478 = vshrl.u32 %v1334, 15
        %v1479 = vshrl.u32 %v1335, 15
        %v1480 = vshrl.u32 %v1336, 15
        %v1481 = vshrl.u32 %v1337, 15
        %v1482 = vshrl.u32 %v1338, 15
        %v1483 = vshrl.u32 %v1339, 15
        %v1484 = vshrl.u32 %v1340, 15
        %v1485 = vshrl.u32 %v1341, 15
        %v1486 = vshrl.u32 %v1342, 15
        %v1487 = vshrl.u32 %v1343, 15
        %v1488 = vshrl.u32 %v1344, 15
        %v1489 = vshrl.u32 %v1345, 15
        %v1490 = vshrl.u32 %v1346, 15
        %v1491 = vshrl.u32 %v1347, 15
        %v1492 = vshrl.u32 %v1348, 15
        %v1493 = vshrl.u32 %v1349, 15
        %v1494 = vshrl.u32 %v1350, 15
        %v1495 = vshrl.u32 %v1351, 15
        %v1496 = vshrl.u32 %v1352, 15
        %v1497 = vshrl.u32 %v1353, 15
        %v1498 = vshrl.u32 %v1354, 15
        %v1499 = vshrl.u32 %v1355, 15
        %v1500 = vshrl.u32 %v1356, 15
        %v1501 = vshrl.u32 %v1357, 15
        %v1502 = vshrl.u32 %v1358, 15
        %v1503 = vshrl.u32 %v1359, 15
        %v1504 = vshrl.u32 %v1360, 15
        %v1505 = vshrl.u32 %v1361, 15
        %v1506 = vshrl.u32 %v1362, 15
        %v1507 = vshrl.u32 %v1363, 15
        %v1508 = vshrl.u32 %v1364, 15
        %v1509 = vshrl.u32 %v1365, 15
        %v1510 = vshrl.u32 %v1366, 15
        %v1511 = vshrl.u32 %v1367, 15
        %v1512 = vshrl.u32 %v1368, 15
        %v1513 = vshrl.u32 %v1369, 15
        %v1514 = vshrl.u32 %v1370, 15
        %v1515 = vshrl.u32 %v1371, 15
        %v1516 = vshrl.u32 %v1372, 15
        %v1517 = vshrl.u32 %v1373, 15
        %v1518 = vshrl.u32 %v1374, 15
        %v1519 = vshrl.u32 %v1375, 15
        %v1520 = vshrl.u32 %v1376, 15
        %v1521 = vshrl.u32 %v1377, 15
        %v1522 = vshrl.u32 %v1378, 15
        %v1523 = vshrl.u32 %v1379, 15
        %v1524 = vshrl.u32 %v1380, 15
        %v1525 = vxor.u32 %v1237, %v1381
        %v1526 = vxor.u32 %v1238, %v1382
        %v1527 = vxor.u32 %v1239, %v1383
        %v1528 = vxor.u32 %v1240, %v1384
        %v1529 = vxor.u32 %v1241, %v1385
        %v1530 = vxor.u32 %v1242, %v1386
        %v1531 = vxor.u32 %v1243, %v1387
        %v1532 = vxor.u32 %v1244, %v1388
        %v1533 = vxor.u32 %v1245, %v1389
        %v1534 = vxor.u32 %v1246, %v1390
        %v1535 = vxor.u32 %v1247, %v1391
        %v1536 = vxor.u32 %v1248, %v1392
        %v1537 = vxor.u32 %v1249, %v1393
        %v1538 = vxor.u32 %v1250, %v1394
        %v1539 = vxor.u32 %v1251, %v1395
        %v1540 = vxor.u32 %v1252, %v1396
        %v1541 = vxor.u32 %v1253, %v1397
        %v1542 = vxor.u32 %v1254, %v1398
        %v1543 = vxor.u32 %v1255, %v1399
        %v1544 = vxor.u32 %v1256, %v1400
        %v1545 = vxor.u32 %v1257, %v1401
        %v1546 = vxor.u32 %v1258, %v1402
        %v1547 = vxor.u32 %v1259, %v1403
        %v1548 = vxor.u32 %v1260, %v1404
        %v1549 = vxor.u32 %v1261, %v1405
        %v1550 = vxor.u32 %v1262, %v1406
        %v1551 = vxor.u32 %v1263, %v1407
        %v1552 = vxor.u32 %v1264, %v1408
        %v1553 = vxor.u32 %v1265, %v1409
        %v1554 = vxor.u32 %v1266, %v1410
        %v1555 = vxor.u32 %v1267, %v1411
        %v1556 = vxor.u32 %v1268, %v1412
        %v1557 = vxor.u32 %v1269, %v1413
        %v1558 = vxor.u32 %v1270, %v1414
        %v1559 = vxor.u32 %v1271, %v1415
        %v1560 = vxor.u32 %v1272, %v1416
        %v1561 = vxor.u32 %v1273, %v1417
        %v1562 = vxor.u32 %v1274, %v1418
        %v1563 = vxor.u32 %v1275, %v1419
        %v1564 = vxor.u32 %v1276, %v1420
        %v1565 = vxor.u32 %v1277, %v1421
        %v1566 = vxor.u32 %v1278, %v1422
        %v1567 = vxor.u32 %v1279, %v1423
        %v1568 = vxor.u32 %v1280, %v1424
        %v1569 = vxor.u32 %v1281, %v1425
        %v1570 = vxor.u32 %v1282, %v1426
        %v1571 = vxor.u32 %v1283, %v1427
        %v1572 = vxor.u32 %v1284, %v1428
        %v1573 = vxor.u32 %v1285, %v1429
        %v1574 = vxor.u32 %v1286, %v1430
        %v1575 = vxor.u32 %v1287, %v1431
        %v1576 = vxor.u32 %v1288, %v1432
        %v1577 = vxor.u32 %v1289, %v1433
        %v1578 = vxor.u32 %v1290, %v1434
        %v1579 = vxor.u32 %v1291, %v1435
        %v1580 = vxor.u32 %v1292, %v1436
        %v1581 = vxor.u32 %v1293, %v1437
        %v1582 = vxor.u32 %v1294, %v1438
        %v1583 = vxor.u32 %v1295, %v1439
        %v1584 = vxor.u32 %v1296, %v1440
        %v1585 = vxor.u32 %v1297, %v1441
        %v1586 = vxor.u32 %v1298, %v1442
        %v1587 = vxor.u32 %v1299, %v1443
        %v1588 = vxor.u32 %v1300, %v1444
        %v1589 = vxor.u32 %v1301, %v1445
        %v1590 = vxor.u32 %v1302, %v1446
        %v1591 = vxor.u32 %v1303, %v1447
        %v1592 = vxor.u32 %v1304, %v1448
        %v1593 = vxor.u32 %v1305, %v1449
        %v1594 = vxor.u32 %v1306, %v1450
        %v1595 = vxor.u32 %v1307, %v1451
        %v1596 = vxor.u32 %v1308, %v1452
        %v1597 = vxor.u32 %v1309, %v1453
        %v1598 = vxor.u32 %v1310, %v1454
        %v1599 = vxor.u32 %v1311, %v1455
        %v1600 = vxor.u32 %v1312, %v1456
        %v1601 = vxor.u32 %v1313, %v1457
        %v1602 = vxor.u32 %v1314, %v1458
        %v1603 = vxor.u32 %v1315, %v1459
        %v1604 = vxor.u32 %v1316, %v1460
        %v1605 = vxor.u32 %v1317, %v1461
        %v1606 = vxor.u32 %v1318, %v1462
        %v1607 = vxor.u32 %v1319, %v1463
        %v1608 = vxor.u32 %v1320, %v1464
        %v1609 = vxor.u32 %v1321, %v1465
        %v1610 = vxor.u32 %v1322, %v1466
        %v1611 = vxor.u32 %v1323, %v1467
        %v1612 = vxor.u32 %v1324, %v1468
        %v1613 = vxor.u32 %v1325, %v1469
        %v1614 = vxor.u32 %v1326, %v1470
        %v1615 = vxor.u32 %v1327, %v1471
        %v1616 = vxor.u32 %v1328, %v1472
        %v1617 = vxor.u32 %v1329, %v1473
        %v1618 = vxor.u32 %v1330, %v1474
        %v1619 = vxor.u32 %v1331, %v1475
        %v1620 = vxor.u32 %v1332, %v1476
        %v1621 = vxor.u32 %v1333, %v1477
        %v1622 = vxor.u32 %v1334, %v1478
        %v1623 = vxor.u32 %v1335, %v1479
        %v1624 = vxor.u32 %v1336, %v1480
        %v1625 = vxor.u32 %v1337, %v1481
        %v1626 = vxor.u32 %v1338, %v1482
        %v1627 = vxor.u32 %v1339, %v1483
        %v1628 = vxor.u32 %v1340, %v1484
        %v1629 = vxor.u32 %v1341, %v1485
        %v1630 = vxor.u32 %v1342, %v1486
        %v1631 = vxor.u32 %v1343, %v1487
        %v1632 = vxor.u32 %v1344, %v1488
        %v1633 = vxor.u32 %v1345, %v1489
        %v1634 = vxor.u32 %v1346, %v1490
        %v1635 = vxor.u32 %v1347, %v1491
        %v1636 = vxor.u32 %v1348, %v1492
        %v1637 = vxor.u32 %v1349, %v1493
        %v1638 = vxor.u32 %v1350, %v1494
        %v1639 = vxor.u32 %v1351, %v1495
        %v1640 = vxor.u32 %v1352, %v1496
        %v1641 = vxor.u32 %v1353, %v1497
        %v1642 = vxor.u32 %v1354, %v1498
        %v1643 = vxor.u32 %v1355, %v1499
        %v1644 = vxor.u32 %v1356, %v1500
        %v1645 = vxor.u32 %v1357, %v1501
        %v1646 = vxor.u32 %v1358, %v1502
        %v1647 = vxor.u32 %v1359, %v1503
        %v1648 = vxor.u32 %v1360, %v1504
        %v1649 = vxor.u32 %v1361, %v1505
        %v1650 = vxor.u32 %v1362, %v1506
        %v1651 = vxor.u32 %v1363, %v1507
        %v1652 = vxor.u32 %v1364, %v1508
        %v1653 = vxor.u32 %v1365, %v1509
        %v1654 = vxor.u32 %v1366, %v1510
        %v1655 = vxor.u32 %v1367, %v1511
        %v1656 = vxor.u32 %v1368, %v1512
        %v1657 = vxor.u32 %v1369, %v1513
        %v1658 = vxor.u32 %v1370, %v1514
        %v1659 = vxor.u32 %v1371, %v1515
        %v1660 = vxor.u32 %v1372, %v1516
        %v1661 = vxor.u32 %v1373, %v1517
        %v1662 = vxor.u32 %v1374, %v1518
        %v1663 = vxor.u32 %v1375, %v1519
        %v1664 = vxor.u32 %v1376, %v1520
        %v1665 = vxor.u32 %v1377, %v1521
        %v1666 = vxor.u32 %v1378, %v1522
        %v1667 = vxor.u32 %v1379, %v1523
        %v1668 = vxor.u32 %v1380, %v1524
        %v1669 = vmul.u32 %v1525, 2221713035
        %v1670 = vmul.u32 %v1526, 2221713035
        %v1671 = vmul.u32 %v1527, 2221713035
        %v1672 = vmul.u32 %v1528, 2221713035
        %v1673 = vmul.u32 %v1529, 2221713035
        %v1674 = vmul.u32 %v1530, 2221713035
        %v1675 = vmul.u32 %v1531, 2221713035
        %v1676 = vmul.u32 %v1532, 2221713035
        %v1677 = vmul.u32 %v1533, 2221713035
        %v1678 = vmul.u32 %v1534, 2221713035
        %v1679 = vmul.u32 %v1535, 2221713035
        %v1680 = vmul.u32 %v1536, 2221713035
        %v1681 = vmul.u32 %v1537, 2221713035
        %v1682 = vmul.u32 %v1538, 2221713035
        %v1683 = vmul.u32 %v1539, 2221713035
        %v1684 = vmul.u32 %v1540, 2221713035
        %v1685 = vmul.u32 %v1541, 2221713035
        %v1686 = vmul.u32 %v1542, 2221713035
        %v1687 = vmul.u32 %v1543, 2221713035
        %v1688 = vmul.u32 %v1544, 2221713035
        %v1689 = vmul.u32 %v1545, 2221713035
        %v1690 = vmul.u32 %v1546, 2221713035
        %v1691 = vmul.u32 %v1547, 2221713035
        %v1692 = vmul.u32 %v1548, 2221713035
        %v1693 = vmul.u32 %v1549, 2221713035
        %v1694 = vmul.u32 %v1550, 2221713035
        %v1695 = vmul.u32 %v1551, 2221713035
        %v1696 = vmul.u32 %v1552, 2221713035
        %v1697 = vmul.u32 %v1553, 2221713035
        %v1698 = vmul.u32 %v1554, 2221713035
        %v1699 = vmul.u32 %v1555, 2221713035
        %v1700 = vmul.u32 %v1556, 2221713035
        %v1701 = vmul.u32 %v1557, 2221713035
        %v1702 = vmul.u32 %v1558, 2221713035
        %v1703 = vmul.u32 %v1559, 2221713035
        %v1704 = vmul.u32 %v1560, 2221713035
        %v1705 = vmul.u32 %v1561, 2221713035
        %v1706 = vmul.u32 %v1562, 2221713035
        %v1707 = vmul.u32 %v1563, 2221713035
        %v1708 = vmul.u32 %v1564, 2221713035
        %v1709 = vmul.u32 %v1565, 2221713035
        %v1710 = vmul.u32 %v1566, 2221713035
        %v1711 = vmul.u32 %v1567, 2221713035
        %v1712 = vmul.u32 %v1568, 2221713035
        %v1713 = vmul.u32 %v1569, 2221713035
        %v1714 = vmul.u32 %v1570, 2221713035
        %v1715 = vmul.u32 %v1571, 2221713035
        %v1716 = vmul.u32 %v1572, 2221713035
        %v1717 = vmul.u32 %v1573, 2221713035
        %v1718 = vmul.u32 %v1574, 2221713035
        %v1719 = vmul.u32 %v1575, 2221713035
        %v1720 = vmul.u32 %v1576, 2221713035
        %v1721 = vmul.u32 %v1577, 2221713035
        %v1722 = vmul.u32 %v1578, 2221713035
        %v1723 = vmul.u32 %v1579, 2221713035
        %v1724 = vmul.u32 %v1580, 2221713035
        %v1725 = vmul.u32 %v1581, 2221713035
        %v1726 = vmul.u32 %v1582, 2221713035
        %v1727 = vmul.u32 %v1583, 2221713035
        %v1728 = vmul.u32 %v1584, 2221713035
        %v1729 = vmul.u32 %v1585, 2221713035
        %v1730 = vmul.u32 %v1586, 2221713035
        %v1731 = vmul.u32 %v1587, 2221713035
        %v1732 = vmul.u32 %v1588, 2221713035
        %v1733 = vmul.u32 %v1589, 2221713035
        %v1734 = vmul.u32 %v1590, 2221713035
        %v1735 = vmul.u32 %v1591, 2221713035
        %v1736 = vmul.u32 %v1592, 2221713035
        %v1737 = vmul.u32 %v1593, 2221713035
        %v1738 = vmul.u32 %v1594, 2221713035
        %v1739 = vmul.u32 %v1595, 2221713035
        %v1740 = vmul.u32 %v1596, 2221713035
        %v1741 = vmul.u32 %v1597, 2221713035
        %v1742 = vmul.u32 %v1598, 2221713035
        %v1743 = vmul.u32 %v1599, 2221713035
        %v1744 = vmul.u32 %v1600, 2221713035
        %v1745 = vmul.u32 %v1601, 2221713035
        %v1746 = vmul.u32 %v1602, 2221713035
        %v1747 = vmul.u32 %v1603, 2221713035
        %v1748 = vmul.u32 %v1604, 2221713035
        %v1749 = vmul.u32 %v1605, 2221713035
        %v1750 = vmul.u32 %v1606, 2221713035
        %v1751 = vmul.u32 %v1607, 2221713035
        %v1752 = vmul.u32 %v1608, 2221713035
        %v1753 = vmul.u32 %v1609, 2221713035
        %v1754 = vmul.u32 %v1610, 2221713035
        %v1755 = vmul.u32 %v1611, 2221713035
        %v1756 = vmul.u32 %v1612, 2221713035
        %v1757 = vmul.u32 %v1613, 2221713035
        %v1758 = vmul.u32 %v1614, 2221713035
        %v1759 = vmul.u32 %v1615, 2221713035
        %v1760 = vmul.u32 %v1616, 2221713035
        %v1761 = vmul.u32 %v1617, 2221713035
        %v1762 = vmul.u32 %v1618, 2221713035
        %v1763 = vmul.u32 %v1619, 2221713035
        %v1764 = vmul.u32 %v1620, 2221713035
        %v1765 = vmul.u32 %v1621, 2221713035
        %v1766 = vmul.u32 %v1622, 2221713035
        %v1767 = vmul.u32 %v1623, 2221713035
        %v1768 = vmul.u32 %v1624, 2221713035
        %v1769 = vmul.u32 %v1625, 2221713035
        %v1770 = vmul.u32 %v1626, 2221713035
        %v1771 = vmul.u32 %v1627, 2221713035
        %v1772 = vmul.u32 %v1628, 2221713035
        %v1773 = vmul.u32 %v1629, 2221713035
        %v1774 = vmul.u32 %v1630, 2221713035
        %v1775 = vmul.u32 %v1631, 2221713035
        %v1776 = vmul.u32 %v1632, 2221713035
        %v1777 = vmul.u32 %v1633, 2221713035
        %v1778 = vmul.u32 %v1634, 2221713035
        %v1779 = vmul.u32 %v1635, 2221713035
        %v1780 = vmul.u32 %v1636, 2221713035
        %v1781 = vmul.u32 %v1637, 2221713035
        %v1782 = vmul.u32 %v1638, 2221713035
        %v1783 = vmul.u32 %v1639, 2221713035
        %v1784 = vmul.u32 %v1640, 2221713035
        %v1785 = vmul.u32 %v1641, 2221713035
        %v1786 = vmul.u32 %v1642, 2221713035
        %v1787 = vmul.u32 %v1643, 2221713035
        %v1788 = vmul.u32 %v1644, 2221713035
        %v1789 = vmul.u32 %v1645, 2221713035
        %v1790 = vmul.u32 %v1646, 2221713035
        %v1791 = vmul.u32 %v1647, 2221713035
        %v1792 = vmul.u32 %v1648, 2221713035
        %v1793 = vmul.u32 %v1649, 2221713035
        %v1794 = vmul.u32 %v1650, 2221713035
        %v1795 = vmul.u32 %v1651, 2221713035
        %v1796 = vmul.u32 %v1652, 2221713035
        %v1797 = vmul.u32 %v1653, 2221713035
        %v1798 = vmul.u32 %v1654, 2221713035
        %v1799 = vmul.u32 %v1655, 2221713035
        %v1800 = vmul.u32 %v1656, 2221713035
        %v1801 = vmul.u32 %v1657, 2221713035
        %v1802 = vmul.u32 %v1658, 2221713035
        %v1803 = vmul.u32 %v1659, 2221713035
        %v1804 = vmul.u32 %v1660, 2221713035
        %v1805 = vmul.u32 %v1661, 2221713035
        %v1806 = vmul.u32 %v1662, 2221713035
        %v1807 = vmul.u32 %v1663, 2221713035
        %v1808 = vmul.u32 %v1664, 2221713035
        %v1809 = vmul.u32 %v1665, 2221713035
        %v1810 = vmul.u32 %v1666, 2221713035
        %v1811 = vmul.u32 %v1667, 2221713035
        %v1812 = vmul.u32 %v1668, 2221713035
        %v1813 = vshrl.u32 %v1669, 16
        %v1814 = vshrl.u32 %v1670, 16
        %v1815 = vshrl.u32 %v1671, 16
        %v1816 = vshrl.u32 %v1672, 16
        %v1817 = vshrl.u32 %v1673, 16
        %v1818 = vshrl.u32 %v1674, 16
        %v1819 = vshrl.u32 %v1675, 16
        %v1820 = vshrl.u32 %v1676, 16
        %v1821 = vshrl.u32 %v1677, 16
        %v1822 = vshrl.u32 %v1678, 16
        %v1823 = vshrl.u32 %v1679, 16
        %v1824 = vshrl.u32 %v1680, 16
        %v1825 = vshrl.u32 %v1681, 16
        %v1826 = vshrl.u32 %v1682, 16
        %v1827 = vshrl.u32 %v1683, 16
        %v1828 = vshrl.u32 %v1684, 16
        %v1829 = vshrl.u32 %v1685, 16
        %v1830 = vshrl.u32 %v1686, 16
        %v1831 = vshrl.u32 %v1687, 16
        %v1832 = vshrl.u32 %v1688, 16
        %v1833 = vshrl.u32 %v1689, 16
        %v1834 = vshrl.u32 %v1690, 16
        %v1835 = vshrl.u32 %v1691, 16
        %v1836 = vshrl.u32 %v1692, 16
        %v1837 = vshrl.u32 %v1693, 16
        %v1838 = vshrl.u32 %v1694, 16
        %v1839 = vshrl.u32 %v1695, 16
        %v1840 = vshrl.u32 %v1696, 16
        %v1841 = vshrl.u32 %v1697, 16
        %v1842 = vshrl.u32 %v1698, 16
        %v1843 = vshrl.u32 %v1699, 16
        %v1844 = vshrl.u32 %v1700, 16
        %v1845 = vshrl.u32 %v1701, 16
        %v1846 = vshrl.u32 %v1702, 16
        %v1847 = vshrl.u32 %v1703, 16
        %v1848 = vshrl.u32 %v1704, 16
        %v1849 = vshrl.u32 %v1705, 16
        %v1850 = vshrl.u32 %v1706, 16
        %v1851 = vshrl.u32 %v1707, 16
        %v1852 = vshrl.u32 %v1708, 16
        %v1853 = vshrl.u32 %v1709, 16
        %v1854 = vshrl.u32 %v1710, 16
        %v1855 = vshrl.u32 %v1711, 16
        %v1856 = vshrl.u32 %v1712, 16
        %v1857 = vshrl.u32 %v1713, 16
        %v1858 = vshrl.u32 %v1714, 16
        %v1859 = vshrl.u32 %v1715, 16
        %v1860 = vshrl.u32 %v1716, 16
        %v1861 = vshrl.u32 %v1717, 16
        %v1862 = vshrl.u32 %v1718, 16
        %v1863 = vshrl.u32 %v1719, 16
        %v1864 = vshrl.u32 %v1720, 16
        %v1865 = vshrl.u32 %v1721, 16
        %v1866 = vshrl.u32 %v1722, 16
        %v1867 = vshrl.u32 %v1723, 16
        %v1868 = vshrl.u32 %v1724, 16
        %v1869 = vshrl.u32 %v1725, 16
        %v1870 = vshrl.u32 %v1726, 16
        %v1871 = vshrl.u32 %v1727, 16
        %v1872 = vshrl.u32 %v1728, 16
        %v1873 = vshrl.u32 %v1729, 16
        %v1874 = vshrl.u32 %v1730, 16
        %v1875 = vshrl.u32 %v1731, 16
        %v1876 = vshrl.u32 %v1732, 16
        %v1877 = vshrl.u32 %v1733, 16
        %v1878 = vshrl.u32 %v1734, 16
        %v1879 = vshrl.u32 %v1735, 16
        %v1880 = vshrl.u32 %v1736, 16
        %v1881 = vshrl.u32 %v1737, 16
        %v1882 = vshrl.u32 %v1738, 16
        %v1883 = vshrl.u32 %v1739, 16
        %v1884 = vshrl.u32 %v1740, 16
        %v1885 = vshrl.u32 %v1741, 16
        %v1886 = vshrl.u32 %v1742, 16
        %v1887 = vshrl.u32 %v1743, 16
        %v1888 = vshrl.u32 %v1744, 16
        %v1889 = vshrl.u32 %v1745, 16
        %v1890 = vshrl.u32 %v1746, 16
        %v1891 = vshrl.u32 %v1747, 16
        %v1892 = vshrl.u32 %v1748, 16
        %v1893 = vshrl.u32 %v1749, 16
        %v1894 = vshrl.u32 %v1750, 16
        %v1895 = vshrl.u32 %v1751, 16
        %v1896 = vshrl.u32 %v1752, 16
        %v1897 = vshrl.u32 %v1753, 16
        %v1898 = vshrl.u32 %v1754, 16
        %v1899 = vshrl.u32 %v1755, 16
        %v1900 = vshrl.u32 %v1756, 16
        %v1901 = vshrl.u32 %v1757, 16
        %v1902 = vshrl.u32 %v1758, 16
        %v1903 = vshrl.u32 %v1759, 16
        %v1904 = vshrl.u32 %v1760, 16
        %v1905 = vshrl.u32 %v1761, 16
        %v1906 = vshrl.u32 %v1762, 16
        %v1907 = vshrl.u32 %v1763, 16
        %v1908 = vshrl.u32 %v1764, 16
        %v1909 = vshrl.u32 %v1765, 16
        %v1910 = vshrl.u32 %v1766, 16
        %v1911 = vshrl.u32 %v1767, 16
        %v1912 = vshrl.u32 %v1768, 16
        %v1913 = vshrl.u32 %v1769, 16
        %v1914 = vshrl.u32 %v1770, 16
        %v1915 = vshrl.u32 %v1771, 16
        %v1916 = vshrl.u32 %v1772, 16
        %v1917 = vshrl.u32 %v1773, 16
        %v1918 = vshrl.u32 %v1774, 16
        %v1919 = vshrl.u32 %v1775, 16
        %v1920 = vshrl.u32 %v1776, 16
        %v1921 = vshrl.u32 %v1777, 16
        %v1922 = vshrl.u32 %v1778, 16
        %v1923 = vshrl.u32 %v1779, 16
        %v1924 = vshrl.u32 %v1780, 16
        %v1925 = vshrl.u32 %v1781, 16
        %v1926 = vshrl.u32 %v1782, 16
        %v1927 = vshrl.u32 %v1783, 16
        %v1928 = vshrl.u32 %v1784, 16
        %v1929 = vshrl.u32 %v1785, 16
        %v1930 = vshrl.u32 %v1786, 16
        %v1931 = vshrl.u32 %v1787, 16
        %v1932 = vshrl.u32 %v1788, 16
        %v1933 = vshrl.u32 %v1789, 16
        %v1934 = vshrl.u32 %v1790, 16
        %v1935 = vshrl.u32 %v1791, 16
        %v1936 = vshrl.u32 %v1792, 16
        %v1937 = vshrl.u32 %v1793, 16
        %v1938 = vshrl.u32 %v1794, 16
        %v1939 = vshrl.u32 %v1795, 16
        %v1940 = vshrl.u32 %v1796, 16
        %v1941 = vshrl.u32 %v1797, 16
        %v1942 = vshrl.u32 %v1798, 16
        %v1943 = vshrl.u32 %v1799, 16
        %v1944 = vshrl.u32 %v1800, 16
        %v1945 = vshrl.u32 %v1801, 16
        %v1946 = vshrl.u32 %v1802, 16
        %v1947 = vshrl.u32 %v1803, 16
        %v1948 = vshrl.u32 %v1804, 16
        %v1949 = vshrl.u32 %v1805, 16
        %v1950 = vshrl.u32 %v1806, 16
        %v1951 = vshrl.u32 %v1807, 16
        %v1952 = vshrl.u32 %v1808, 16
        %v1953 = vshrl.u32 %v1809, 16
        %v1954 = vshrl.u32 %v1810, 16
        %v1955 = vshrl.u32 %v1811, 16
        %v1956 = vshrl.u32 %v1812, 16
        %v1957 = vxor.u32 %v1669, %v1813
        %v1958 = vxor.u32 %v1670, %v1814
        %v1959 = vxor.u32 %v1671, %v1815
        %v1960 = vxor.u32 %v1672, %v1816
        %v1961 = vxor.u32 %v1673, %v1817
        %v1962 = vxor.u32 %v1674, %v1818
        %v1963 = vxor.u32 %v1675, %v1819
        %v1964 = vxor.u32 %v1676, %v1820
        %v1965 = vxor.u32 %v1677, %v1821
        %v1966 = vxor.u32 %v1678, %v1822
        %v1967 = vxor.u32 %v1679, %v1823
        %v1968 = vxor.u32 %v1680, %v1824
        %v1969 = vxor.u32 %v1681, %v1825
        %v1970 = vxor.u32 %v1682, %v1826
        %v1971 = vxor.u32 %v1683, %v1827
        %v1972 = vxor.u32 %v1684, %v1828
        %v1973 = vxor.u32 %v1685, %v1829
        %v1974 = vxor.u32 %v1686, %v1830
        %v1975 = vxor.u32 %v1687, %v1831
        %v1976 = vxor.u32 %v1688, %v1832
        %v1977 = vxor.u32 %v1689, %v1833
        %v1978 = vxor.u32 %v1690, %v1834
        %v1979 = vxor.u32 %v1691, %v1835
        %v1980 = vxor.u32 %v1692, %v1836
        %v1981 = vxor.u32 %v1693, %v1837
        %v1982 = vxor.u32 %v1694, %v1838
        %v1983 = vxor.u32 %v1695, %v1839
        %v1984 = vxor.u32 %v1696, %v1840
        %v1985 = vxor.u32 %v1697, %v1841
        %v1986 = vxor.u32 %v1698, %v1842
        %v1987 = vxor.u32 %v1699, %v1843
        %v1988 = vxor.u32 %v1700, %v1844
        %v1989 = vxor.u32 %v1701, %v1845
        %v1990 = vxor.u32 %v1702, %v1846
        %v1991 = vxor.u32 %v1703, %v1847
        %v1992 = vxor.u32 %v1704, %v1848
        %v1993 = vxor.u32 %v1705, %v1849
        %v1994 = vxor.u32 %v1706, %v1850
        %v1995 = vxor.u32 %v1707, %v1851
        %v1996 = vxor.u32 %v1708, %v1852
        %v1997 = vxor.u32 %v1709, %v1853
        %v1998 = vxor.u32 %v1710, %v1854
        %v1999 = vxor.u32 %v1711, %v1855
        %v2000 = vxor.u32 %v1712, %v1856
        %v2001 = vxor.u32 %v1713, %v1857
        %v2002 = vxor.u32 %v1714, %v1858
        %v2003 = vxor.u32 %v1715, %v1859
        %v2004 = vxor.u32 %v1716, %v1860
        %v2005 = vxor.u32 %v1717, %v1861
        %v2006 = vxor.u32 %v1718, %v1862
        %v2007 = vxor.u32 %v1719, %v1863
        %v2008 = vxor.u32 %v1720, %v1864
        %v2009 = vxor.u32 %v1721, %v1865
        %v2010 = vxor.u32 %v1722, %v1866
        %v2011 = vxor.u32 %v1723, %v1867
        %v2012 = vxor.u32 %v1724, %v1868
        %v2013 = vxor.u32 %v1725, %v1869
        %v2014 = vxor.u32 %v1726, %v1870
        %v2015 = vxor.u32 %v1727, %v1871
        %v2016 = vxor.u32 %v1728, %v1872
        %v2017 = vxor.u32 %v1729, %v1873
        %v2018 = vxor.u32 %v1730, %v1874
        %v2019 = vxor.u32 %v1731, %v1875
        %v2020 = vxor.u32 %v1732, %v1876
        %v2021 = vxor.u32 %v1733, %v1877
        %v2022 = vxor.u32 %v1734, %v1878
        %v2023 = vxor.u32 %v1735, %v1879
        %v2024 = vxor.u32 %v1736, %v1880
        %v2025 = vxor.u32 %v1737, %v1881
        %v2026 = vxor.u32 %v1738, %v1882
        %v2027 = vxor.u32 %v1739, %v1883
        %v2028 = vxor.u32 %v1740, %v1884
        %v2029 = vxor.u32 %v1741, %v1885
        %v2030 = vxor.u32 %v1742, %v1886
        %v2031 = vxor.u32 %v1743, %v1887
        %v2032 = vxor.u32 %v1744, %v1888
        %v2033 = vxor.u32 %v1745, %v1889
        %v2034 = vxor.u32 %v1746, %v1890
        %v2035 = vxor.u32 %v1747, %v1891
        %v2036 = vxor.u32 %v1748, %v1892
        %v2037 = vxor.u32 %v1749, %v1893
        %v2038 = vxor.u32 %v1750, %v1894
        %v2039 = vxor.u32 %v1751, %v1895
        %v2040 = vxor.u32 %v1752, %v1896
        %v2041 = vxor.u32 %v1753, %v1897
        %v2042 = vxor.u32 %v1754, %v1898
        %v2043 = vxor.u32 %v1755, %v1899
        %v2044 = vxor.u32 %v1756, %v1900
        %v2045 = vxor.u32 %v1757, %v1901
        %v2046 = vxor.u32 %v1758, %v1902
        %v2047 = vxor.u32 %v1759, %v1903
        %v2048 = vxor.u32 %v1760, %v1904
        %v2049 = vxor.u32 %v1761, %v1905
        %v2050 = vxor.u32 %v1762, %v1906
        %v2051 = vxor.u32 %v1763, %v1907
        %v2052 = vxor.u32 %v1764, %v1908
        %v2053 = vxor.u32 %v1765, %v1909
        %v2054 = vxor.u32 %v1766, %v1910
        %v2055 = vxor.u32 %v1767, %v1911
        %v2056 = vxor.u32 %v1768, %v1912
        %v2057 = vxor.u32 %v1769, %v1913
        %v2058 = vxor.u32 %v1770, %v1914
        %v2059 = vxor.u32 %v1771, %v1915
        %v2060 = vxor.u32 %v1772, %v1916
        %v2061 = vxor.u32 %v1773, %v1917
        %v2062 = vxor.u32 %v1774, %v1918
        %v2063 = vxor.u32 %v1775, %v1919
        %v2064 = vxor.u32 %v1776, %v1920
        %v2065 = vxor.u32 %v1777, %v1921
        %v2066 = vxor.u32 %v1778, %v1922
        %v2067 = vxor.u32 %v1779, %v1923
        %v2068 = vxor.u32 %v1780, %v1924
        %v2069 = vxor.u32 %v1781, %v1925
        %v2070 = vxor.u32 %v1782, %v1926
        %v2071 = vxor.u32 %v1783, %v1927
        %v2072 = vxor.u32 %v1784, %v1928
        %v2073 = vxor.u32 %v1785, %v1929
        %v2074 = vxor.u32 %v1786, %v1930
        %v2075 = vxor.u32 %v1787, %v1931
        %v2076 = vxor.u32 %v1788, %v1932
        %v2077 = vxor.u32 %v1789, %v1933
        %v2078 = vxor.u32 %v1790, %v1934
        %v2079 = vxor.u32 %v1791, %v1935
        %v2080 = vxor.u32 %v1792, %v1936
        %v2081 = vxor.u32 %v1793, %v1937
        %v2082 = vxor.u32 %v1794, %v1938
        %v2083 = vxor.u32 %v1795, %v1939
        %v2084 = vxor.u32 %v1796, %v1940
        %v2085 = vxor.u32 %v1797, %v1941
        %v2086 = vxor.u32 %v1798, %v1942
        %v2087 = vxor.u32 %v1799, %v1943
        %v2088 = vxor.u32 %v1800, %v1944
        %v2089 = vxor.u32 %v1801, %v1945
        %v2090 = vxor.u32 %v1802, %v1946
        %v2091 = vxor.u32 %v1803, %v1947
        %v2092 = vxor.u32 %v1804, %v1948
        %v2093 = vxor.u32 %v1805, %v1949
        %v2094 = vxor.u32 %v1806, %v1950
        %v2095 = vxor.u32 %v1807, %v1951
        %v2096 = vxor.u32 %v1808, %v1952
        %v2097 = vxor.u32 %v1809, %v1953
        %v2098 = vxor.u32 %v1810, %v1954
        %v2099 = vxor.u32 %v1811, %v1955
        %v2100 = vxor.u32 %v1812, %v1956
        %vm2101 = vcmp.ge.u32.totalorder %v1957, 429496730
        %vm2102 = vcmp.ge.u32.totalorder %v1958, 429496730
        %vm2103 = vcmp.ge.u32.totalorder %v1959, 429496730
        %vm2104 = vcmp.ge.u32.totalorder %v1960, 429496730
        %vm2105 = vcmp.ge.u32.totalorder %v1961, 429496730
        %vm2106 = vcmp.ge.u32.totalorder %v1962, 429496730
        %vm2107 = vcmp.ge.u32.totalorder %v1963, 429496730
        %vm2108 = vcmp.ge.u32.totalorder %v1964, 429496730
        %vm2109 = vcmp.ge.u32.totalorder %v1965, 429496730
        %vm2110 = vcmp.ge.u32.totalorder %v1966, 429496730
        %vm2111 = vcmp.ge.u32.totalorder %v1967, 429496730
        %vm2112 = vcmp.ge.u32.totalorder %v1968, 429496730
        %vm2113 = vcmp.ge.u32.totalorder %v1969, 429496730
        %vm2114 = vcmp.ge.u32.totalorder %v1970, 429496730
        %vm2115 = vcmp.ge.u32.totalorder %v1971, 429496730
        %vm2116 = vcmp.ge.u32.totalorder %v1972, 429496730
        %vm2117 = vcmp.ge.u32.totalorder %v1973, 429496730
        %vm2118 = vcmp.ge.u32.totalorder %v1974, 429496730
        %vm2119 = vcmp.ge.u32.totalorder %v1975, 429496730
        %vm2120 = vcmp.ge.u32.totalorder %v1976, 429496730
        %vm2121 = vcmp.ge.u32.totalorder %v1977, 429496730
        %vm2122 = vcmp.ge.u32.totalorder %v1978, 429496730
        %vm2123 = vcmp.ge.u32.totalorder %v1979, 429496730
        %vm2124 = vcmp.ge.u32.totalorder %v1980, 429496730
        %vm2125 = vcmp.ge.u32.totalorder %v1981, 429496730
        %vm2126 = vcmp.ge.u32.totalorder %v1982, 429496730
        %vm2127 = vcmp.ge.u32.totalorder %v1983, 429496730
        %vm2128 = vcmp.ge.u32.totalorder %v1984, 429496730
        %vm2129 = vcmp.ge.u32.totalorder %v1985, 429496730
        %vm2130 = vcmp.ge.u32.totalorder %v1986, 429496730
        %vm2131 = vcmp.ge.u32.totalorder %v1987, 429496730
        %vm2132 = vcmp.ge.u32.totalorder %v1988, 429496730
        %vm2133 = vcmp.ge.u32.totalorder %v1989, 429496730
        %vm2134 = vcmp.ge.u32.totalorder %v1990, 429496730
        %vm2135 = vcmp.ge.u32.totalorder %v1991, 429496730
        %vm2136 = vcmp.ge.u32.totalorder %v1992, 429496730
        %vm2137 = vcmp.ge.u32.totalorder %v1993, 429496730
        %vm2138 = vcmp.ge.u32.totalorder %v1994, 429496730
        %vm2139 = vcmp.ge.u32.totalorder %v1995, 429496730
        %vm2140 = vcmp.ge.u32.totalorder %v1996, 429496730
        %vm2141 = vcmp.ge.u32.totalorder %v1997, 429496730
        %vm2142 = vcmp.ge.u32.totalorder %v1998, 429496730
        %vm2143 = vcmp.ge.u32.totalorder %v1999, 429496730
        %vm2144 = vcmp.ge.u32.totalorder %v2000, 429496730
        %vm2145 = vcmp.ge.u32.totalorder %v2001, 429496730
        %vm2146 = vcmp.ge.u32.totalorder %v2002, 429496730
        %vm2147 = vcmp.ge.u32.totalorder %v2003, 429496730
        %vm2148 = vcmp.ge.u32.totalorder %v2004, 429496730
        %vm2149 = vcmp.ge.u32.totalorder %v2005, 429496730
        %vm2150 = vcmp.ge.u32.totalorder %v2006, 429496730
        %vm2151 = vcmp.ge.u32.totalorder %v2007, 429496730
        %vm2152 = vcmp.ge.u32.totalorder %v2008, 429496730
        %vm2153 = vcmp.ge.u32.totalorder %v2009, 429496730
        %vm2154 = vcmp.ge.u32.totalorder %v2010, 429496730
        %vm2155 = vcmp.ge.u32.totalorder %v2011, 429496730
        %vm2156 = vcmp.ge.u32.totalorder %v2012, 429496730
        %vm2157 = vcmp.ge.u32.totalorder %v2013, 429496730
        %vm2158 = vcmp.ge.u32.totalorder %v2014, 429496730
        %vm2159 = vcmp.ge.u32.totalorder %v2015, 429496730
        %vm2160 = vcmp.ge.u32.totalorder %v2016, 429496730
        %vm2161 = vcmp.ge.u32.totalorder %v2017, 429496730
        %vm2162 = vcmp.ge.u32.totalorder %v2018, 429496730
        %vm2163 = vcmp.ge.u32.totalorder %v2019, 429496730
        %vm2164 = vcmp.ge.u32.totalorder %v2020, 429496730
        %vm2165 = vcmp.ge.u32.totalorder %v2021, 429496730
        %vm2166 = vcmp.ge.u32.totalorder %v2022, 429496730
        %vm2167 = vcmp.ge.u32.totalorder %v2023, 429496730
        %vm2168 = vcmp.ge.u32.totalorder %v2024, 429496730
        %vm2169 = vcmp.ge.u32.totalorder %v2025, 429496730
        %vm2170 = vcmp.ge.u32.totalorder %v2026, 429496730
        %vm2171 = vcmp.ge.u32.totalorder %v2027, 429496730
        %vm2172 = vcmp.ge.u32.totalorder %v2028, 429496730
        %vm2173 = vcmp.ge.u32.totalorder %v2029, 429496730
        %vm2174 = vcmp.ge.u32.totalorder %v2030, 429496730
        %vm2175 = vcmp.ge.u32.totalorder %v2031, 429496730
        %vm2176 = vcmp.ge.u32.totalorder %v2032, 429496730
        %vm2177 = vcmp.ge.u32.totalorder %v2033, 429496730
        %vm2178 = vcmp.ge.u32.totalorder %v2034, 429496730
        %vm2179 = vcmp.ge.u32.totalorder %v2035, 429496730
        %vm2180 = vcmp.ge.u32.totalorder %v2036, 429496730
        %vm2181 = vcmp.ge.u32.totalorder %v2037, 429496730
        %vm2182 = vcmp.ge.u32.totalorder %v2038, 429496730
        %vm2183 = vcmp.ge.u32.totalorder %v2039, 429496730
        %vm2184 = vcmp.ge.u32.totalorder %v2040, 429496730
        %vm2185 = vcmp.ge.u32.totalorder %v2041, 429496730
        %vm2186 = vcmp.ge.u32.totalorder %v2042, 429496730
        %vm2187 = vcmp.ge.u32.totalorder %v2043, 429496730
        %vm2188 = vcmp.ge.u32.totalorder %v2044, 429496730
        %vm2189 = vcmp.ge.u32.totalorder %v2045, 429496730
        %vm2190 = vcmp.ge.u32.totalorder %v2046, 429496730
        %vm2191 = vcmp.ge.u32.totalorder %v2047, 429496730
        %vm2192 = vcmp.ge.u32.totalorder %v2048, 429496730
        %vm2193 = vcmp.ge.u32.totalorder %v2049, 429496730
        %vm2194 = vcmp.ge.u32.totalorder %v2050, 429496730
        %vm2195 = vcmp.ge.u32.totalorder %v2051, 429496730
        %vm2196 = vcmp.ge.u32.totalorder %v2052, 429496730
        %vm2197 = vcmp.ge.u32.totalorder %v2053, 429496730
        %vm2198 = vcmp.ge.u32.totalorder %v2054, 429496730
        %vm2199 = vcmp.ge.u32.totalorder %v2055, 429496730
        %vm2200 = vcmp.ge.u32.totalorder %v2056, 429496730
        %vm2201 = vcmp.ge.u32.totalorder %v2057, 429496730
        %vm2202 = vcmp.ge.u32.totalorder %v2058, 429496730
        %vm2203 = vcmp.ge.u32.totalorder %v2059, 429496730
        %vm2204 = vcmp.ge.u32.totalorder %v2060, 429496730
        %vm2205 = vcmp.ge.u32.totalorder %v2061, 429496730
        %vm2206 = vcmp.ge.u32.totalorder %v2062, 429496730
        %vm2207 = vcmp.ge.u32.totalorder %v2063, 429496730
        %vm2208 = vcmp.ge.u32.totalorder %v2064, 429496730
        %vm2209 = vcmp.ge.u32.totalorder %v2065, 429496730
        %vm2210 = vcmp.ge.u32.totalorder %v2066, 429496730
        %vm2211 = vcmp.ge.u32.totalorder %v2067, 429496730
        %vm2212 = vcmp.ge.u32.totalorder %v2068, 429496730
        %vm2213 = vcmp.ge.u32.totalorder %v2069, 429496730
        %vm2214 = vcmp.ge.u32.totalorder %v2070, 429496730
        %vm2215 = vcmp.ge.u32.totalorder %v2071, 429496730
        %vm2216 = vcmp.ge.u32.totalorder %v2072, 429496730
        %vm2217 = vcmp.ge.u32.totalorder %v2073, 429496730
        %vm2218 = vcmp.ge.u32.totalorder %v2074, 429496730
        %vm2219 = vcmp.ge.u32.totalorder %v2075, 429496730
        %vm2220 = vcmp.ge.u32.totalorder %v2076, 429496730
        %vm2221 = vcmp.ge.u32.totalorder %v2077, 429496730
        %vm2222 = vcmp.ge.u32.totalorder %v2078, 429496730
        %vm2223 = vcmp.ge.u32.totalorder %v2079, 429496730
        %vm2224 = vcmp.ge.u32.totalorder %v2080, 429496730
        %vm2225 = vcmp.ge.u32.totalorder %v2081, 429496730
        %vm2226 = vcmp.ge.u32.totalorder %v2082, 429496730
        %vm2227 = vcmp.ge.u32.totalorder %v2083, 429496730
        %vm2228 = vcmp.ge.u32.totalorder %v2084, 429496730
        %vm2229 = vcmp.ge.u32.totalorder %v2085, 429496730
        %vm2230 = vcmp.ge.u32.totalorder %v2086, 429496730
        %vm2231 = vcmp.ge.u32.totalorder %v2087, 429496730
        %vm2232 = vcmp.ge.u32.totalorder %v2088, 429496730
        %vm2233 = vcmp.ge.u32.totalorder %v2089, 429496730
        %vm2234 = vcmp.ge.u32.totalorder %v2090, 429496730
        %vm2235 = vcmp.ge.u32.totalorder %v2091, 429496730
        %vm2236 = vcmp.ge.u32.totalorder %v2092, 429496730
        %vm2237 = vcmp.ge.u32.totalorder %v2093, 429496730
        %vm2238 = vcmp.ge.u32.totalorder %v2094, 429496730
        %vm2239 = vcmp.ge.u32.totalorder %v2095, 429496730
        %vm2240 = vcmp.ge.u32.totalorder %v2096, 429496730
        %vm2241 = vcmp.ge.u32.totalorder %v2097, 429496730
        %vm2242 = vcmp.ge.u32.totalorder %v2098, 429496730
        %vm2243 = vcmp.ge.u32.totalorder %v2099, 429496730
        %vm2244 = vcmp.ge.u32.totalorder %v2100, 429496730
        %v2245 = vmul.f32 %v288, 1.1111112
        %v2246 = vmul.f32 %v289, 1.1111112
        %v2247 = vmul.f32 %v290, 1.1111112
        %v2248 = vmul.f32 %v291, 1.1111112
        %v2249 = vmul.f32 %v292, 1.1111112
        %v2250 = vmul.f32 %v293, 1.1111112
        %v2251 = vmul.f32 %v294, 1.1111112
        %v2252 = vmul.f32 %v295, 1.1111112
        %v2253 = vmul.f32 %v296, 1.1111112
        %v2254 = vmul.f32 %v297, 1.1111112
        %v2255 = vmul.f32 %v298, 1.1111112
        %v2256 = vmul.f32 %v299, 1.1111112
        %v2257 = vmul.f32 %v300, 1.1111112
        %v2258 = vmul.f32 %v301, 1.1111112
        %v2259 = vmul.f32 %v302, 1.1111112
        %v2260 = vmul.f32 %v303, 1.1111112
        %v2261 = vmul.f32 %v304, 1.1111112
        %v2262 = vmul.f32 %v305, 1.1111112
        %v2263 = vmul.f32 %v306, 1.1111112
        %v2264 = vmul.f32 %v307, 1.1111112
        %v2265 = vmul.f32 %v308, 1.1111112
        %v2266 = vmul.f32 %v309, 1.1111112
        %v2267 = vmul.f32 %v310, 1.1111112
        %v2268 = vmul.f32 %v311, 1.1111112
        %v2269 = vmul.f32 %v312, 1.1111112
        %v2270 = vmul.f32 %v313, 1.1111112
        %v2271 = vmul.f32 %v314, 1.1111112
        %v2272 = vmul.f32 %v315, 1.1111112
        %v2273 = vmul.f32 %v316, 1.1111112
        %v2274 = vmul.f32 %v317, 1.1111112
        %v2275 = vmul.f32 %v318, 1.1111112
        %v2276 = vmul.f32 %v319, 1.1111112
        %v2277 = vmul.f32 %v320, 1.1111112
        %v2278 = vmul.f32 %v321, 1.1111112
        %v2279 = vmul.f32 %v322, 1.1111112
        %v2280 = vmul.f32 %v323, 1.1111112
        %v2281 = vmul.f32 %v324, 1.1111112
        %v2282 = vmul.f32 %v325, 1.1111112
        %v2283 = vmul.f32 %v326, 1.1111112
        %v2284 = vmul.f32 %v327, 1.1111112
        %v2285 = vmul.f32 %v328, 1.1111112
        %v2286 = vmul.f32 %v329, 1.1111112
        %v2287 = vmul.f32 %v330, 1.1111112
        %v2288 = vmul.f32 %v331, 1.1111112
        %v2289 = vmul.f32 %v332, 1.1111112
        %v2290 = vmul.f32 %v333, 1.1111112
        %v2291 = vmul.f32 %v334, 1.1111112
        %v2292 = vmul.f32 %v335, 1.1111112
        %v2293 = vmul.f32 %v336, 1.1111112
        %v2294 = vmul.f32 %v337, 1.1111112
        %v2295 = vmul.f32 %v338, 1.1111112
        %v2296 = vmul.f32 %v339, 1.1111112
        %v2297 = vmul.f32 %v340, 1.1111112
        %v2298 = vmul.f32 %v341, 1.1111112
        %v2299 = vmul.f32 %v342, 1.1111112
        %v2300 = vmul.f32 %v343, 1.1111112
        %v2301 = vmul.f32 %v344, 1.1111112
        %v2302 = vmul.f32 %v345, 1.1111112
        %v2303 = vmul.f32 %v346, 1.1111112
        %v2304 = vmul.f32 %v347, 1.1111112
        %v2305 = vmul.f32 %v348, 1.1111112
        %v2306 = vmul.f32 %v349, 1.1111112
        %v2307 = vmul.f32 %v350, 1.1111112
        %v2308 = vmul.f32 %v351, 1.1111112
        %v2309 = vmul.f32 %v352, 1.1111112
        %v2310 = vmul.f32 %v353, 1.1111112
        %v2311 = vmul.f32 %v354, 1.1111112
        %v2312 = vmul.f32 %v355, 1.1111112
        %v2313 = vmul.f32 %v356, 1.1111112
        %v2314 = vmul.f32 %v357, 1.1111112
        %v2315 = vmul.f32 %v358, 1.1111112
        %v2316 = vmul.f32 %v359, 1.1111112
        %v2317 = vmul.f32 %v360, 1.1111112
        %v2318 = vmul.f32 %v361, 1.1111112
        %v2319 = vmul.f32 %v362, 1.1111112
        %v2320 = vmul.f32 %v363, 1.1111112
        %v2321 = vmul.f32 %v364, 1.1111112
        %v2322 = vmul.f32 %v365, 1.1111112
        %v2323 = vmul.f32 %v366, 1.1111112
        %v2324 = vmul.f32 %v367, 1.1111112
        %v2325 = vmul.f32 %v368, 1.1111112
        %v2326 = vmul.f32 %v369, 1.1111112
        %v2327 = vmul.f32 %v370, 1.1111112
        %v2328 = vmul.f32 %v371, 1.1111112
        %v2329 = vmul.f32 %v372, 1.1111112
        %v2330 = vmul.f32 %v373, 1.1111112
        %v2331 = vmul.f32 %v374, 1.1111112
        %v2332 = vmul.f32 %v375, 1.1111112
        %v2333 = vmul.f32 %v376, 1.1111112
        %v2334 = vmul.f32 %v377, 1.1111112
        %v2335 = vmul.f32 %v378, 1.1111112
        %v2336 = vmul.f32 %v379, 1.1111112
        %v2337 = vmul.f32 %v380, 1.1111112
        %v2338 = vmul.f32 %v381, 1.1111112
        %v2339 = vmul.f32 %v382, 1.1111112
        %v2340 = vmul.f32 %v383, 1.1111112
        %v2341 = vmul.f32 %v384, 1.1111112
        %v2342 = vmul.f32 %v385, 1.1111112
        %v2343 = vmul.f32 %v386, 1.1111112
        %v2344 = vmul.f32 %v387, 1.1111112
        %v2345 = vmul.f32 %v388, 1.1111112
        %v2346 = vmul.f32 %v389, 1.1111112
        %v2347 = vmul.f32 %v390, 1.1111112
        %v2348 = vmul.f32 %v391, 1.1111112
        %v2349 = vmul.f32 %v392, 1.1111112
        %v2350 = vmul.f32 %v393, 1.1111112
        %v2351 = vmul.f32 %v394, 1.1111112
        %v2352 = vmul.f32 %v395, 1.1111112
        %v2353 = vmul.f32 %v396, 1.1111112
        %v2354 = vmul.f32 %v397, 1.1111112
        %v2355 = vmul.f32 %v398, 1.1111112
        %v2356 = vmul.f32 %v399, 1.1111112
        %v2357 = vmul.f32 %v400, 1.1111112
        %v2358 = vmul.f32 %v401, 1.1111112
        %v2359 = vmul.f32 %v402, 1.1111112
        %v2360 = vmul.f32 %v403, 1.1111112
        %v2361 = vmul.f32 %v404, 1.1111112
        %v2362 = vmul.f32 %v405, 1.1111112
        %v2363 = vmul.f32 %v406, 1.1111112
        %v2364 = vmul.f32 %v407, 1.1111112
        %v2365 = vmul.f32 %v408, 1.1111112
        %v2366 = vmul.f32 %v409, 1.1111112
        %v2367 = vmul.f32 %v410, 1.1111112
        %v2368 = vmul.f32 %v411, 1.1111112
        %v2369 = vmul.f32 %v412, 1.1111112
        %v2370 = vmul.f32 %v413, 1.1111112
        %v2371 = vmul.f32 %v414, 1.1111112
        %v2372 = vmul.f32 %v415, 1.1111112
        %v2373 = vmul.f32 %v416, 1.1111112
        %v2374 = vmul.f32 %v417, 1.1111112
        %v2375 = vmul.f32 %v418, 1.1111112
        %v2376 = vmul.f32 %v419, 1.1111112
        %v2377 = vmul.f32 %v420, 1.1111112
        %v2378 = vmul.f32 %v421, 1.1111112
        %v2379 = vmul.f32 %v422, 1.1111112
        %v2380 = vmul.f32 %v423, 1.1111112
        %v2381 = vmul.f32 %v424, 1.1111112
        %v2382 = vmul.f32 %v425, 1.1111112
        %v2383 = vmul.f32 %v426, 1.1111112
        %v2384 = vmul.f32 %v427, 1.1111112
        %v2385 = vmul.f32 %v428, 1.1111112
        %v2386 = vmul.f32 %v429, 1.1111112
        %v2387 = vmul.f32 %v430, 1.1111112
        %v2388 = vmul.f32 %v431, 1.1111112
        %v2389 = vsel %vm2101, %v2245, 0.0
        %v2390 = vsel %vm2102, %v2246, 0.0
        %v2391 = vsel %vm2103, %v2247, 0.0
        %v2392 = vsel %vm2104, %v2248, 0.0
        %v2393 = vsel %vm2105, %v2249, 0.0
        %v2394 = vsel %vm2106, %v2250, 0.0
        %v2395 = vsel %vm2107, %v2251, 0.0
        %v2396 = vsel %vm2108, %v2252, 0.0
        %v2397 = vsel %vm2109, %v2253, 0.0
        %v2398 = vsel %vm2110, %v2254, 0.0
        %v2399 = vsel %vm2111, %v2255, 0.0
        %v2400 = vsel %vm2112, %v2256, 0.0
        %v2401 = vsel %vm2113, %v2257, 0.0
        %v2402 = vsel %vm2114, %v2258, 0.0
        %v2403 = vsel %vm2115, %v2259, 0.0
        %v2404 = vsel %vm2116, %v2260, 0.0
        %v2405 = vsel %vm2117, %v2261, 0.0
        %v2406 = vsel %vm2118, %v2262, 0.0
        %v2407 = vsel %vm2119, %v2263, 0.0
        %v2408 = vsel %vm2120, %v2264, 0.0
        %v2409 = vsel %vm2121, %v2265, 0.0
        %v2410 = vsel %vm2122, %v2266, 0.0
        %v2411 = vsel %vm2123, %v2267, 0.0
        %v2412 = vsel %vm2124, %v2268, 0.0
        %v2413 = vsel %vm2125, %v2269, 0.0
        %v2414 = vsel %vm2126, %v2270, 0.0
        %v2415 = vsel %vm2127, %v2271, 0.0
        %v2416 = vsel %vm2128, %v2272, 0.0
        %v2417 = vsel %vm2129, %v2273, 0.0
        %v2418 = vsel %vm2130, %v2274, 0.0
        %v2419 = vsel %vm2131, %v2275, 0.0
        %v2420 = vsel %vm2132, %v2276, 0.0
        %v2421 = vsel %vm2133, %v2277, 0.0
        %v2422 = vsel %vm2134, %v2278, 0.0
        %v2423 = vsel %vm2135, %v2279, 0.0
        %v2424 = vsel %vm2136, %v2280, 0.0
        %v2425 = vsel %vm2137, %v2281, 0.0
        %v2426 = vsel %vm2138, %v2282, 0.0
        %v2427 = vsel %vm2139, %v2283, 0.0
        %v2428 = vsel %vm2140, %v2284, 0.0
        %v2429 = vsel %vm2141, %v2285, 0.0
        %v2430 = vsel %vm2142, %v2286, 0.0
        %v2431 = vsel %vm2143, %v2287, 0.0
        %v2432 = vsel %vm2144, %v2288, 0.0
        %v2433 = vsel %vm2145, %v2289, 0.0
        %v2434 = vsel %vm2146, %v2290, 0.0
        %v2435 = vsel %vm2147, %v2291, 0.0
        %v2436 = vsel %vm2148, %v2292, 0.0
        %v2437 = vsel %vm2149, %v2293, 0.0
        %v2438 = vsel %vm2150, %v2294, 0.0
        %v2439 = vsel %vm2151, %v2295, 0.0
        %v2440 = vsel %vm2152, %v2296, 0.0
        %v2441 = vsel %vm2153, %v2297, 0.0
        %v2442 = vsel %vm2154, %v2298, 0.0
        %v2443 = vsel %vm2155, %v2299, 0.0
        %v2444 = vsel %vm2156, %v2300, 0.0
        %v2445 = vsel %vm2157, %v2301, 0.0
        %v2446 = vsel %vm2158, %v2302, 0.0
        %v2447 = vsel %vm2159, %v2303, 0.0
        %v2448 = vsel %vm2160, %v2304, 0.0
        %v2449 = vsel %vm2161, %v2305, 0.0
        %v2450 = vsel %vm2162, %v2306, 0.0
        %v2451 = vsel %vm2163, %v2307, 0.0
        %v2452 = vsel %vm2164, %v2308, 0.0
        %v2453 = vsel %vm2165, %v2309, 0.0
        %v2454 = vsel %vm2166, %v2310, 0.0
        %v2455 = vsel %vm2167, %v2311, 0.0
        %v2456 = vsel %vm2168, %v2312, 0.0
        %v2457 = vsel %vm2169, %v2313, 0.0
        %v2458 = vsel %vm2170, %v2314, 0.0
        %v2459 = vsel %vm2171, %v2315, 0.0
        %v2460 = vsel %vm2172, %v2316, 0.0
        %v2461 = vsel %vm2173, %v2317, 0.0
        %v2462 = vsel %vm2174, %v2318, 0.0
        %v2463 = vsel %vm2175, %v2319, 0.0
        %v2464 = vsel %vm2176, %v2320, 0.0
        %v2465 = vsel %vm2177, %v2321, 0.0
        %v2466 = vsel %vm2178, %v2322, 0.0
        %v2467 = vsel %vm2179, %v2323, 0.0
        %v2468 = vsel %vm2180, %v2324, 0.0
        %v2469 = vsel %vm2181, %v2325, 0.0
        %v2470 = vsel %vm2182, %v2326, 0.0
        %v2471 = vsel %vm2183, %v2327, 0.0
        %v2472 = vsel %vm2184, %v2328, 0.0
        %v2473 = vsel %vm2185, %v2329, 0.0
        %v2474 = vsel %vm2186, %v2330, 0.0
        %v2475 = vsel %vm2187, %v2331, 0.0
        %v2476 = vsel %vm2188, %v2332, 0.0
        %v2477 = vsel %vm2189, %v2333, 0.0
        %v2478 = vsel %vm2190, %v2334, 0.0
        %v2479 = vsel %vm2191, %v2335, 0.0
        %v2480 = vsel %vm2192, %v2336, 0.0
        %v2481 = vsel %vm2193, %v2337, 0.0
        %v2482 = vsel %vm2194, %v2338, 0.0
        %v2483 = vsel %vm2195, %v2339, 0.0
        %v2484 = vsel %vm2196, %v2340, 0.0
        %v2485 = vsel %vm2197, %v2341, 0.0
        %v2486 = vsel %vm2198, %v2342, 0.0
        %v2487 = vsel %vm2199, %v2343, 0.0
        %v2488 = vsel %vm2200, %v2344, 0.0
        %v2489 = vsel %vm2201, %v2345, 0.0
        %v2490 = vsel %vm2202, %v2346, 0.0
        %v2491 = vsel %vm2203, %v2347, 0.0
        %v2492 = vsel %vm2204, %v2348, 0.0
        %v2493 = vsel %vm2205, %v2349, 0.0
        %v2494 = vsel %vm2206, %v2350, 0.0
        %v2495 = vsel %vm2207, %v2351, 0.0
        %v2496 = vsel %vm2208, %v2352, 0.0
        %v2497 = vsel %vm2209, %v2353, 0.0
        %v2498 = vsel %vm2210, %v2354, 0.0
        %v2499 = vsel %vm2211, %v2355, 0.0
        %v2500 = vsel %vm2212, %v2356, 0.0
        %v2501 = vsel %vm2213, %v2357, 0.0
        %v2502 = vsel %vm2214, %v2358, 0.0
        %v2503 = vsel %vm2215, %v2359, 0.0
        %v2504 = vsel %vm2216, %v2360, 0.0
        %v2505 = vsel %vm2217, %v2361, 0.0
        %v2506 = vsel %vm2218, %v2362, 0.0
        %v2507 = vsel %vm2219, %v2363, 0.0
        %v2508 = vsel %vm2220, %v2364, 0.0
        %v2509 = vsel %vm2221, %v2365, 0.0
        %v2510 = vsel %vm2222, %v2366, 0.0
        %v2511 = vsel %vm2223, %v2367, 0.0
        %v2512 = vsel %vm2224, %v2368, 0.0
        %v2513 = vsel %vm2225, %v2369, 0.0
        %v2514 = vsel %vm2226, %v2370, 0.0
        %v2515 = vsel %vm2227, %v2371, 0.0
        %v2516 = vsel %vm2228, %v2372, 0.0
        %v2517 = vsel %vm2229, %v2373, 0.0
        %v2518 = vsel %vm2230, %v2374, 0.0
        %v2519 = vsel %vm2231, %v2375, 0.0
        %v2520 = vsel %vm2232, %v2376, 0.0
        %v2521 = vsel %vm2233, %v2377, 0.0
        %v2522 = vsel %vm2234, %v2378, 0.0
        %v2523 = vsel %vm2235, %v2379, 0.0
        %v2524 = vsel %vm2236, %v2380, 0.0
        %v2525 = vsel %vm2237, %v2381, 0.0
        %v2526 = vsel %vm2238, %v2382, 0.0
        %v2527 = vsel %vm2239, %v2383, 0.0
        %v2528 = vsel %vm2240, %v2384, 0.0
        %v2529 = vsel %vm2241, %v2385, 0.0
        %v2530 = vsel %vm2242, %v2386, 0.0
        %v2531 = vsel %vm2243, %v2387, 0.0
        %v2532 = vsel %vm2244, %v2388, 0.0
        %v2533 = vadd.f32 %v2389, %v432
        %v2534 = vadd.f32 %v2390, %v433
        %v2535 = vadd.f32 %v2391, %v434
        %v2536 = vadd.f32 %v2392, %v435
        %v2537 = vadd.f32 %v2393, %v436
        %v2538 = vadd.f32 %v2394, %v437
        %v2539 = vadd.f32 %v2395, %v438
        %v2540 = vadd.f32 %v2396, %v439
        %v2541 = vadd.f32 %v2397, %v440
        %v2542 = vadd.f32 %v2398, %v441
        %v2543 = vadd.f32 %v2399, %v442
        %v2544 = vadd.f32 %v2400, %v443
        %v2545 = vadd.f32 %v2401, %v444
        %v2546 = vadd.f32 %v2402, %v445
        %v2547 = vadd.f32 %v2403, %v446
        %v2548 = vadd.f32 %v2404, %v447
        %v2549 = vadd.f32 %v2405, %v448
        %v2550 = vadd.f32 %v2406, %v449
        %v2551 = vadd.f32 %v2407, %v450
        %v2552 = vadd.f32 %v2408, %v451
        %v2553 = vadd.f32 %v2409, %v452
        %v2554 = vadd.f32 %v2410, %v453
        %v2555 = vadd.f32 %v2411, %v454
        %v2556 = vadd.f32 %v2412, %v455
        %v2557 = vadd.f32 %v2413, %v456
        %v2558 = vadd.f32 %v2414, %v457
        %v2559 = vadd.f32 %v2415, %v458
        %v2560 = vadd.f32 %v2416, %v459
        %v2561 = vadd.f32 %v2417, %v460
        %v2562 = vadd.f32 %v2418, %v461
        %v2563 = vadd.f32 %v2419, %v462
        %v2564 = vadd.f32 %v2420, %v463
        %v2565 = vadd.f32 %v2421, %v464
        %v2566 = vadd.f32 %v2422, %v465
        %v2567 = vadd.f32 %v2423, %v466
        %v2568 = vadd.f32 %v2424, %v467
        %v2569 = vadd.f32 %v2425, %v468
        %v2570 = vadd.f32 %v2426, %v469
        %v2571 = vadd.f32 %v2427, %v470
        %v2572 = vadd.f32 %v2428, %v471
        %v2573 = vadd.f32 %v2429, %v472
        %v2574 = vadd.f32 %v2430, %v473
        %v2575 = vadd.f32 %v2431, %v474
        %v2576 = vadd.f32 %v2432, %v475
        %v2577 = vadd.f32 %v2433, %v476
        %v2578 = vadd.f32 %v2434, %v477
        %v2579 = vadd.f32 %v2435, %v478
        %v2580 = vadd.f32 %v2436, %v479
        %v2581 = vadd.f32 %v2437, %v480
        %v2582 = vadd.f32 %v2438, %v481
        %v2583 = vadd.f32 %v2439, %v482
        %v2584 = vadd.f32 %v2440, %v483
        %v2585 = vadd.f32 %v2441, %v484
        %v2586 = vadd.f32 %v2442, %v485
        %v2587 = vadd.f32 %v2443, %v486
        %v2588 = vadd.f32 %v2444, %v487
        %v2589 = vadd.f32 %v2445, %v488
        %v2590 = vadd.f32 %v2446, %v489
        %v2591 = vadd.f32 %v2447, %v490
        %v2592 = vadd.f32 %v2448, %v491
        %v2593 = vadd.f32 %v2449, %v492
        %v2594 = vadd.f32 %v2450, %v493
        %v2595 = vadd.f32 %v2451, %v494
        %v2596 = vadd.f32 %v2452, %v495
        %v2597 = vadd.f32 %v2453, %v496
        %v2598 = vadd.f32 %v2454, %v497
        %v2599 = vadd.f32 %v2455, %v498
        %v2600 = vadd.f32 %v2456, %v499
        %v2601 = vadd.f32 %v2457, %v500
        %v2602 = vadd.f32 %v2458, %v501
        %v2603 = vadd.f32 %v2459, %v502
        %v2604 = vadd.f32 %v2460, %v503
        %v2605 = vadd.f32 %v2461, %v504
        %v2606 = vadd.f32 %v2462, %v505
        %v2607 = vadd.f32 %v2463, %v506
        %v2608 = vadd.f32 %v2464, %v507
        %v2609 = vadd.f32 %v2465, %v508
        %v2610 = vadd.f32 %v2466, %v509
        %v2611 = vadd.f32 %v2467, %v510
        %v2612 = vadd.f32 %v2468, %v511
        %v2613 = vadd.f32 %v2469, %v512
        %v2614 = vadd.f32 %v2470, %v513
        %v2615 = vadd.f32 %v2471, %v514
        %v2616 = vadd.f32 %v2472, %v515
        %v2617 = vadd.f32 %v2473, %v516
        %v2618 = vadd.f32 %v2474, %v517
        %v2619 = vadd.f32 %v2475, %v518
        %v2620 = vadd.f32 %v2476, %v519
        %v2621 = vadd.f32 %v2477, %v520
        %v2622 = vadd.f32 %v2478, %v521
        %v2623 = vadd.f32 %v2479, %v522
        %v2624 = vadd.f32 %v2480, %v523
        %v2625 = vadd.f32 %v2481, %v524
        %v2626 = vadd.f32 %v2482, %v525
        %v2627 = vadd.f32 %v2483, %v526
        %v2628 = vadd.f32 %v2484, %v527
        %v2629 = vadd.f32 %v2485, %v528
        %v2630 = vadd.f32 %v2486, %v529
        %v2631 = vadd.f32 %v2487, %v530
        %v2632 = vadd.f32 %v2488, %v531
        %v2633 = vadd.f32 %v2489, %v532
        %v2634 = vadd.f32 %v2490, %v533
        %v2635 = vadd.f32 %v2491, %v534
        %v2636 = vadd.f32 %v2492, %v535
        %v2637 = vadd.f32 %v2493, %v536
        %v2638 = vadd.f32 %v2494, %v537
        %v2639 = vadd.f32 %v2495, %v538
        %v2640 = vadd.f32 %v2496, %v539
        %v2641 = vadd.f32 %v2497, %v540
        %v2642 = vadd.f32 %v2498, %v541
        %v2643 = vadd.f32 %v2499, %v542
        %v2644 = vadd.f32 %v2500, %v543
        %v2645 = vadd.f32 %v2501, %v544
        %v2646 = vadd.f32 %v2502, %v545
        %v2647 = vadd.f32 %v2503, %v546
        %v2648 = vadd.f32 %v2504, %v547
        %v2649 = vadd.f32 %v2505, %v548
        %v2650 = vadd.f32 %v2506, %v549
        %v2651 = vadd.f32 %v2507, %v550
        %v2652 = vadd.f32 %v2508, %v551
        %v2653 = vadd.f32 %v2509, %v552
        %v2654 = vadd.f32 %v2510, %v553
        %v2655 = vadd.f32 %v2511, %v554
        %v2656 = vadd.f32 %v2512, %v555
        %v2657 = vadd.f32 %v2513, %v556
        %v2658 = vadd.f32 %v2514, %v557
        %v2659 = vadd.f32 %v2515, %v558
        %v2660 = vadd.f32 %v2516, %v559
        %v2661 = vadd.f32 %v2517, %v560
        %v2662 = vadd.f32 %v2518, %v561
        %v2663 = vadd.f32 %v2519, %v562
        %v2664 = vadd.f32 %v2520, %v563
        %v2665 = vadd.f32 %v2521, %v564
        %v2666 = vadd.f32 %v2522, %v565
        %v2667 = vadd.f32 %v2523, %v566
        %v2668 = vadd.f32 %v2524, %v567
        %v2669 = vadd.f32 %v2525, %v568
        %v2670 = vadd.f32 %v2526, %v569
        %v2671 = vadd.f32 %v2527, %v570
        %v2672 = vadd.f32 %v2528, %v571
        %v2673 = vadd.f32 %v2529, %v572
        %v2674 = vadd.f32 %v2530, %v573
        %v2675 = vadd.f32 %v2531, %v574
        %v2676 = vadd.f32 %v2532, %v575
        %v2677 = vadd.f32 %v2533, %v2534
        %v2678 = vadd.f32 %v2677, %v2535
        %v2679 = vadd.f32 %v2678, %v2536
        %v2680 = vadd.f32 %v2679, %v2537
        %v2681 = vadd.f32 %v2680, %v2538
        %2682 = vadd.xlane.f32.xlu0 %v2681
        %v2683 = vpop.xlane.xlu0 %2682
        %v2684 = vadd.f32 %v2539, %v2540
        %v2685 = vadd.f32 %v2684, %v2541
        %v2686 = vadd.f32 %v2685, %v2542
        %v2687 = vadd.f32 %v2686, %v2543
        %v2688 = vadd.f32 %v2687, %v2544
        %2689 = vadd.xlane.f32.xlu0 %v2688
        %v2690 = vpop.xlane.xlu0 %2689
        %v2691 = vadd.f32 %v2545, %v2546
        %v2692 = vadd.f32 %v2691, %v2547
        %v2693 = vadd.f32 %v2692, %v2548
        %v2694 = vadd.f32 %v2693, %v2549
        %v2695 = vadd.f32 %v2694, %v2550
        %2696 = vadd.xlane.f32.xlu0 %v2695
        %v2697 = vpop.xlane.xlu0 %2696
        %v2698 = vadd.f32 %v2551, %v2552
        %v2699 = vadd.f32 %v2698, %v2553
        %v2700 = vadd.f32 %v2699, %v2554
        %v2701 = vadd.f32 %v2700, %v2555
        %v2702 = vadd.f32 %v2701, %v2556
        %2703 = vadd.xlane.f32.xlu0 %v2702
        %v2704 = vpop.xlane.xlu0 %2703
        %v2705 = vadd.f32 %v2557, %v2558
        %v2706 = vadd.f32 %v2705, %v2559
        %v2707 = vadd.f32 %v2706, %v2560
        %v2708 = vadd.f32 %v2707, %v2561
        %v2709 = vadd.f32 %v2708, %v2562
        %2710 = vadd.xlane.f32.xlu0 %v2709
        %v2711 = vpop.xlane.xlu0 %2710
        %v2712 = vadd.f32 %v2563, %v2564
        %v2713 = vadd.f32 %v2712, %v2565
        %v2714 = vadd.f32 %v2713, %v2566
        %v2715 = vadd.f32 %v2714, %v2567
        %v2716 = vadd.f32 %v2715, %v2568
        %2717 = vadd.xlane.f32.xlu0 %v2716
        %v2718 = vpop.xlane.xlu0 %2717
        %v2719 = vadd.f32 %v2569, %v2570
        %v2720 = vadd.f32 %v2719, %v2571
        %v2721 = vadd.f32 %v2720, %v2572
        %v2722 = vadd.f32 %v2721, %v2573
        %v2723 = vadd.f32 %v2722, %v2574
        %2724 = vadd.xlane.f32.xlu0 %v2723
        %v2725 = vpop.xlane.xlu0 %2724
        %v2726 = vadd.f32 %v2575, %v2576
        %v2727 = vadd.f32 %v2726, %v2577
        %v2728 = vadd.f32 %v2727, %v2578
        %v2729 = vadd.f32 %v2728, %v2579
        %v2730 = vadd.f32 %v2729, %v2580
        %2731 = vadd.xlane.f32.xlu0 %v2730
        %v2732 = vpop.xlane.xlu0 %2731
        %v2733 = vadd.f32 %v2581, %v2582
        %v2734 = vadd.f32 %v2733, %v2583
        %v2735 = vadd.f32 %v2734, %v2584
        %v2736 = vadd.f32 %v2735, %v2585
        %v2737 = vadd.f32 %v2736, %v2586
        %2738 = vadd.xlane.f32.xlu0 %v2737
        %v2739 = vpop.xlane.xlu0 %2738
        %v2740 = vadd.f32 %v2587, %v2588
        %v2741 = vadd.f32 %v2740, %v2589
        %v2742 = vadd.f32 %v2741, %v2590
        %v2743 = vadd.f32 %v2742, %v2591
        %v2744 = vadd.f32 %v2743, %v2592
        %2745 = vadd.xlane.f32.xlu0 %v2744
        %v2746 = vpop.xlane.xlu0 %2745
        %v2747 = vadd.f32 %v2593, %v2594
        %v2748 = vadd.f32 %v2747, %v2595
        %v2749 = vadd.f32 %v2748, %v2596
        %v2750 = vadd.f32 %v2749, %v2597
        %v2751 = vadd.f32 %v2750, %v2598
        %2752 = vadd.xlane.f32.xlu0 %v2751
        %v2753 = vpop.xlane.xlu0 %2752
        %v2754 = vadd.f32 %v2599, %v2600
        %v2755 = vadd.f32 %v2754, %v2601
        %v2756 = vadd.f32 %v2755, %v2602
        %v2757 = vadd.f32 %v2756, %v2603
        %v2758 = vadd.f32 %v2757, %v2604
        %2759 = vadd.xlane.f32.xlu0 %v2758
        %v2760 = vpop.xlane.xlu0 %2759
        %v2761 = vadd.f32 %v2605, %v2606
        %v2762 = vadd.f32 %v2761, %v2607
        %v2763 = vadd.f32 %v2762, %v2608
        %v2764 = vadd.f32 %v2763, %v2609
        %v2765 = vadd.f32 %v2764, %v2610
        %2766 = vadd.xlane.f32.xlu0 %v2765
        %v2767 = vpop.xlane.xlu0 %2766
        %v2768 = vadd.f32 %v2611, %v2612
        %v2769 = vadd.f32 %v2768, %v2613
        %v2770 = vadd.f32 %v2769, %v2614
        %v2771 = vadd.f32 %v2770, %v2615
        %v2772 = vadd.f32 %v2771, %v2616
        %2773 = vadd.xlane.f32.xlu0 %v2772
        %v2774 = vpop.xlane.xlu0 %2773
        %v2775 = vadd.f32 %v2617, %v2618
        %v2776 = vadd.f32 %v2775, %v2619
        %v2777 = vadd.f32 %v2776, %v2620
        %v2778 = vadd.f32 %v2777, %v2621
        %v2779 = vadd.f32 %v2778, %v2622
        %2780 = vadd.xlane.f32.xlu0 %v2779
        %v2781 = vpop.xlane.xlu0 %2780
        %v2782 = vadd.f32 %v2623, %v2624
        %v2783 = vadd.f32 %v2782, %v2625
        %v2784 = vadd.f32 %v2783, %v2626
        %v2785 = vadd.f32 %v2784, %v2627
        %v2786 = vadd.f32 %v2785, %v2628
        %2787 = vadd.xlane.f32.xlu0 %v2786
        %v2788 = vpop.xlane.xlu0 %2787
        %v2789 = vadd.f32 %v2629, %v2630
        %v2790 = vadd.f32 %v2789, %v2631
        %v2791 = vadd.f32 %v2790, %v2632
        %v2792 = vadd.f32 %v2791, %v2633
        %v2793 = vadd.f32 %v2792, %v2634
        %2794 = vadd.xlane.f32.xlu0 %v2793
        %v2795 = vpop.xlane.xlu0 %2794
        %v2796 = vadd.f32 %v2635, %v2636
        %v2797 = vadd.f32 %v2796, %v2637
        %v2798 = vadd.f32 %v2797, %v2638
        %v2799 = vadd.f32 %v2798, %v2639
        %v2800 = vadd.f32 %v2799, %v2640
        %2801 = vadd.xlane.f32.xlu0 %v2800
        %v2802 = vpop.xlane.xlu0 %2801
        %v2803 = vadd.f32 %v2641, %v2642
        %v2804 = vadd.f32 %v2803, %v2643
        %v2805 = vadd.f32 %v2804, %v2644
        %v2806 = vadd.f32 %v2805, %v2645
        %v2807 = vadd.f32 %v2806, %v2646
        %2808 = vadd.xlane.f32.xlu0 %v2807
        %v2809 = vpop.xlane.xlu0 %2808
        %v2810 = vadd.f32 %v2647, %v2648
        %v2811 = vadd.f32 %v2810, %v2649
        %v2812 = vadd.f32 %v2811, %v2650
        %v2813 = vadd.f32 %v2812, %v2651
        %v2814 = vadd.f32 %v2813, %v2652
        %2815 = vadd.xlane.f32.xlu0 %v2814
        %v2816 = vpop.xlane.xlu0 %2815
        %v2817 = vadd.f32 %v2653, %v2654
        %v2818 = vadd.f32 %v2817, %v2655
        %v2819 = vadd.f32 %v2818, %v2656
        %v2820 = vadd.f32 %v2819, %v2657
        %v2821 = vadd.f32 %v2820, %v2658
        %2822 = vadd.xlane.f32.xlu0 %v2821
        %v2823 = vpop.xlane.xlu0 %2822
        %v2824 = vadd.f32 %v2659, %v2660
        %v2825 = vadd.f32 %v2824, %v2661
        %v2826 = vadd.f32 %v2825, %v2662
        %v2827 = vadd.f32 %v2826, %v2663
        %v2828 = vadd.f32 %v2827, %v2664
        %2829 = vadd.xlane.f32.xlu0 %v2828
        %v2830 = vpop.xlane.xlu0 %2829
        %v2831 = vadd.f32 %v2665, %v2666
        %v2832 = vadd.f32 %v2831, %v2667
        %v2833 = vadd.f32 %v2832, %v2668
        %v2834 = vadd.f32 %v2833, %v2669
        %v2835 = vadd.f32 %v2834, %v2670
        %2836 = vadd.xlane.f32.xlu0 %v2835
        %v2837 = vpop.xlane.xlu0 %2836
        %v2838 = vadd.f32 %v2671, %v2672
        %v2839 = vadd.f32 %v2838, %v2673
        %v2840 = vadd.f32 %v2839, %v2674
        %v2841 = vadd.f32 %v2840, %v2675
        %v2842 = vadd.f32 %v2841, %v2676
        %2843 = vadd.xlane.f32.xlu0 %v2842
        %v2844 = vpop.xlane.xlu0 %2843
        %v2845 = vrcp.pop 768.0
        %v2846 = vmul.f32 %v2683, %v2845
        %v2847 = vmul.f32 %v2690, %v2845
        %v2848 = vmul.f32 %v2697, %v2845
        %v2849 = vmul.f32 %v2704, %v2845
        %v2850 = vmul.f32 %v2711, %v2845
        %v2851 = vmul.f32 %v2718, %v2845
        %v2852 = vmul.f32 %v2725, %v2845
        %v2853 = vmul.f32 %v2732, %v2845
        %v2854 = vmul.f32 %v2739, %v2845
        %v2855 = vmul.f32 %v2746, %v2845
        %v2856 = vmul.f32 %v2753, %v2845
        %v2857 = vmul.f32 %v2760, %v2845
        %v2858 = vmul.f32 %v2767, %v2845
        %v2859 = vmul.f32 %v2774, %v2845
        %v2860 = vmul.f32 %v2781, %v2845
        %v2861 = vmul.f32 %v2788, %v2845
        %v2862 = vmul.f32 %v2795, %v2845
        %v2863 = vmul.f32 %v2802, %v2845
        %v2864 = vmul.f32 %v2809, %v2845
        %v2865 = vmul.f32 %v2816, %v2845
        %v2866 = vmul.f32 %v2823, %v2845
        %v2867 = vmul.f32 %v2830, %v2845
        %v2868 = vmul.f32 %v2837, %v2845
        %v2869 = vmul.f32 %v2844, %v2845
        %v2870 = vsub.f32 %v2533, %v2846
        %v2871 = vsub.f32 %v2534, %v2846
        %v2872 = vsub.f32 %v2535, %v2846
        %v2873 = vsub.f32 %v2536, %v2846
        %v2874 = vsub.f32 %v2537, %v2846
        %v2875 = vsub.f32 %v2538, %v2846
        %v2876 = vsub.f32 %v2539, %v2847
        %v2877 = vsub.f32 %v2540, %v2847
        %v2878 = vsub.f32 %v2541, %v2847
        %v2879 = vsub.f32 %v2542, %v2847
        %v2880 = vsub.f32 %v2543, %v2847
        %v2881 = vsub.f32 %v2544, %v2847
        %v2882 = vsub.f32 %v2545, %v2848
        %v2883 = vsub.f32 %v2546, %v2848
        %v2884 = vsub.f32 %v2547, %v2848
        %v2885 = vsub.f32 %v2548, %v2848
        %v2886 = vsub.f32 %v2549, %v2848
        %v2887 = vsub.f32 %v2550, %v2848
        %v2888 = vsub.f32 %v2551, %v2849
        %v2889 = vsub.f32 %v2552, %v2849
        %v2890 = vsub.f32 %v2553, %v2849
        %v2891 = vsub.f32 %v2554, %v2849
        %v2892 = vsub.f32 %v2555, %v2849
        %v2893 = vsub.f32 %v2556, %v2849
        %v2894 = vsub.f32 %v2557, %v2850
        %v2895 = vsub.f32 %v2558, %v2850
        %v2896 = vsub.f32 %v2559, %v2850
        %v2897 = vsub.f32 %v2560, %v2850
        %v2898 = vsub.f32 %v2561, %v2850
        %v2899 = vsub.f32 %v2562, %v2850
        %v2900 = vsub.f32 %v2563, %v2851
        %v2901 = vsub.f32 %v2564, %v2851
        %v2902 = vsub.f32 %v2565, %v2851
        %v2903 = vsub.f32 %v2566, %v2851
        %v2904 = vsub.f32 %v2567, %v2851
        %v2905 = vsub.f32 %v2568, %v2851
        %v2906 = vsub.f32 %v2569, %v2852
        %v2907 = vsub.f32 %v2570, %v2852
        %v2908 = vsub.f32 %v2571, %v2852
        %v2909 = vsub.f32 %v2572, %v2852
        %v2910 = vsub.f32 %v2573, %v2852
        %v2911 = vsub.f32 %v2574, %v2852
        %v2912 = vsub.f32 %v2575, %v2853
        %v2913 = vsub.f32 %v2576, %v2853
        %v2914 = vsub.f32 %v2577, %v2853
        %v2915 = vsub.f32 %v2578, %v2853
        %v2916 = vsub.f32 %v2579, %v2853
        %v2917 = vsub.f32 %v2580, %v2853
        %v2918 = vsub.f32 %v2581, %v2854
        %v2919 = vsub.f32 %v2582, %v2854
        %v2920 = vsub.f32 %v2583, %v2854
        %v2921 = vsub.f32 %v2584, %v2854
        %v2922 = vsub.f32 %v2585, %v2854
        %v2923 = vsub.f32 %v2586, %v2854
        %v2924 = vsub.f32 %v2587, %v2855
        %v2925 = vsub.f32 %v2588, %v2855
        %v2926 = vsub.f32 %v2589, %v2855
        %v2927 = vsub.f32 %v2590, %v2855
        %v2928 = vsub.f32 %v2591, %v2855
        %v2929 = vsub.f32 %v2592, %v2855
        %v2930 = vsub.f32 %v2593, %v2856
        %v2931 = vsub.f32 %v2594, %v2856
        %v2932 = vsub.f32 %v2595, %v2856
        %v2933 = vsub.f32 %v2596, %v2856
        %v2934 = vsub.f32 %v2597, %v2856
        %v2935 = vsub.f32 %v2598, %v2856
        %v2936 = vsub.f32 %v2599, %v2857
        %v2937 = vsub.f32 %v2600, %v2857
        %v2938 = vsub.f32 %v2601, %v2857
        %v2939 = vsub.f32 %v2602, %v2857
        %v2940 = vsub.f32 %v2603, %v2857
        %v2941 = vsub.f32 %v2604, %v2857
        %v2942 = vsub.f32 %v2605, %v2858
        %v2943 = vsub.f32 %v2606, %v2858
        %v2944 = vsub.f32 %v2607, %v2858
        %v2945 = vsub.f32 %v2608, %v2858
        %v2946 = vsub.f32 %v2609, %v2858
        %v2947 = vsub.f32 %v2610, %v2858
        %v2948 = vsub.f32 %v2611, %v2859
        %v2949 = vsub.f32 %v2612, %v2859
        %v2950 = vsub.f32 %v2613, %v2859
        %v2951 = vsub.f32 %v2614, %v2859
        %v2952 = vsub.f32 %v2615, %v2859
        %v2953 = vsub.f32 %v2616, %v2859
        %v2954 = vsub.f32 %v2617, %v2860
        %v2955 = vsub.f32 %v2618, %v2860
        %v2956 = vsub.f32 %v2619, %v2860
        %v2957 = vsub.f32 %v2620, %v2860
        %v2958 = vsub.f32 %v2621, %v2860
        %v2959 = vsub.f32 %v2622, %v2860
        %v2960 = vsub.f32 %v2623, %v2861
        %v2961 = vsub.f32 %v2624, %v2861
        %v2962 = vsub.f32 %v2625, %v2861
        %v2963 = vsub.f32 %v2626, %v2861
        %v2964 = vsub.f32 %v2627, %v2861
        %v2965 = vsub.f32 %v2628, %v2861
        %v2966 = vsub.f32 %v2629, %v2862
        %v2967 = vsub.f32 %v2630, %v2862
        %v2968 = vsub.f32 %v2631, %v2862
        %v2969 = vsub.f32 %v2632, %v2862
        %v2970 = vsub.f32 %v2633, %v2862
        %v2971 = vsub.f32 %v2634, %v2862
        %v2972 = vsub.f32 %v2635, %v2863
        %v2973 = vsub.f32 %v2636, %v2863
        %v2974 = vsub.f32 %v2637, %v2863
        %v2975 = vsub.f32 %v2638, %v2863
        %v2976 = vsub.f32 %v2639, %v2863
        %v2977 = vsub.f32 %v2640, %v2863
        %v2978 = vsub.f32 %v2641, %v2864
        %v2979 = vsub.f32 %v2642, %v2864
        %v2980 = vsub.f32 %v2643, %v2864
        %v2981 = vsub.f32 %v2644, %v2864
        %v2982 = vsub.f32 %v2645, %v2864
        %v2983 = vsub.f32 %v2646, %v2864
        %v2984 = vsub.f32 %v2647, %v2865
        %v2985 = vsub.f32 %v2648, %v2865
        %v2986 = vsub.f32 %v2649, %v2865
        %v2987 = vsub.f32 %v2650, %v2865
        %v2988 = vsub.f32 %v2651, %v2865
        %v2989 = vsub.f32 %v2652, %v2865
        %v2990 = vsub.f32 %v2653, %v2866
        %v2991 = vsub.f32 %v2654, %v2866
        %v2992 = vsub.f32 %v2655, %v2866
        %v2993 = vsub.f32 %v2656, %v2866
        %v2994 = vsub.f32 %v2657, %v2866
        %v2995 = vsub.f32 %v2658, %v2866
        %v2996 = vsub.f32 %v2659, %v2867
        %v2997 = vsub.f32 %v2660, %v2867
        %v2998 = vsub.f32 %v2661, %v2867
        %v2999 = vsub.f32 %v2662, %v2867
        %v3000 = vsub.f32 %v2663, %v2867
        %v3001 = vsub.f32 %v2664, %v2867
        %v3002 = vsub.f32 %v2665, %v2868
        %v3003 = vsub.f32 %v2666, %v2868
        %v3004 = vsub.f32 %v2667, %v2868
        %v3005 = vsub.f32 %v2668, %v2868
        %v3006 = vsub.f32 %v2669, %v2868
        %v3007 = vsub.f32 %v2670, %v2868
        %v3008 = vsub.f32 %v2671, %v2869
        %v3009 = vsub.f32 %v2672, %v2869
        %v3010 = vsub.f32 %v2673, %v2869
        %v3011 = vsub.f32 %v2674, %v2869
        %v3012 = vsub.f32 %v2675, %v2869
        %v3013 = vsub.f32 %v2676, %v2869
        %v3014 = vmul.f32 %v2870, %v2870
        %v3015 = vmul.f32 %v2871, %v2871
        %v3016 = vmul.f32 %v2872, %v2872
        %v3017 = vmul.f32 %v2873, %v2873
        %v3018 = vmul.f32 %v2874, %v2874
        %v3019 = vmul.f32 %v2875, %v2875
        %v3020 = vmul.f32 %v2876, %v2876
        %v3021 = vmul.f32 %v2877, %v2877
        %v3022 = vmul.f32 %v2878, %v2878
        %v3023 = vmul.f32 %v2879, %v2879
        %v3024 = vmul.f32 %v2880, %v2880
        %v3025 = vmul.f32 %v2881, %v2881
        %v3026 = vmul.f32 %v2882, %v2882
        %v3027 = vmul.f32 %v2883, %v2883
        %v3028 = vmul.f32 %v2884, %v2884
        %v3029 = vmul.f32 %v2885, %v2885
        %v3030 = vmul.f32 %v2886, %v2886
        %v3031 = vmul.f32 %v2887, %v2887
        %v3032 = vmul.f32 %v2888, %v2888
        %v3033 = vmul.f32 %v2889, %v2889
        %v3034 = vmul.f32 %v2890, %v2890
        %v3035 = vmul.f32 %v2891, %v2891
        %v3036 = vmul.f32 %v2892, %v2892
        %v3037 = vmul.f32 %v2893, %v2893
        %v3038 = vmul.f32 %v2894, %v2894
        %v3039 = vmul.f32 %v2895, %v2895
        %v3040 = vmul.f32 %v2896, %v2896
        %v3041 = vmul.f32 %v2897, %v2897
        %v3042 = vmul.f32 %v2898, %v2898
        %v3043 = vmul.f32 %v2899, %v2899
        %v3044 = vmul.f32 %v2900, %v2900
        %v3045 = vmul.f32 %v2901, %v2901
        %v3046 = vmul.f32 %v2902, %v2902
        %v3047 = vmul.f32 %v2903, %v2903
        %v3048 = vmul.f32 %v2904, %v2904
        %v3049 = vmul.f32 %v2905, %v2905
        %v3050 = vmul.f32 %v2906, %v2906
        %v3051 = vmul.f32 %v2907, %v2907
        %v3052 = vmul.f32 %v2908, %v2908
        %v3053 = vmul.f32 %v2909, %v2909
        %v3054 = vmul.f32 %v2910, %v2910
        %v3055 = vmul.f32 %v2911, %v2911
        %v3056 = vmul.f32 %v2912, %v2912
        %v3057 = vmul.f32 %v2913, %v2913
        %v3058 = vmul.f32 %v2914, %v2914
        %v3059 = vmul.f32 %v2915, %v2915
        %v3060 = vmul.f32 %v2916, %v2916
        %v3061 = vmul.f32 %v2917, %v2917
        %v3062 = vmul.f32 %v2918, %v2918
        %v3063 = vmul.f32 %v2919, %v2919
        %v3064 = vmul.f32 %v2920, %v2920
        %v3065 = vmul.f32 %v2921, %v2921
        %v3066 = vmul.f32 %v2922, %v2922
        %v3067 = vmul.f32 %v2923, %v2923
        %v3068 = vmul.f32 %v2924, %v2924
        %v3069 = vmul.f32 %v2925, %v2925
        %v3070 = vmul.f32 %v2926, %v2926
        %v3071 = vmul.f32 %v2927, %v2927
        %v3072 = vmul.f32 %v2928, %v2928
        %v3073 = vmul.f32 %v2929, %v2929
        %v3074 = vmul.f32 %v2930, %v2930
        %v3075 = vmul.f32 %v2931, %v2931
        %v3076 = vmul.f32 %v2932, %v2932
        %v3077 = vmul.f32 %v2933, %v2933
        %v3078 = vmul.f32 %v2934, %v2934
        %v3079 = vmul.f32 %v2935, %v2935
        %v3080 = vmul.f32 %v2936, %v2936
        %v3081 = vmul.f32 %v2937, %v2937
        %v3082 = vmul.f32 %v2938, %v2938
        %v3083 = vmul.f32 %v2939, %v2939
        %v3084 = vmul.f32 %v2940, %v2940
        %v3085 = vmul.f32 %v2941, %v2941
        %v3086 = vmul.f32 %v2942, %v2942
        %v3087 = vmul.f32 %v2943, %v2943
        %v3088 = vmul.f32 %v2944, %v2944
        %v3089 = vmul.f32 %v2945, %v2945
        %v3090 = vmul.f32 %v2946, %v2946
        %v3091 = vmul.f32 %v2947, %v2947
        %v3092 = vmul.f32 %v2948, %v2948
        %v3093 = vmul.f32 %v2949, %v2949
        %v3094 = vmul.f32 %v2950, %v2950
        %v3095 = vmul.f32 %v2951, %v2951
        %v3096 = vmul.f32 %v2952, %v2952
        %v3097 = vmul.f32 %v2953, %v2953
        %v3098 = vmul.f32 %v2954, %v2954
        %v3099 = vmul.f32 %v2955, %v2955
        %v3100 = vmul.f32 %v2956, %v2956
        %v3101 = vmul.f32 %v2957, %v2957
        %v3102 = vmul.f32 %v2958, %v2958
        %v3103 = vmul.f32 %v2959, %v2959
        %v3104 = vmul.f32 %v2960, %v2960
        %v3105 = vmul.f32 %v2961, %v2961
        %v3106 = vmul.f32 %v2962, %v2962
        %v3107 = vmul.f32 %v2963, %v2963
        %v3108 = vmul.f32 %v2964, %v2964
        %v3109 = vmul.f32 %v2965, %v2965
        %v3110 = vmul.f32 %v2966, %v2966
        %v3111 = vmul.f32 %v2967, %v2967
        %v3112 = vmul.f32 %v2968, %v2968
        %v3113 = vmul.f32 %v2969, %v2969
        %v3114 = vmul.f32 %v2970, %v2970
        %v3115 = vmul.f32 %v2971, %v2971
        %v3116 = vmul.f32 %v2972, %v2972
        %v3117 = vmul.f32 %v2973, %v2973
        %v3118 = vmul.f32 %v2974, %v2974
        %v3119 = vmul.f32 %v2975, %v2975
        %v3120 = vmul.f32 %v2976, %v2976
        %v3121 = vmul.f32 %v2977, %v2977
        %v3122 = vmul.f32 %v2978, %v2978
        %v3123 = vmul.f32 %v2979, %v2979
        %v3124 = vmul.f32 %v2980, %v2980
        %v3125 = vmul.f32 %v2981, %v2981
        %v3126 = vmul.f32 %v2982, %v2982
        %v3127 = vmul.f32 %v2983, %v2983
        %v3128 = vmul.f32 %v2984, %v2984
        %v3129 = vmul.f32 %v2985, %v2985
        %v3130 = vmul.f32 %v2986, %v2986
        %v3131 = vmul.f32 %v2987, %v2987
        %v3132 = vmul.f32 %v2988, %v2988
        %v3133 = vmul.f32 %v2989, %v2989
        %v3134 = vmul.f32 %v2990, %v2990
        %v3135 = vmul.f32 %v2991, %v2991
        %v3136 = vmul.f32 %v2992, %v2992
        %v3137 = vmul.f32 %v2993, %v2993
        %v3138 = vmul.f32 %v2994, %v2994
        %v3139 = vmul.f32 %v2995, %v2995
        %v3140 = vmul.f32 %v2996, %v2996
        %v3141 = vmul.f32 %v2997, %v2997
        %v3142 = vmul.f32 %v2998, %v2998
        %v3143 = vmul.f32 %v2999, %v2999
        %v3144 = vmul.f32 %v3000, %v3000
        %v3145 = vmul.f32 %v3001, %v3001
        %v3146 = vmul.f32 %v3002, %v3002
        %v3147 = vmul.f32 %v3003, %v3003
        %v3148 = vmul.f32 %v3004, %v3004
        %v3149 = vmul.f32 %v3005, %v3005
        %v3150 = vmul.f32 %v3006, %v3006
        %v3151 = vmul.f32 %v3007, %v3007
        %v3152 = vmul.f32 %v3008, %v3008
        %v3153 = vmul.f32 %v3009, %v3009
        %v3154 = vmul.f32 %v3010, %v3010
        %v3155 = vmul.f32 %v3011, %v3011
        %v3156 = vmul.f32 %v3012, %v3012
        %v3157 = vmul.f32 %v3013, %v3013
        %v3158 = vadd.f32 %v3014, %v3015
        %v3159 = vadd.f32 %v3158, %v3016
        %v3160 = vadd.f32 %v3159, %v3017
        %v3161 = vadd.f32 %v3160, %v3018
        %v3162 = vadd.f32 %v3161, %v3019
        %3163 = vadd.xlane.f32.xlu0 %v3162
        %v3164 = vpop.xlane.xlu0 %3163
        %v3165 = vadd.f32 %v3020, %v3021
        %v3166 = vadd.f32 %v3165, %v3022
        %v3167 = vadd.f32 %v3166, %v3023
        %v3168 = vadd.f32 %v3167, %v3024
        %v3169 = vadd.f32 %v3168, %v3025
        %3170 = vadd.xlane.f32.xlu0 %v3169
        %v3171 = vpop.xlane.xlu0 %3170
        %v3172 = vadd.f32 %v3026, %v3027
        %v3173 = vadd.f32 %v3172, %v3028
        %v3174 = vadd.f32 %v3173, %v3029
        %v3175 = vadd.f32 %v3174, %v3030
        %v3176 = vadd.f32 %v3175, %v3031
        %3177 = vadd.xlane.f32.xlu0 %v3176
        %v3178 = vpop.xlane.xlu0 %3177
        %v3179 = vadd.f32 %v3032, %v3033
        %v3180 = vadd.f32 %v3179, %v3034
        %v3181 = vadd.f32 %v3180, %v3035
        %v3182 = vadd.f32 %v3181, %v3036
        %v3183 = vadd.f32 %v3182, %v3037
        %3184 = vadd.xlane.f32.xlu0 %v3183
        %v3185 = vpop.xlane.xlu0 %3184
        %v3186 = vadd.f32 %v3038, %v3039
        %v3187 = vadd.f32 %v3186, %v3040
        %v3188 = vadd.f32 %v3187, %v3041
        %v3189 = vadd.f32 %v3188, %v3042
        %v3190 = vadd.f32 %v3189, %v3043
        %3191 = vadd.xlane.f32.xlu0 %v3190
        %v3192 = vpop.xlane.xlu0 %3191
        %v3193 = vadd.f32 %v3044, %v3045
        %v3194 = vadd.f32 %v3193, %v3046
        %v3195 = vadd.f32 %v3194, %v3047
        %v3196 = vadd.f32 %v3195, %v3048
        %v3197 = vadd.f32 %v3196, %v3049
        %3198 = vadd.xlane.f32.xlu0 %v3197
        %v3199 = vpop.xlane.xlu0 %3198
        %v3200 = vadd.f32 %v3050, %v3051
        %v3201 = vadd.f32 %v3200, %v3052
        %v3202 = vadd.f32 %v3201, %v3053
        %v3203 = vadd.f32 %v3202, %v3054
        %v3204 = vadd.f32 %v3203, %v3055
        %3205 = vadd.xlane.f32.xlu0 %v3204
        %v3206 = vpop.xlane.xlu0 %3205
        %v3207 = vadd.f32 %v3056, %v3057
        %v3208 = vadd.f32 %v3207, %v3058
        %v3209 = vadd.f32 %v3208, %v3059
        %v3210 = vadd.f32 %v3209, %v3060
        %v3211 = vadd.f32 %v3210, %v3061
        %3212 = vadd.xlane.f32.xlu0 %v3211
        %v3213 = vpop.xlane.xlu0 %3212
        %v3214 = vadd.f32 %v3062, %v3063
        %v3215 = vadd.f32 %v3214, %v3064
        %v3216 = vadd.f32 %v3215, %v3065
        %v3217 = vadd.f32 %v3216, %v3066
        %v3218 = vadd.f32 %v3217, %v3067
        %3219 = vadd.xlane.f32.xlu0 %v3218
        %v3220 = vpop.xlane.xlu0 %3219
        %v3221 = vadd.f32 %v3068, %v3069
        %v3222 = vadd.f32 %v3221, %v3070
        %v3223 = vadd.f32 %v3222, %v3071
        %v3224 = vadd.f32 %v3223, %v3072
        %v3225 = vadd.f32 %v3224, %v3073
        %3226 = vadd.xlane.f32.xlu0 %v3225
        %v3227 = vpop.xlane.xlu0 %3226
        %v3228 = vadd.f32 %v3074, %v3075
        %v3229 = vadd.f32 %v3228, %v3076
        %v3230 = vadd.f32 %v3229, %v3077
        %v3231 = vadd.f32 %v3230, %v3078
        %v3232 = vadd.f32 %v3231, %v3079
        %3233 = vadd.xlane.f32.xlu0 %v3232
        %v3234 = vpop.xlane.xlu0 %3233
        %v3235 = vadd.f32 %v3080, %v3081
        %v3236 = vadd.f32 %v3235, %v3082
        %v3237 = vadd.f32 %v3236, %v3083
        %v3238 = vadd.f32 %v3237, %v3084
        %v3239 = vadd.f32 %v3238, %v3085
        %3240 = vadd.xlane.f32.xlu0 %v3239
        %v3241 = vpop.xlane.xlu0 %3240
        %v3242 = vadd.f32 %v3086, %v3087
        %v3243 = vadd.f32 %v3242, %v3088
        %v3244 = vadd.f32 %v3243, %v3089
        %v3245 = vadd.f32 %v3244, %v3090
        %v3246 = vadd.f32 %v3245, %v3091
        %3247 = vadd.xlane.f32.xlu0 %v3246
        %v3248 = vpop.xlane.xlu0 %3247
        %v3249 = vadd.f32 %v3092, %v3093
        %v3250 = vadd.f32 %v3249, %v3094
        %v3251 = vadd.f32 %v3250, %v3095
        %v3252 = vadd.f32 %v3251, %v3096
        %v3253 = vadd.f32 %v3252, %v3097
        %3254 = vadd.xlane.f32.xlu0 %v3253
        %v3255 = vpop.xlane.xlu0 %3254
        %v3256 = vadd.f32 %v3098, %v3099
        %v3257 = vadd.f32 %v3256, %v3100
        %v3258 = vadd.f32 %v3257, %v3101
        %v3259 = vadd.f32 %v3258, %v3102
        %v3260 = vadd.f32 %v3259, %v3103
        %3261 = vadd.xlane.f32.xlu0 %v3260
        %v3262 = vpop.xlane.xlu0 %3261
        %v3263 = vadd.f32 %v3104, %v3105
        %v3264 = vadd.f32 %v3263, %v3106
        %v3265 = vadd.f32 %v3264, %v3107
        %v3266 = vadd.f32 %v3265, %v3108
        %v3267 = vadd.f32 %v3266, %v3109
        %3268 = vadd.xlane.f32.xlu0 %v3267
        %v3269 = vpop.xlane.xlu0 %3268
        %v3270 = vadd.f32 %v3110, %v3111
        %v3271 = vadd.f32 %v3270, %v3112
        %v3272 = vadd.f32 %v3271, %v3113
        %v3273 = vadd.f32 %v3272, %v3114
        %v3274 = vadd.f32 %v3273, %v3115
        %3275 = vadd.xlane.f32.xlu0 %v3274
        %v3276 = vpop.xlane.xlu0 %3275
        %v3277 = vadd.f32 %v3116, %v3117
        %v3278 = vadd.f32 %v3277, %v3118
        %v3279 = vadd.f32 %v3278, %v3119
        %v3280 = vadd.f32 %v3279, %v3120
        %v3281 = vadd.f32 %v3280, %v3121
        %3282 = vadd.xlane.f32.xlu0 %v3281
        %v3283 = vpop.xlane.xlu0 %3282
        %v3284 = vadd.f32 %v3122, %v3123
        %v3285 = vadd.f32 %v3284, %v3124
        %v3286 = vadd.f32 %v3285, %v3125
        %v3287 = vadd.f32 %v3286, %v3126
        %v3288 = vadd.f32 %v3287, %v3127
        %3289 = vadd.xlane.f32.xlu0 %v3288
        %v3290 = vpop.xlane.xlu0 %3289
        %v3291 = vadd.f32 %v3128, %v3129
        %v3292 = vadd.f32 %v3291, %v3130
        %v3293 = vadd.f32 %v3292, %v3131
        %v3294 = vadd.f32 %v3293, %v3132
        %v3295 = vadd.f32 %v3294, %v3133
        %3296 = vadd.xlane.f32.xlu0 %v3295
        %v3297 = vpop.xlane.xlu0 %3296
        %v3298 = vadd.f32 %v3134, %v3135
        %v3299 = vadd.f32 %v3298, %v3136
        %v3300 = vadd.f32 %v3299, %v3137
        %v3301 = vadd.f32 %v3300, %v3138
        %v3302 = vadd.f32 %v3301, %v3139
        %3303 = vadd.xlane.f32.xlu0 %v3302
        %v3304 = vpop.xlane.xlu0 %3303
        %v3305 = vadd.f32 %v3140, %v3141
        %v3306 = vadd.f32 %v3305, %v3142
        %v3307 = vadd.f32 %v3306, %v3143
        %v3308 = vadd.f32 %v3307, %v3144
        %v3309 = vadd.f32 %v3308, %v3145
        %3310 = vadd.xlane.f32.xlu0 %v3309
        %v3311 = vpop.xlane.xlu0 %3310
        %v3312 = vadd.f32 %v3146, %v3147
        %v3313 = vadd.f32 %v3312, %v3148
        %v3314 = vadd.f32 %v3313, %v3149
        %v3315 = vadd.f32 %v3314, %v3150
        %v3316 = vadd.f32 %v3315, %v3151
        %3317 = vadd.xlane.f32.xlu0 %v3316
        %v3318 = vpop.xlane.xlu0 %3317
        %v3319 = vadd.f32 %v3152, %v3153
        %v3320 = vadd.f32 %v3319, %v3154
        %v3321 = vadd.f32 %v3320, %v3155
        %v3322 = vadd.f32 %v3321, %v3156
        %v3323 = vadd.f32 %v3322, %v3157
        %3324 = vadd.xlane.f32.xlu0 %v3323
        %v3325 = vpop.xlane.xlu0 %3324
        %v3326 = vmul.f32 %v3164, %v2845
        %v3327 = vmul.f32 %v3171, %v2845
        %v3328 = vmul.f32 %v3178, %v2845
        %v3329 = vmul.f32 %v3185, %v2845
        %v3330 = vmul.f32 %v3192, %v2845
        %v3331 = vmul.f32 %v3199, %v2845
        %v3332 = vmul.f32 %v3206, %v2845
        %v3333 = vmul.f32 %v3213, %v2845
        %v3334 = vmul.f32 %v3220, %v2845
        %v3335 = vmul.f32 %v3227, %v2845
        %v3336 = vmul.f32 %v3234, %v2845
        %v3337 = vmul.f32 %v3241, %v2845
        %v3338 = vmul.f32 %v3248, %v2845
        %v3339 = vmul.f32 %v3255, %v2845
        %v3340 = vmul.f32 %v3262, %v2845
        %v3341 = vmul.f32 %v3269, %v2845
        %v3342 = vmul.f32 %v3276, %v2845
        %v3343 = vmul.f32 %v3283, %v2845
        %v3344 = vmul.f32 %v3290, %v2845
        %v3345 = vmul.f32 %v3297, %v2845
        %v3346 = vmul.f32 %v3304, %v2845
        %v3347 = vmul.f32 %v3311, %v2845
        %v3348 = vmul.f32 %v3318, %v2845
        %v3349 = vmul.f32 %v3325, %v2845
        %v3350 = vadd.f32 %v3326, 1e-12
        %v3351 = vadd.f32 %v3327, 1e-12
        %v3352 = vadd.f32 %v3328, 1e-12
        %v3353 = vadd.f32 %v3329, 1e-12
        %v3354 = vadd.f32 %v3330, 1e-12
        %v3355 = vadd.f32 %v3331, 1e-12
        %v3356 = vadd.f32 %v3332, 1e-12
        %v3357 = vadd.f32 %v3333, 1e-12
        %v3358 = vadd.f32 %v3334, 1e-12
        %v3359 = vadd.f32 %v3335, 1e-12
        %v3360 = vadd.f32 %v3336, 1e-12
        %v3361 = vadd.f32 %v3337, 1e-12
        %v3362 = vadd.f32 %v3338, 1e-12
        %v3363 = vadd.f32 %v3339, 1e-12
        %v3364 = vadd.f32 %v3340, 1e-12
        %v3365 = vadd.f32 %v3341, 1e-12
        %v3366 = vadd.f32 %v3342, 1e-12
        %v3367 = vadd.f32 %v3343, 1e-12
        %v3368 = vadd.f32 %v3344, 1e-12
        %v3369 = vadd.f32 %v3345, 1e-12
        %v3370 = vadd.f32 %v3346, 1e-12
        %v3371 = vadd.f32 %v3347, 1e-12
        %v3372 = vadd.f32 %v3348, 1e-12
        %v3373 = vadd.f32 %v3349, 1e-12
        %v3374 = vrsqrt.pop %v3350
        %v3375 = vrsqrt.pop %v3351
        %v3376 = vrsqrt.pop %v3352
        %v3377 = vrsqrt.pop %v3353
        %v3378 = vrsqrt.pop %v3354
        %v3379 = vrsqrt.pop %v3355
        %v3380 = vrsqrt.pop %v3356
        %v3381 = vrsqrt.pop %v3357
        %v3382 = vrsqrt.pop %v3358
        %v3383 = vrsqrt.pop %v3359
        %v3384 = vrsqrt.pop %v3360
        %v3385 = vrsqrt.pop %v3361
        %v3386 = vrsqrt.pop %v3362
        %v3387 = vrsqrt.pop %v3363
        %v3388 = vrsqrt.pop %v3364
        %v3389 = vrsqrt.pop %v3365
        %v3390 = vrsqrt.pop %v3366
        %v3391 = vrsqrt.pop %v3367
        %v3392 = vrsqrt.pop %v3368
        %v3393 = vrsqrt.pop %v3369
        %v3394 = vrsqrt.pop %v3370
        %v3395 = vrsqrt.pop %v3371
        %v3396 = vrsqrt.pop %v3372
        %v3397 = vrsqrt.pop %v3373
        %v3398 = vld [vmem:[#allocation9] sm:$0x3f]
        %v3399 = vld [vmem:[#allocation10] sm:$0x3f]
        %v3400 = vmul.f32 %v2870, %v3374
        %v3401 = vmul.f32 %v2871, %v3374
        %v3402 = vmul.f32 %v2872, %v3374
        %v3403 = vmul.f32 %v2873, %v3374
        %v3404 = vmul.f32 %v2874, %v3374
        %v3405 = vmul.f32 %v2875, %v3374
        %v3406 = vmul.f32 %v2876, %v3375
        %v3407 = vmul.f32 %v2877, %v3375
        %v3408 = vmul.f32 %v2878, %v3375
        %v3409 = vmul.f32 %v2879, %v3375
        %v3410 = vmul.f32 %v2880, %v3375
        %v3411 = vmul.f32 %v2881, %v3375
        %v3412 = vmul.f32 %v2882, %v3376
        %v3413 = vmul.f32 %v2883, %v3376
        %v3414 = vmul.f32 %v2884, %v3376
        %v3415 = vmul.f32 %v2885, %v3376
        %v3416 = vmul.f32 %v2886, %v3376
        %v3417 = vmul.f32 %v2887, %v3376
        %v3418 = vmul.f32 %v2888, %v3377
        %v3419 = vmul.f32 %v2889, %v3377
        %v3420 = vmul.f32 %v2890, %v3377
        %v3421 = vmul.f32 %v2891, %v3377
        %v3422 = vmul.f32 %v2892, %v3377
        %v3423 = vmul.f32 %v2893, %v3377
        %v3424 = vmul.f32 %v2894, %v3378
        %v3425 = vmul.f32 %v2895, %v3378
        %v3426 = vmul.f32 %v2896, %v3378
        %v3427 = vmul.f32 %v2897, %v3378
        %v3428 = vmul.f32 %v2898, %v3378
        %v3429 = vmul.f32 %v2899, %v3378
        %v3430 = vmul.f32 %v2900, %v3379
        %v3431 = vmul.f32 %v2901, %v3379
        %v3432 = vmul.f32 %v2902, %v3379
        %v3433 = vmul.f32 %v2903, %v3379
        %v3434 = vmul.f32 %v2904, %v3379
        %v3435 = vmul.f32 %v2905, %v3379
        %v3436 = vmul.f32 %v2906, %v3380
        %v3437 = vmul.f32 %v2907, %v3380
        %v3438 = vmul.f32 %v2908, %v3380
        %v3439 = vmul.f32 %v2909, %v3380
        %v3440 = vmul.f32 %v2910, %v3380
        %v3441 = vmul.f32 %v2911, %v3380
        %v3442 = vmul.f32 %v2912, %v3381
        %v3443 = vmul.f32 %v2913, %v3381
        %v3444 = vmul.f32 %v2914, %v3381
        %v3445 = vmul.f32 %v2915, %v3381
        %v3446 = vmul.f32 %v2916, %v3381
        %v3447 = vmul.f32 %v2917, %v3381
        %v3448 = vmul.f32 %v2918, %v3382
        %v3449 = vmul.f32 %v2919, %v3382
        %v3450 = vmul.f32 %v2920, %v3382
        %v3451 = vmul.f32 %v2921, %v3382
        %v3452 = vmul.f32 %v2922, %v3382
        %v3453 = vmul.f32 %v2923, %v3382
        %v3454 = vmul.f32 %v2924, %v3383
        %v3455 = vmul.f32 %v2925, %v3383
        %v3456 = vmul.f32 %v2926, %v3383
        %v3457 = vmul.f32 %v2927, %v3383
        %v3458 = vmul.f32 %v2928, %v3383
        %v3459 = vmul.f32 %v2929, %v3383
        %v3460 = vmul.f32 %v2930, %v3384
        %v3461 = vmul.f32 %v2931, %v3384
        %v3462 = vmul.f32 %v2932, %v3384
        %v3463 = vmul.f32 %v2933, %v3384
        %v3464 = vmul.f32 %v2934, %v3384
        %v3465 = vmul.f32 %v2935, %v3384
        %v3466 = vmul.f32 %v2936, %v3385
        %v3467 = vmul.f32 %v2937, %v3385
        %v3468 = vmul.f32 %v2938, %v3385
        %v3469 = vmul.f32 %v2939, %v3385
        %v3470 = vmul.f32 %v2940, %v3385
        %v3471 = vmul.f32 %v2941, %v3385
        %v3472 = vmul.f32 %v2942, %v3386
        %v3473 = vmul.f32 %v2943, %v3386
        %v3474 = vmul.f32 %v2944, %v3386
        %v3475 = vmul.f32 %v2945, %v3386
        %v3476 = vmul.f32 %v2946, %v3386
        %v3477 = vmul.f32 %v2947, %v3386
        %v3478 = vmul.f32 %v2948, %v3387
        %v3479 = vmul.f32 %v2949, %v3387
        %v3480 = vmul.f32 %v2950, %v3387
        %v3481 = vmul.f32 %v2951, %v3387
        %v3482 = vmul.f32 %v2952, %v3387
        %v3483 = vmul.f32 %v2953, %v3387
        %v3484 = vmul.f32 %v2954, %v3388
        %v3485 = vmul.f32 %v2955, %v3388
        %v3486 = vmul.f32 %v2956, %v3388
        %v3487 = vmul.f32 %v2957, %v3388
        %v3488 = vmul.f32 %v2958, %v3388
        %v3489 = vmul.f32 %v2959, %v3388
        %v3490 = vmul.f32 %v2960, %v3389
        %v3491 = vmul.f32 %v2961, %v3389
        %v3492 = vmul.f32 %v2962, %v3389
        %v3493 = vmul.f32 %v2963, %v3389
        %v3494 = vmul.f32 %v2964, %v3389
        %v3495 = vmul.f32 %v2965, %v3389
        %v3496 = vmul.f32 %v2966, %v3390
        %v3497 = vmul.f32 %v2967, %v3390
        %v3498 = vmul.f32 %v2968, %v3390
        %v3499 = vmul.f32 %v2969, %v3390
        %v3500 = vmul.f32 %v2970, %v3390
        %v3501 = vmul.f32 %v2971, %v3390
        %v3502 = vmul.f32 %v2972, %v3391
        %v3503 = vmul.f32 %v2973, %v3391
        %v3504 = vmul.f32 %v2974, %v3391
        %v3505 = vmul.f32 %v2975, %v3391
        %v3506 = vmul.f32 %v2976, %v3391
        %v3507 = vmul.f32 %v2977, %v3391
        %v3508 = vmul.f32 %v2978, %v3392
        %v3509 = vmul.f32 %v2979, %v3392
        %v3510 = vmul.f32 %v2980, %v3392
        %v3511 = vmul.f32 %v2981, %v3392
        %v3512 = vmul.f32 %v2982, %v3392
        %v3513 = vmul.f32 %v2983, %v3392
        %v3514 = vmul.f32 %v2984, %v3393
        %v3515 = vmul.f32 %v2985, %v3393
        %v3516 = vmul.f32 %v2986, %v3393
        %v3517 = vmul.f32 %v2987, %v3393
        %v3518 = vmul.f32 %v2988, %v3393
        %v3519 = vmul.f32 %v2989, %v3393
        %v3520 = vmul.f32 %v2990, %v3394
        %v3521 = vmul.f32 %v2991, %v3394
        %v3522 = vmul.f32 %v2992, %v3394
        %v3523 = vmul.f32 %v2993, %v3394
        %v3524 = vmul.f32 %v2994, %v3394
        %v3525 = vmul.f32 %v2995, %v3394
        %v3526 = vmul.f32 %v2996, %v3395
        %v3527 = vmul.f32 %v2997, %v3395
        %v3528 = vmul.f32 %v2998, %v3395
        %v3529 = vmul.f32 %v2999, %v3395
        %v3530 = vmul.f32 %v3000, %v3395
        %v3531 = vmul.f32 %v3001, %v3395
        %v3532 = vmul.f32 %v3002, %v3396
        %v3533 = vmul.f32 %v3003, %v3396
        %v3534 = vmul.f32 %v3004, %v3396
        %v3535 = vmul.f32 %v3005, %v3396
        %v3536 = vmul.f32 %v3006, %v3396
        %v3537 = vmul.f32 %v3007, %v3396
        %v3538 = vmul.f32 %v3008, %v3397
        %v3539 = vmul.f32 %v3009, %v3397
        %v3540 = vmul.f32 %v3010, %v3397
        %v3541 = vmul.f32 %v3011, %v3397
        %v3542 = vmul.f32 %v3012, %v3397
        %v3543 = vmul.f32 %v3013, %v3397
        %v3545 = vlaneseq
        %v3546 = vshrl.u32 %v3545, 7
        %v3547 = vsub.s32 0, %v3546
        %v3548 = vrot.slane %v3398, %v3547
        %v3549 = vlaneseq
        %v3550 = vshrl.u32 %v3549, 7
        %v3551 = vsub.s32 1, %v3550
        %v3552 = vrot.slane %v3398, %v3551
        %v3553 = vlaneseq
        %v3554 = vshrl.u32 %v3553, 7
        %v3555 = vsub.s32 2, %v3554
        %v3556 = vrot.slane %v3398, %v3555
        %v3557 = vlaneseq
        %v3558 = vshrl.u32 %v3557, 7
        %v3559 = vsub.s32 3, %v3558
        %v3560 = vrot.slane %v3398, %v3559
        %v3561 = vlaneseq
        %v3562 = vshrl.u32 %v3561, 7
        %v3563 = vsub.s32 4, %v3562
        %v3564 = vrot.slane %v3398, %v3563
        %v3565 = vlaneseq
        %v3566 = vshrl.u32 %v3565, 7
        %v3567 = vsub.s32 5, %v3566
        %v3568 = vrot.slane %v3398, %v3567
        %v3575 = vmul.f32 %v3400, %v3548
        %v3576 = vmul.f32 %v3401, %v3552
        %v3577 = vmul.f32 %v3402, %v3556
        %v3578 = vmul.f32 %v3403, %v3560
        %v3579 = vmul.f32 %v3404, %v3564
        %v3580 = vmul.f32 %v3405, %v3568
        %v3581 = vmul.f32 %v3406, %v3548
        %v3582 = vmul.f32 %v3407, %v3552
        %v3583 = vmul.f32 %v3408, %v3556
        %v3584 = vmul.f32 %v3409, %v3560
        %v3585 = vmul.f32 %v3410, %v3564
        %v3586 = vmul.f32 %v3411, %v3568
        %v3587 = vmul.f32 %v3412, %v3548
        %v3588 = vmul.f32 %v3413, %v3552
        %v3589 = vmul.f32 %v3414, %v3556
        %v3590 = vmul.f32 %v3415, %v3560
        %v3591 = vmul.f32 %v3416, %v3564
        %v3592 = vmul.f32 %v3417, %v3568
        %v3593 = vmul.f32 %v3418, %v3548
        %v3594 = vmul.f32 %v3419, %v3552
        %v3595 = vmul.f32 %v3420, %v3556
        %v3596 = vmul.f32 %v3421, %v3560
        %v3597 = vmul.f32 %v3422, %v3564
        %v3598 = vmul.f32 %v3423, %v3568
        %v3599 = vmul.f32 %v3424, %v3548
        %v3600 = vmul.f32 %v3425, %v3552
        %v3601 = vmul.f32 %v3426, %v3556
        %v3602 = vmul.f32 %v3427, %v3560
        %v3603 = vmul.f32 %v3428, %v3564
        %v3604 = vmul.f32 %v3429, %v3568
        %v3605 = vmul.f32 %v3430, %v3548
        %v3606 = vmul.f32 %v3431, %v3552
        %v3607 = vmul.f32 %v3432, %v3556
        %v3608 = vmul.f32 %v3433, %v3560
        %v3609 = vmul.f32 %v3434, %v3564
        %v3610 = vmul.f32 %v3435, %v3568
        %v3611 = vmul.f32 %v3436, %v3548
        %v3612 = vmul.f32 %v3437, %v3552
        %v3613 = vmul.f32 %v3438, %v3556
        %v3614 = vmul.f32 %v3439, %v3560
        %v3615 = vmul.f32 %v3440, %v3564
        %v3616 = vmul.f32 %v3441, %v3568
        %v3617 = vmul.f32 %v3442, %v3548
        %v3618 = vmul.f32 %v3443, %v3552
        %v3619 = vmul.f32 %v3444, %v3556
        %v3620 = vmul.f32 %v3445, %v3560
        %v3621 = vmul.f32 %v3446, %v3564
        %v3622 = vmul.f32 %v3447, %v3568
        %v3623 = vmul.f32 %v3448, %v3548
        %v3624 = vmul.f32 %v3449, %v3552
        %v3625 = vmul.f32 %v3450, %v3556
        %v3626 = vmul.f32 %v3451, %v3560
        %v3627 = vmul.f32 %v3452, %v3564
        %v3628 = vmul.f32 %v3453, %v3568
        %v3629 = vmul.f32 %v3454, %v3548
        %v3630 = vmul.f32 %v3455, %v3552
        %v3631 = vmul.f32 %v3456, %v3556
        %v3632 = vmul.f32 %v3457, %v3560
        %v3633 = vmul.f32 %v3458, %v3564
        %v3634 = vmul.f32 %v3459, %v3568
        %v3635 = vmul.f32 %v3460, %v3548
        %v3636 = vmul.f32 %v3461, %v3552
        %v3637 = vmul.f32 %v3462, %v3556
        %v3638 = vmul.f32 %v3463, %v3560
        %v3639 = vmul.f32 %v3464, %v3564
        %v3640 = vmul.f32 %v3465, %v3568
        %v3641 = vmul.f32 %v3466, %v3548
        %v3642 = vmul.f32 %v3467, %v3552
        %v3643 = vmul.f32 %v3468, %v3556
        %v3644 = vmul.f32 %v3469, %v3560
        %v3645 = vmul.f32 %v3470, %v3564
        %v3646 = vmul.f32 %v3471, %v3568
        %v3647 = vmul.f32 %v3472, %v3548
        %v3648 = vmul.f32 %v3473, %v3552
        %v3649 = vmul.f32 %v3474, %v3556
        %v3650 = vmul.f32 %v3475, %v3560
        %v3651 = vmul.f32 %v3476, %v3564
        %v3652 = vmul.f32 %v3477, %v3568
        %v3653 = vmul.f32 %v3478, %v3548
        %v3654 = vmul.f32 %v3479, %v3552
        %v3655 = vmul.f32 %v3480, %v3556
        %v3656 = vmul.f32 %v3481, %v3560
        %v3657 = vmul.f32 %v3482, %v3564
        %v3658 = vmul.f32 %v3483, %v3568
        %v3659 = vmul.f32 %v3484, %v3548
        %v3660 = vmul.f32 %v3485, %v3552
        %v3661 = vmul.f32 %v3486, %v3556
        %v3662 = vmul.f32 %v3487, %v3560
        %v3663 = vmul.f32 %v3488, %v3564
        %v3664 = vmul.f32 %v3489, %v3568
        %v3665 = vmul.f32 %v3490, %v3548
        %v3666 = vmul.f32 %v3491, %v3552
        %v3667 = vmul.f32 %v3492, %v3556
        %v3668 = vmul.f32 %v3493, %v3560
        %v3669 = vmul.f32 %v3494, %v3564
        %v3670 = vmul.f32 %v3495, %v3568
        %v3671 = vmul.f32 %v3496, %v3548
        %v3672 = vmul.f32 %v3497, %v3552
        %v3673 = vmul.f32 %v3498, %v3556
        %v3674 = vmul.f32 %v3499, %v3560
        %v3675 = vmul.f32 %v3500, %v3564
        %v3676 = vmul.f32 %v3501, %v3568
        %v3677 = vmul.f32 %v3502, %v3548
        %v3678 = vmul.f32 %v3503, %v3552
        %v3679 = vmul.f32 %v3504, %v3556
        %v3680 = vmul.f32 %v3505, %v3560
        %v3681 = vmul.f32 %v3506, %v3564
        %v3682 = vmul.f32 %v3507, %v3568
        %v3683 = vmul.f32 %v3508, %v3548
        %v3684 = vmul.f32 %v3509, %v3552
        %v3685 = vmul.f32 %v3510, %v3556
        %v3686 = vmul.f32 %v3511, %v3560
        %v3687 = vmul.f32 %v3512, %v3564
        %v3688 = vmul.f32 %v3513, %v3568
        %v3689 = vmul.f32 %v3514, %v3548
        %v3690 = vmul.f32 %v3515, %v3552
        %v3691 = vmul.f32 %v3516, %v3556
        %v3692 = vmul.f32 %v3517, %v3560
        %v3693 = vmul.f32 %v3518, %v3564
        %v3694 = vmul.f32 %v3519, %v3568
        %v3695 = vmul.f32 %v3520, %v3548
        %v3696 = vmul.f32 %v3521, %v3552
        %v3697 = vmul.f32 %v3522, %v3556
        %v3698 = vmul.f32 %v3523, %v3560
        %v3699 = vmul.f32 %v3524, %v3564
        %v3700 = vmul.f32 %v3525, %v3568
        %v3701 = vmul.f32 %v3526, %v3548
        %v3702 = vmul.f32 %v3527, %v3552
        %v3703 = vmul.f32 %v3528, %v3556
        %v3704 = vmul.f32 %v3529, %v3560
        %v3705 = vmul.f32 %v3530, %v3564
        %v3706 = vmul.f32 %v3531, %v3568
        %v3707 = vmul.f32 %v3532, %v3548
        %v3708 = vmul.f32 %v3533, %v3552
        %v3709 = vmul.f32 %v3534, %v3556
        %v3710 = vmul.f32 %v3535, %v3560
        %v3711 = vmul.f32 %v3536, %v3564
        %v3712 = vmul.f32 %v3537, %v3568
        %v3713 = vmul.f32 %v3538, %v3548
        %v3714 = vmul.f32 %v3539, %v3552
        %v3715 = vmul.f32 %v3540, %v3556
        %v3716 = vmul.f32 %v3541, %v3560
        %v3717 = vmul.f32 %v3542, %v3564
        %v3718 = vmul.f32 %v3543, %v3568
        %v3720 = vlaneseq
        %v3721 = vshrl.u32 %v3720, 7
        %v3722 = vsub.s32 0, %v3721
        %v3723 = vrot.slane %v3399, %v3722
        %v3724 = vlaneseq
        %v3725 = vshrl.u32 %v3724, 7
        %v3726 = vsub.s32 1, %v3725
        %v3727 = vrot.slane %v3399, %v3726
        %v3728 = vlaneseq
        %v3729 = vshrl.u32 %v3728, 7
        %v3730 = vsub.s32 2, %v3729
        %v3731 = vrot.slane %v3399, %v3730
        %v3732 = vlaneseq
        %v3733 = vshrl.u32 %v3732, 7
        %v3734 = vsub.s32 3, %v3733
        %v3735 = vrot.slane %v3399, %v3734
        %v3736 = vlaneseq
        %v3737 = vshrl.u32 %v3736, 7
        %v3738 = vsub.s32 4, %v3737
        %v3739 = vrot.slane %v3399, %v3738
        %v3740 = vlaneseq
        %v3741 = vshrl.u32 %v3740, 7
        %v3742 = vsub.s32 5, %v3741
        %v3743 = vrot.slane %v3399, %v3742
        %v3750 = vadd.f32 %v3575, %v3723
        %v3751 = vadd.f32 %v3576, %v3727
        %v3752 = vadd.f32 %v3577, %v3731
        %v3753 = vadd.f32 %v3578, %v3735
        %v3754 = vadd.f32 %v3579, %v3739
        %v3755 = vadd.f32 %v3580, %v3743
        %v3756 = vadd.f32 %v3581, %v3723
        %v3757 = vadd.f32 %v3582, %v3727
        %v3758 = vadd.f32 %v3583, %v3731
        %v3759 = vadd.f32 %v3584, %v3735
        %v3760 = vadd.f32 %v3585, %v3739
        %v3761 = vadd.f32 %v3586, %v3743
        %v3762 = vadd.f32 %v3587, %v3723
        %v3763 = vadd.f32 %v3588, %v3727
        %v3764 = vadd.f32 %v3589, %v3731
        %v3765 = vadd.f32 %v3590, %v3735
        %v3766 = vadd.f32 %v3591, %v3739
        %v3767 = vadd.f32 %v3592, %v3743
        %v3768 = vadd.f32 %v3593, %v3723
        %v3769 = vadd.f32 %v3594, %v3727
        %v3770 = vadd.f32 %v3595, %v3731
        %v3771 = vadd.f32 %v3596, %v3735
        %v3772 = vadd.f32 %v3597, %v3739
        %v3773 = vadd.f32 %v3598, %v3743
        %v3774 = vadd.f32 %v3599, %v3723
        %v3775 = vadd.f32 %v3600, %v3727
        %v3776 = vadd.f32 %v3601, %v3731
        %v3777 = vadd.f32 %v3602, %v3735
        %v3778 = vadd.f32 %v3603, %v3739
        %v3779 = vadd.f32 %v3604, %v3743
        %v3780 = vadd.f32 %v3605, %v3723
        %v3781 = vadd.f32 %v3606, %v3727
        %v3782 = vadd.f32 %v3607, %v3731
        %v3783 = vadd.f32 %v3608, %v3735
        %v3784 = vadd.f32 %v3609, %v3739
        %v3785 = vadd.f32 %v3610, %v3743
        %v3786 = vadd.f32 %v3611, %v3723
        %v3787 = vadd.f32 %v3612, %v3727
        %v3788 = vadd.f32 %v3613, %v3731
        %v3789 = vadd.f32 %v3614, %v3735
        %v3790 = vadd.f32 %v3615, %v3739
        %v3791 = vadd.f32 %v3616, %v3743
        %v3792 = vadd.f32 %v3617, %v3723
        %v3793 = vadd.f32 %v3618, %v3727
        %v3794 = vadd.f32 %v3619, %v3731
        %v3795 = vadd.f32 %v3620, %v3735
        %v3796 = vadd.f32 %v3621, %v3739
        %v3797 = vadd.f32 %v3622, %v3743
        %v3798 = vadd.f32 %v3623, %v3723
        %v3799 = vadd.f32 %v3624, %v3727
        %v3800 = vadd.f32 %v3625, %v3731
        %v3801 = vadd.f32 %v3626, %v3735
        %v3802 = vadd.f32 %v3627, %v3739
        %v3803 = vadd.f32 %v3628, %v3743
        %v3804 = vadd.f32 %v3629, %v3723
        %v3805 = vadd.f32 %v3630, %v3727
        %v3806 = vadd.f32 %v3631, %v3731
        %v3807 = vadd.f32 %v3632, %v3735
        %v3808 = vadd.f32 %v3633, %v3739
        %v3809 = vadd.f32 %v3634, %v3743
        %v3810 = vadd.f32 %v3635, %v3723
        %v3811 = vadd.f32 %v3636, %v3727
        %v3812 = vadd.f32 %v3637, %v3731
        %v3813 = vadd.f32 %v3638, %v3735
        %v3814 = vadd.f32 %v3639, %v3739
        %v3815 = vadd.f32 %v3640, %v3743
        %v3816 = vadd.f32 %v3641, %v3723
        %v3817 = vadd.f32 %v3642, %v3727
        %v3818 = vadd.f32 %v3643, %v3731
        %v3819 = vadd.f32 %v3644, %v3735
        %v3820 = vadd.f32 %v3645, %v3739
        %v3821 = vadd.f32 %v3646, %v3743
        %v3822 = vadd.f32 %v3647, %v3723
        %v3823 = vadd.f32 %v3648, %v3727
        %v3824 = vadd.f32 %v3649, %v3731
        %v3825 = vadd.f32 %v3650, %v3735
        %v3826 = vadd.f32 %v3651, %v3739
        %v3827 = vadd.f32 %v3652, %v3743
        %v3828 = vadd.f32 %v3653, %v3723
        %v3829 = vadd.f32 %v3654, %v3727
        %v3830 = vadd.f32 %v3655, %v3731
        %v3831 = vadd.f32 %v3656, %v3735
        %v3832 = vadd.f32 %v3657, %v3739
        %v3833 = vadd.f32 %v3658, %v3743
        %v3834 = vadd.f32 %v3659, %v3723
        %v3835 = vadd.f32 %v3660, %v3727
        %v3836 = vadd.f32 %v3661, %v3731
        %v3837 = vadd.f32 %v3662, %v3735
        %v3838 = vadd.f32 %v3663, %v3739
        %v3839 = vadd.f32 %v3664, %v3743
        %v3840 = vadd.f32 %v3665, %v3723
        %v3841 = vadd.f32 %v3666, %v3727
        %v3842 = vadd.f32 %v3667, %v3731
        %v3843 = vadd.f32 %v3668, %v3735
        %v3844 = vadd.f32 %v3669, %v3739
        %v3845 = vadd.f32 %v3670, %v3743
        %v3846 = vadd.f32 %v3671, %v3723
        %v3847 = vadd.f32 %v3672, %v3727
        %v3848 = vadd.f32 %v3673, %v3731
        %v3849 = vadd.f32 %v3674, %v3735
        %v3850 = vadd.f32 %v3675, %v3739
        %v3851 = vadd.f32 %v3676, %v3743
        %v3852 = vadd.f32 %v3677, %v3723
        %v3853 = vadd.f32 %v3678, %v3727
        %v3854 = vadd.f32 %v3679, %v3731
        %v3855 = vadd.f32 %v3680, %v3735
        %v3856 = vadd.f32 %v3681, %v3739
        %v3857 = vadd.f32 %v3682, %v3743
        %v3858 = vadd.f32 %v3683, %v3723
        %v3859 = vadd.f32 %v3684, %v3727
        %v3860 = vadd.f32 %v3685, %v3731
        %v3861 = vadd.f32 %v3686, %v3735
        %v3862 = vadd.f32 %v3687, %v3739
        %v3863 = vadd.f32 %v3688, %v3743
        %v3864 = vadd.f32 %v3689, %v3723
        %v3865 = vadd.f32 %v3690, %v3727
        %v3866 = vadd.f32 %v3691, %v3731
        %v3867 = vadd.f32 %v3692, %v3735
        %v3868 = vadd.f32 %v3693, %v3739
        %v3869 = vadd.f32 %v3694, %v3743
        %v3870 = vadd.f32 %v3695, %v3723
        %v3871 = vadd.f32 %v3696, %v3727
        %v3872 = vadd.f32 %v3697, %v3731
        %v3873 = vadd.f32 %v3698, %v3735
        %v3874 = vadd.f32 %v3699, %v3739
        %v3875 = vadd.f32 %v3700, %v3743
        %v3876 = vadd.f32 %v3701, %v3723
        %v3877 = vadd.f32 %v3702, %v3727
        %v3878 = vadd.f32 %v3703, %v3731
        %v3879 = vadd.f32 %v3704, %v3735
        %v3880 = vadd.f32 %v3705, %v3739
        %v3881 = vadd.f32 %v3706, %v3743
        %v3882 = vadd.f32 %v3707, %v3723
        %v3883 = vadd.f32 %v3708, %v3727
        %v3884 = vadd.f32 %v3709, %v3731
        %v3885 = vadd.f32 %v3710, %v3735
        %v3886 = vadd.f32 %v3711, %v3739
        %v3887 = vadd.f32 %v3712, %v3743
        %v3888 = vadd.f32 %v3713, %v3723
        %v3889 = vadd.f32 %v3714, %v3727
        %v3890 = vadd.f32 %v3715, %v3731
        %v3891 = vadd.f32 %v3716, %v3735
        %v3892 = vadd.f32 %v3717, %v3739
        %v3893 = vadd.f32 %v3718, %v3743
        %3894 = vst [vmem:[%s284] sm:$0xff] %v3750
        %3895 = vst [vmem:[%s284 + $0x8] sm:$0xff] %v3751
        %3896 = vst [vmem:[%s284 + $0x10] sm:$0xff] %v3752
        %3897 = vst [vmem:[%s284 + $0x18] sm:$0xff] %v3753
        %3898 = vst [vmem:[%s284 + $0x20] sm:$0xff] %v3754
        %3899 = vst [vmem:[%s284 + $0x28] sm:$0xff] %v3755
        %3900 = vst [vmem:[%s284 + $0x30] sm:$0xff] %v3756
        %3901 = vst [vmem:[%s284 + $0x38] sm:$0xff] %v3757
        %3902 = vst [vmem:[%s284 + $0x40] sm:$0xff] %v3758
        %3903 = vst [vmem:[%s284 + $0x48] sm:$0xff] %v3759
        %3904 = vst [vmem:[%s284 + $0x50] sm:$0xff] %v3760
        %3905 = vst [vmem:[%s284 + $0x58] sm:$0xff] %v3761
        %3906 = vst [vmem:[%s284 + $0x60] sm:$0xff] %v3762
        %3907 = vst [vmem:[%s284 + $0x68] sm:$0xff] %v3763
        %3908 = vst [vmem:[%s284 + $0x70] sm:$0xff] %v3764
        %3909 = vst [vmem:[%s284 + $0x78] sm:$0xff] %v3765
        %3910 = vst [vmem:[%s284 + $0x80] sm:$0xff] %v3766
        %3911 = vst [vmem:[%s284 + $0x88] sm:$0xff] %v3767
        %3912 = vst [vmem:[%s284 + $0x90] sm:$0xff] %v3768
        %3913 = vst [vmem:[%s284 + $0x98] sm:$0xff] %v3769
        %3914 = vst [vmem:[%s284 + $0xa0] sm:$0xff] %v3770
        %3915 = vst [vmem:[%s284 + $0xa8] sm:$0xff] %v3771
        %3916 = vst [vmem:[%s284 + $0xb0] sm:$0xff] %v3772
        %3917 = vst [vmem:[%s284 + $0xb8] sm:$0xff] %v3773
        %3918 = vst [vmem:[%s284 + $0xc0] sm:$0xff] %v3774
        %3919 = vst [vmem:[%s284 + $0xc8] sm:$0xff] %v3775
        %3920 = vst [vmem:[%s284 + $0xd0] sm:$0xff] %v3776
        %3921 = vst [vmem:[%s284 + $0xd8] sm:$0xff] %v3777
        %3922 = vst [vmem:[%s284 + $0xe0] sm:$0xff] %v3778
        %3923 = vst [vmem:[%s284 + $0xe8] sm:$0xff] %v3779
        %3924 = vst [vmem:[%s284 + $0xf0] sm:$0xff] %v3780
        %3925 = vst [vmem:[%s284 + $0xf8] sm:$0xff] %v3781
        %3926 = vst [vmem:[%s284 + $0x100] sm:$0xff] %v3782
        %3927 = vst [vmem:[%s284 + $0x108] sm:$0xff] %v3783
        %3928 = vst [vmem:[%s284 + $0x110] sm:$0xff] %v3784
        %3929 = vst [vmem:[%s284 + $0x118] sm:$0xff] %v3785
        %3930 = vst [vmem:[%s284 + $0x120] sm:$0xff] %v3786
        %3931 = vst [vmem:[%s284 + $0x128] sm:$0xff] %v3787
        %3932 = vst [vmem:[%s284 + $0x130] sm:$0xff] %v3788
        %3933 = vst [vmem:[%s284 + $0x138] sm:$0xff] %v3789
        %3934 = vst [vmem:[%s284 + $0x140] sm:$0xff] %v3790
        %3935 = vst [vmem:[%s284 + $0x148] sm:$0xff] %v3791
        %3936 = vst [vmem:[%s284 + $0x150] sm:$0xff] %v3792
        %3937 = vst [vmem:[%s284 + $0x158] sm:$0xff] %v3793
        %3938 = vst [vmem:[%s284 + $0x160] sm:$0xff] %v3794
        %3939 = vst [vmem:[%s284 + $0x168] sm:$0xff] %v3795
        %3940 = vst [vmem:[%s284 + $0x170] sm:$0xff] %v3796
        %3941 = vst [vmem:[%s284 + $0x178] sm:$0xff] %v3797
        %3942 = vst [vmem:[%s284 + $0x180] sm:$0xff] %v3798
        %3943 = vst [vmem:[%s284 + $0x188] sm:$0xff] %v3799
        %3944 = vst [vmem:[%s284 + $0x190] sm:$0xff] %v3800
        %3945 = vst [vmem:[%s284 + $0x198] sm:$0xff] %v3801
        %3946 = vst [vmem:[%s284 + $0x1a0] sm:$0xff] %v3802
        %3947 = vst [vmem:[%s284 + $0x1a8] sm:$0xff] %v3803
        %3948 = vst [vmem:[%s284 + $0x1b0] sm:$0xff] %v3804
        %3949 = vst [vmem:[%s284 + $0x1b8] sm:$0xff] %v3805
        %3950 = vst [vmem:[%s284 + $0x1c0] sm:$0xff] %v3806
        %3951 = vst [vmem:[%s284 + $0x1c8] sm:$0xff] %v3807
        %3952 = vst [vmem:[%s284 + $0x1d0] sm:$0xff] %v3808
        %3953 = vst [vmem:[%s284 + $0x1d8] sm:$0xff] %v3809
        %3954 = vst [vmem:[%s284 + $0x1e0] sm:$0xff] %v3810
        %3955 = vst [vmem:[%s284 + $0x1e8] sm:$0xff] %v3811
        %3956 = vst [vmem:[%s284 + $0x1f0] sm:$0xff] %v3812
        %3957 = vst [vmem:[%s284 + $0x1f8] sm:$0xff] %v3813
        %3958 = vst [vmem:[%s284 + $0x200] sm:$0xff] %v3814
        %3959 = vst [vmem:[%s284 + $0x208] sm:$0xff] %v3815
        %3960 = vst [vmem:[%s284 + $0x210] sm:$0xff] %v3816
        %3961 = vst [vmem:[%s284 + $0x218] sm:$0xff] %v3817
        %3962 = vst [vmem:[%s284 + $0x220] sm:$0xff] %v3818
        %3963 = vst [vmem:[%s284 + $0x228] sm:$0xff] %v3819
        %3964 = vst [vmem:[%s284 + $0x230] sm:$0xff] %v3820
        %3965 = vst [vmem:[%s284 + $0x238] sm:$0xff] %v3821
        %3966 = vst [vmem:[%s284 + $0x240] sm:$0xff] %v3822
        %3967 = vst [vmem:[%s284 + $0x248] sm:$0xff] %v3823
        %3968 = vst [vmem:[%s284 + $0x250] sm:$0xff] %v3824
        %3969 = vst [vmem:[%s284 + $0x258] sm:$0xff] %v3825
        %3970 = vst [vmem:[%s284 + $0x260] sm:$0xff] %v3826
        %3971 = vst [vmem:[%s284 + $0x268] sm:$0xff] %v3827
        %3972 = vst [vmem:[%s284 + $0x270] sm:$0xff] %v3828
        %3973 = vst [vmem:[%s284 + $0x278] sm:$0xff] %v3829
        %3974 = vst [vmem:[%s284 + $0x280] sm:$0xff] %v3830
        %3975 = vst [vmem:[%s284 + $0x288] sm:$0xff] %v3831
        %3976 = vst [vmem:[%s284 + $0x290] sm:$0xff] %v3832
        %3977 = vst [vmem:[%s284 + $0x298] sm:$0xff] %v3833
        %3978 = vst [vmem:[%s284 + $0x2a0] sm:$0xff] %v3834
        %3979 = vst [vmem:[%s284 + $0x2a8] sm:$0xff] %v3835
        %3980 = vst [vmem:[%s284 + $0x2b0] sm:$0xff] %v3836
        %3981 = vst [vmem:[%s284 + $0x2b8] sm:$0xff] %v3837
        %3982 = vst [vmem:[%s284 + $0x2c0] sm:$0xff] %v3838
        %3983 = vst [vmem:[%s284 + $0x2c8] sm:$0xff] %v3839
        %3984 = vst [vmem:[%s284 + $0x2d0] sm:$0xff] %v3840
        %3985 = vst [vmem:[%s284 + $0x2d8] sm:$0xff] %v3841
        %3986 = vst [vmem:[%s284 + $0x2e0] sm:$0xff] %v3842
        %3987 = vst [vmem:[%s284 + $0x2e8] sm:$0xff] %v3843
        %3988 = vst [vmem:[%s284 + $0x2f0] sm:$0xff] %v3844
        %3989 = vst [vmem:[%s284 + $0x2f8] sm:$0xff] %v3845
        %3990 = vst [vmem:[%s284 + $0x300] sm:$0xff] %v3846
        %3991 = vst [vmem:[%s284 + $0x308] sm:$0xff] %v3847
        %3992 = vst [vmem:[%s284 + $0x310] sm:$0xff] %v3848
        %3993 = vst [vmem:[%s284 + $0x318] sm:$0xff] %v3849
        %3994 = vst [vmem:[%s284 + $0x320] sm:$0xff] %v3850
        %3995 = vst [vmem:[%s284 + $0x328] sm:$0xff] %v3851
        %3996 = vst [vmem:[%s284 + $0x330] sm:$0xff] %v3852
        %3997 = vst [vmem:[%s284 + $0x338] sm:$0xff] %v3853
        %3998 = vst [vmem:[%s284 + $0x340] sm:$0xff] %v3854
        %3999 = vst [vmem:[%s284 + $0x348] sm:$0xff] %v3855
        %4000 = vst [vmem:[%s284 + $0x350] sm:$0xff] %v3856
        %4001 = vst [vmem:[%s284 + $0x358] sm:$0xff] %v3857
        %4002 = vst [vmem:[%s284 + $0x360] sm:$0xff] %v3858
        %4003 = vst [vmem:[%s284 + $0x368] sm:$0xff] %v3859
        %4004 = vst [vmem:[%s284 + $0x370] sm:$0xff] %v3860
        %4005 = vst [vmem:[%s284 + $0x378] sm:$0xff] %v3861
        %4006 = vst [vmem:[%s284 + $0x380] sm:$0xff] %v3862
        %4007 = vst [vmem:[%s284 + $0x388] sm:$0xff] %v3863
        %4008 = vst [vmem:[%s284 + $0x390] sm:$0xff] %v3864
        %4009 = vst [vmem:[%s284 + $0x398] sm:$0xff] %v3865
        %4010 = vst [vmem:[%s284 + $0x3a0] sm:$0xff] %v3866
        %4011 = vst [vmem:[%s284 + $0x3a8] sm:$0xff] %v3867
        %4012 = vst [vmem:[%s284 + $0x3b0] sm:$0xff] %v3868
        %4013 = vst [vmem:[%s284 + $0x3b8] sm:$0xff] %v3869
        %4014 = vst [vmem:[%s284 + $0x3c0] sm:$0xff] %v3870
        %4015 = vst [vmem:[%s284 + $0x3c8] sm:$0xff] %v3871
        %4016 = vst [vmem:[%s284 + $0x3d0] sm:$0xff] %v3872
        %4017 = vst [vmem:[%s284 + $0x3d8] sm:$0xff] %v3873
        %4018 = vst [vmem:[%s284 + $0x3e0] sm:$0xff] %v3874
        %4019 = vst [vmem:[%s284 + $0x3e8] sm:$0xff] %v3875
        %4020 = vst [vmem:[%s284 + $0x3f0] sm:$0xff] %v3876
        %4021 = vst [vmem:[%s284 + $0x3f8] sm:$0xff] %v3877
        %4022 = vst [vmem:[%s284 + $0x400] sm:$0xff] %v3878
        %4023 = vst [vmem:[%s284 + $0x408] sm:$0xff] %v3879
        %4024 = vst [vmem:[%s284 + $0x410] sm:$0xff] %v3880
        %4025 = vst [vmem:[%s284 + $0x418] sm:$0xff] %v3881
        %4026 = vst [vmem:[%s284 + $0x420] sm:$0xff] %v3882
        %4027 = vst [vmem:[%s284 + $0x428] sm:$0xff] %v3883
        %4028 = vst [vmem:[%s284 + $0x430] sm:$0xff] %v3884
        %4029 = vst [vmem:[%s284 + $0x438] sm:$0xff] %v3885
        %4030 = vst [vmem:[%s284 + $0x440] sm:$0xff] %v3886
        %4031 = vst [vmem:[%s284 + $0x448] sm:$0xff] %v3887
        %4032 = vst [vmem:[%s284 + $0x450] sm:$0xff] %v3888
        %4033 = vst [vmem:[%s284 + $0x458] sm:$0xff] %v3889
        %4034 = vst [vmem:[%s284 + $0x460] sm:$0xff] %v3890
        %4035 = vst [vmem:[%s284 + $0x468] sm:$0xff] %v3891
        %4036 = vst [vmem:[%s284 + $0x470] sm:$0xff] %v3892
        %4037 = vst [vmem:[%s284 + $0x478] sm:$0xff] %v3893
        %s4038 = sand.u32 %s129, 1
        %s4039 = scalar_lea.sflag [#allocation6], %s4038
        %s4040 = sand.u32 %s129, 1
        %s4041 = smul.addr %s4040, 1152
        %s4042 = scalar_lea.vmem [#allocation12], %s4041
        // Predicated region
        $region53: #{tpu_custom_call.1} parent=35 // pred_check
          %p4043 = pneg %p139
        $region54: #{tpu_custom_call.1} parent=35 // pred_check_branch
          %4045 = sbr.rel (%p4043) target = $region56
        $region55: #{tpu_custom_call.1} parent=35 // pred_region
          %s4046 = smul.u32 24, %s27
          %s4048 = ssub.s32 18432, 18432
          %4049 = vsyncadd %s4039, %s4048
          %s4050 = smul.addr %s4046, 6
          %s4051 = smul.addr %s4050, 128
          %s4052 = scalar_lea.hbm %s5, %s4051
          %s4053 = sshll.u32 %s4042, 4
          %s4054 = int_to_ptr.vmem [resolvable:$true] %s4053
          %4059 = dma.vmem_to_hbm [thread:$0]  %s4054, 18432, %s4052, %s4039, 768, 768, 48
        $region56: #{tpu_custom_call.1} parent=35 // pred_fallthru
          _
      $region36: #{tpu_custom_call.1} parent=5 // pred_fallthru
        _
      %p4060 = scmp.le.s32.totalorder 2, %s22
      // Predicated region
      $region57: #{tpu_custom_call.1} parent=5 // pred_check
        %p4061 = pneg %p4060
      $region58: #{tpu_custom_call.1} parent=5 // pred_check_branch
        %4063 = sbr.rel (%p4061) target = $region60
      $region59: #{tpu_custom_call.1} parent=5 // pred_region
        %s4064 = ssub.s32 %s22, 2
        // Predicated region
        $region61: #{tpu_custom_call.1} parent=59 // pred_check
          %p4065 = pneg %p145
        $region62: #{tpu_custom_call.1} parent=59 // pred_check_branch
          %4067 = sbr.rel (%p4065) target = $region64
        $region63: #{tpu_custom_call.1} parent=59 // pred_region
          %s4068 = sand.u32 %s130, 1
          %s4069 = scalar_lea.sflag [#allocation6], %s4068
          %s4070 = sand.u32 %s130, 1
          %s4071 = smul.addr %s4070, 1152
          %s4072 = scalar_lea.vmem [#allocation12], %s4071
          %4073 = dma.done %s4069, 18432
        $region64: #{tpu_custom_call.1} parent=59 // pred_fallthru
          _
      $region60: #{tpu_custom_call.1} parent=5 // pred_fallthru
        _
    $region6: #{tpu_custom_call.1} parent=1 // loop_footer
      %s26 = sadd.s32 1, %s22
    $region7: #{tpu_custom_call.1} parent=1 // loop_footer_branch
      %21 = sbr.rel target = $region3
    $region8: #{tpu_custom_call.1} parent=1 // loop_exit
      _
    %4074 = vsyncpa [#allocation5], 1
    %s4075 = scalar_lea.sflag [#allocation5], 1
    %4076 = vsyncpa %s4075, 1
    %4077 = vsyncpa [#allocation8], 1
    %s4078 = scalar_lea.sflag [#allocation8], 1
    %4079 = vsyncpa %s4078, 1
    %4080 = vsyncpa [#allocation11], 1
    %4081 = vsyncpa [#allocation6], 1
    %s4082 = scalar_lea.sflag [#allocation6], 1
    %4083 = vsyncpa %s4082, 1

</llo_original>
